<compile_context>
chip_gen: v6e
topology: v6e:2x2x1
jax: 0.10.0
libtpu: 0.0.40
codegen_flags: <defaults>
</compile_context>

<pallas_src>
import functools

import jax
import jax.numpy as jnp
from jax import lax
from jax.experimental import pallas as pl
from jax.experimental.pallas import tpu as pltpu


# ----------------------------------------------------------------------------
# Pallas kernels
# ----------------------------------------------------------------------------
def _dw_kernel(x_ref, w_ref, o_ref, *, TH, Wo, KH, KW):
    """Grouped KHxKW conv of one output row-strip, all 4 rotation branches fused.

    x_ref: (1, Hp, Wp, Cin)   full zero-padded image (bf16); block index is
                              constant across the strip axis so it stays resident.
    w_ref: (KH*KW, Cin, Cout) per-tap dense weight (group + rotated-branch
                              structure folded in), Cout = 4 * (Cin // 4).
    o_ref: (1, TH, Wo, Cout)  one output row strip.
    """
    Cin = x_ref.shape[-1]
    Cout = o_ref.shape[-1]
    s = pl.program_id(1)
    row0 = s * TH
    if TH % 8 == 0:
        row0 = pl.multiple_of(row0, 8)
    # One dynamically-sliced load of the strip + halo; per-tap slices are static.
    xs = x_ref[0, pl.ds(row0, TH + KH - 1), :, :]            # (TH+KH-1, Wp, Cin)
    acc = None                                               # f32 accumulation
    for dy in range(KH):
        for dx in range(KW):
            patch = xs[dy:dy + TH, dx:dx + Wo, :].reshape(TH * Wo, Cin)
            part = jnp.dot(patch, w_ref[dy * KW + dx],
                           preferred_element_type=jnp.float32)
            acc = part if acc is None else acc + part
    o_ref[...] = acc.reshape(1, TH, Wo, Cout).astype(o_ref.dtype)


def _pw_kernel(x_ref, w_ref, o_ref, *, TH, Wo):
    """1x1 conv of one row strip (single branch; the 4 rot90s happen in XLA)."""
    Cin = x_ref.shape[-1]
    Cout = o_ref.shape[-1]
    x = x_ref[0].reshape(TH * Wo, Cin)
    y = jnp.dot(x, w_ref[...], preferred_element_type=jnp.float32)
    o_ref[...] = y.reshape(1, TH, Wo, Cout).astype(o_ref.dtype)


# ----------------------------------------------------------------------------
# Host-side weight packing (tiny, done once)
# ----------------------------------------------------------------------------
def _pack_depthwise_weight(w_dw, nin, kernel_size):
    """torch grouped-conv weight (G, 4, k, k) -> per-tap dense (k*k, nin, 4*G).

    Column (l, g) holds rot90(w_dw[g], -l): since
      conv(rot90(x, l), w) == rot90(conv(x, rot90(w, -l)), l)
    the kernel runs on the UNROTATED input and the residual rot90 is applied to
    the small per-branch outputs in XLA.
    """
    G = nin // 4
    k = kernel_size
    # (l, g, m, a, b): branch l uses the clockwise-by-l rotated filter.
    rots = jnp.stack([jnp.rot90(w_dw, (4 - l) % 4, axes=(2, 3)) for l in range(4)],
                     axis=0)
    eye_g = jnp.eye(G, dtype=w_dw.dtype)
    # W[(a,b), 4g+m, l*G+h] = rots[l,g,m,a,b] * delta(g,h)   (pure selection, exact)
    w = jnp.einsum("lgmab,gh->abgmlh", rots, eye_g)
    return w.reshape(k * k, nin, 4 * G)


# ----------------------------------------------------------------------------
# Pallas wrappers
# ----------------------------------------------------------------------------
def _pick_strip_rows(Ho, Wo, target_rows=512):
    """Largest divisor TH of Ho with TH*Wo <= target (bounds per-step matmul M)."""
    th = 1
    for cand in range(1, Ho + 1):
        if Ho % cand == 0 and cand * Wo <= target_rows:
            th = cand
    return th


def _vmem_limit_bytes(block_bytes):
    # double-buffered blocks + generous slack, capped at v7x's 64 MiB physical VMEM.
    need = 2 * block_bytes + (8 << 20)
    return int(min(max(need, 32 << 20), 64 << 20))


def depthwise_rot4(xp, w1, *, kernel_size, Ho, Wo):
    """xp: (N, Hp, Wp, Cin) zero-padded bf16 NHWC; w1: (k*k, Cin, 4*G) bf16."""
    N, Hp, Wp, Cin = xp.shape
    T, _, Cout = w1.shape
    KH = KW = kernel_size
    TH = _pick_strip_rows(Ho, Wo)
    S = Ho // TH

    blk_bytes = ((Hp * Wp * Cin + T * Cin * Cout) * 2        # bf16 input + weight
                 + TH * Wo * Cout * (2 + 4))                  # bf16 out + f32 acc
    kern = functools.partial(_dw_kernel, TH=TH, Wo=Wo, KH=KH, KW=KW)
    return pl.pallas_call(
        kern,
        out_shape=jax.ShapeDtypeStruct((N, Ho, Wo, Cout), jnp.bfloat16),
        grid=(N, S),
        in_specs=[
            pl.BlockSpec((1, Hp, Wp, Cin), lambda n, s: (n, 0, 0, 0)),
            pl.BlockSpec((T, Cin, Cout), lambda n, s: (0, 0, 0)),
        ],
        out_specs=pl.BlockSpec((1, TH, Wo, Cout), lambda n, s: (n, s, 0, 0)),
        compiler_params=pltpu.CompilerParams(
            dimension_semantics=("parallel", "parallel"),
            vmem_limit_bytes=_vmem_limit_bytes(blk_bytes)),
    )(xp, w1)


def pointwise_single(x, w2):
    """x: (N, Ho, Wo, Cin) bf16; w2: (Cin, Cout) bf16.  One matmul, no branches."""
    N, Ho, Wo, Cin = x.shape
    Cout = w2.shape[-1]
    TH = _pick_strip_rows(Ho, Wo)
    S = Ho // TH

    blk_bytes = (TH * Wo * Cin + Cin * Cout) * 2 + TH * Wo * Cout * 4
    kern = functools.partial(_pw_kernel, TH=TH, Wo=Wo)
    return pl.pallas_call(
        kern,
        out_shape=jax.ShapeDtypeStruct((N, Ho, Wo, Cout), jnp.float32),
        grid=(N, S),
        in_specs=[
            pl.BlockSpec((1, TH, Wo, Cin), lambda n, s: (n, s, 0, 0)),
            pl.BlockSpec((Cin, Cout), lambda n, s: (0, 0)),
        ],
        out_specs=pl.BlockSpec((1, TH, Wo, Cout), lambda n, s: (n, s, 0, 0)),
        compiler_params=pltpu.CompilerParams(
            dimension_semantics=("parallel", "parallel"),
            vmem_limit_bytes=_vmem_limit_bytes(blk_bytes)),
    )(x, w2)


# ----------------------------------------------------------------------------
# Forward pass (matches the PyTorch module semantics, bias=False)
# ----------------------------------------------------------------------------
def depthwise_separable_conv_forward(x_nchw, w_dw, w_pw, *, kernel_size=3, padding=1):
    """x_nchw: (N, nin, H, W); w_dw: (nin//4, 4, k, k); w_pw: (nout//4, nin, 1, 1)."""
    N, nin, H, W = x_nchw.shape
    assert nin % 4 == 0, "nin must be divisible by 4 (grouped rotation-equivariant conv)"
    assert H == W, "rotation-equivariant conv requires square spatial dims (H == W)"
    G = nin // 4
    Co = w_pw.shape[0]
    Ho = H + 2 * padding - kernel_size + 1
    assert Ho >= 1, "kernel/padding configuration gives empty output"

    x = jnp.transpose(x_nchw, (0, 2, 3, 1))                              # -> NHWC
    xp = jnp.pad(x, ((0, 0), (padding,) * 2, (padding,) * 2, (0, 0)))
    xp = xp.astype(jnp.bfloat16)                                         # MXU-native

    w1 = _pack_depthwise_weight(w_dw, nin, kernel_size).astype(jnp.bfloat16)
    w2 = jnp.transpose(w_pw[:, :, 0, 0]).astype(jnp.bfloat16)            # (nin, Co)

    # Stage 1: grouped conv with the 4 rotated filter copies fused (Cout = nin).
    z = depthwise_rot4(xp, w1, kernel_size=kernel_size, Ho=Ho, Wo=Ho)    # (N,Ho,Wo,4G)
    # Residual per-branch rot90 on the small outputs (pure permutation, exact).
    mid = jnp.concatenate(
        [jnp.rot90(z[..., l * G:(l + 1) * G], k=l, axes=(1, 2)) for l in range(4)],
        axis=-1)                                                         # (N,Ho,Wo,nin)

    # Stage 2: 1x1 conv commutes with rot90 -> single matmul, rotate its output.
    y = pointwise_single(mid, w2)                                        # (N,Ho,Wo,Co)
    out = jnp.concatenate([jnp.rot90(y, k=l, axes=(1, 2)) for l in range(4)], axis=-1)
    return jnp.transpose(out, (0, 3, 1, 2))                              # -> NCHW


# ----------------------------------------------------------------------------
# Pure-JAX reference (lax convs) for correctness checks
# ----------------------------------------------------------------------------
def depthwise_separable_conv_reference(x_nchw, w_dw, w_pw, *, kernel_size=3,
                                       padding=1, emulate_bf16=False):
    if emulate_bf16:
        # Mirror the kernel's precision: operands + stage-1 activations in bf16,
        # f32 accumulation.  Makes the comparison tight (~1e-6).
        c = lambda a: a.astype(jnp.bfloat16).astype(jnp.float32)
        x_nchw, w_dw, w_pw = c(x_nchw), c(w_dw), c(w_pw)

    nin = x_nchw.shape[1]
    G = nin // 4
    pad = ((padding, padding), (padding, padding))

    def dconv(z):
        return lax.conv_general_dilated(
            z, w_dw, (1, 1), pad,
            dimension_numbers=("NCHW", "OIHW", "NCHW"),
            feature_group_count=G, precision=lax.Precision.HIGHEST)

    def pconv(z):
        return lax.conv_general_dilated(
            z, w_pw, (1, 1), ((0, 0), (0, 0)),
            dimension_numbers=("NCHW", "OIHW", "NCHW"),
            precision=lax.Precision.HIGHEST)

    def rots(a):
        return [jnp.rot90(a, k, axes=(2, 3)) for k in range(4)]

    out = jnp.concatenate([dconv(r) for r in rots(x_nchw)], axis=1)
    if emulate_bf16:
        out = out.astype(jnp.bfloat16).astype(jnp.float32)
    out = jnp.concatenate([pconv(r) for r in rots(out)], axis=1)
    return out


if __name__ == "__main__":
    key = jax.random.PRNGKey(0)
    ksz, pad = 3, 1

    configs = [
        dict(N=2, nin=8, nout=16, H=16),   # primary small config
        dict(N=1, nin=8, nout=16, H=32),   # exercises the multi-strip grid path
    ]

    for cfg in configs:
        N, nin, nout, H = cfg["N"], cfg["nin"], cfg["nout"], cfg["H"]
        key, kx, kd, kp = jax.random.split(key, 4)
        x = jax.random.normal(kx, (N, nin, H, H), jnp.float32)           # NCHW like PyTorch
        w_dw = 0.2 * jax.random.normal(kd, (nin // 4, 4, ksz, ksz), jnp.float32)
        w_pw = 0.2 * jax.random.normal(kp, (nout // 4, nin, 1, 1), jnp.float32)

        fwd = jax.jit(functools.partial(depthwise_separable_conv_forward,
                                        kernel_size=ksz, padding=pad))
        ref_bf16 = jax.jit(functools.partial(depthwise_separable_conv_reference,
                                             kernel_size=ksz, padding=pad,
                                             emulate_bf16=True))
        ref_f32 = jax.jit(functools.partial(depthwise_separable_conv_reference,
                                            kernel_size=ksz, padding=pad,
                                            emulate_bf16=False))

        out = jax.block_until_ready(fwd(x, w_dw, w_pw))
        assert out.shape == (N, nout, H, H), out.shape

        # Logic check: precision-matched reference -> differences are only f32
        # accumulation-order noise.
        rt = jax.block_until_ready(ref_bf16(x, w_dw, w_pw))
        assert jnp.allclose(out, rt, atol=2e-3, rtol=2e-3), \
            float(jnp.max(jnp.abs(out - rt)))

        # Sanity check vs. full-f32 semantics: only bounds bf16 operand rounding
        # (the consciously accepted precision/perf trade-off), so the tolerance
        # is loose; any structural/rotation bug would produce O(1) errors.
        rf = jax.block_until_ready(ref_f32(x, w_dw, w_pw))
        assert jnp.allclose(out, rf, atol=1e-1, rtol=1e-1), \
            float(jnp.max(jnp.abs(out - rf)))

    print("KERNEL_OK")
</pallas_src>

<mosaic_0001>
module attributes {stable_mosaic.version = 11 : i64} {
  func.func @_dw_kernel(%arg0: i32, %arg1: i32, %arg2: memref<1x18x18x8xbf16, #tpu.memory_space<vmem>>, %arg3: memref<9x8x8xbf16, #tpu.memory_space<vmem>>, %arg4: memref<1x16x16x8xbf16, #tpu.memory_space<vmem>>) attributes {dimension_semantics = [#tpu.dimension_semantics<parallel>, #tpu.dimension_semantics<parallel>], iteration_bounds = array<i64: 2, 1>, scalar_prefetch = 0 : i64, scratch_operands = 0 : i64, tpu.core_type = #tpu.core_type<tc>, window_params = [{transform_indices = @transform_0, window_bounds = array<i64: 1, 18, 18, 8>}, {pipeline_mode = #tpu.pipeline_mode<synchronous>, transform_indices = @transform_1, window_bounds = array<i64: 9, 8, 8>}, {transform_indices = @transform_2, window_bounds = array<i64: 1, 16, 16, 8>}]} {
    %c16_i32 = arith.constant 16 : i32
    %0 = arith.muli %arg1, %c16_i32 : i32
    %1 = tpu.assume_multiple %0, 8 : i32
    %c0 = arith.constant 0 : index
    %2 = arith.index_cast %1 : i32 to index
    %c0_0 = arith.constant 0 : index
    %c0_1 = arith.constant 0 : index
    %3 = vector.load %arg2[%c0, %2, %c0_0, %c0_1] : memref<1x18x18x8xbf16, #tpu.memory_space<vmem>>, vector<1x18x18x8xbf16>
    %4 = vector.shape_cast %3 : vector<1x18x18x8xbf16> to vector<18x18x8xbf16>
    %5 = vector.extract_strided_slice %4 {offsets = [0, 0, 0], sizes = [16, 16, 8], strides = [1, 1, 1]} : vector<18x18x8xbf16> to vector<16x16x8xbf16>
    %6 = vector.shape_cast %5 : vector<16x16x8xbf16> to vector<256x8xbf16>
    %c0_2 = arith.constant 0 : index
    %c0_3 = arith.constant 0 : index
    %c0_4 = arith.constant 0 : index
    %7 = vector.load %arg3[%c0_2, %c0_3, %c0_4] : memref<9x8x8xbf16, #tpu.memory_space<vmem>>, vector<1x8x8xbf16>
    %8 = vector.shape_cast %7 : vector<1x8x8xbf16> to vector<8x8xbf16>
    %cst = arith.constant dense<0.000000e+00> : vector<256x8xf32>
    %9 = tpu.matmul %6, %8, %cst {dimension_numbers = #tpu.dot_dimension_numbers<[1], [0], [0], [1], [0, 0, 1, 1], [], []>} : vector<256x8xbf16>, vector<8x8xbf16>, vector<256x8xf32> -> vector<256x8xf32>
    %10 = vector.extract_strided_slice %4 {offsets = [0, 1, 0], sizes = [16, 16, 8], strides = [1, 1, 1]} : vector<18x18x8xbf16> to vector<16x16x8xbf16>
    %11 = vector.shape_cast %10 : vector<16x16x8xbf16> to vector<256x8xbf16>
    %c1 = arith.constant 1 : index
    %c0_5 = arith.constant 0 : index
    %c0_6 = arith.constant 0 : index
    %12 = vector.load %arg3[%c1, %c0_5, %c0_6] : memref<9x8x8xbf16, #tpu.memory_space<vmem>>, vector<1x8x8xbf16>
    %13 = vector.shape_cast %12 : vector<1x8x8xbf16> to vector<8x8xbf16>
    %cst_7 = arith.constant dense<0.000000e+00> : vector<256x8xf32>
    %14 = tpu.matmul %11, %13, %cst_7 {dimension_numbers = #tpu.dot_dimension_numbers<[1], [0], [0], [1], [0, 0, 1, 1], [], []>} : vector<256x8xbf16>, vector<8x8xbf16>, vector<256x8xf32> -> vector<256x8xf32>
    %15 = arith.addf %9, %14 : vector<256x8xf32>
    %16 = vector.extract_strided_slice %4 {offsets = [0, 2, 0], sizes = [16, 16, 8], strides = [1, 1, 1]} : vector<18x18x8xbf16> to vector<16x16x8xbf16>
    %17 = vector.shape_cast %16 : vector<16x16x8xbf16> to vector<256x8xbf16>
    %c2 = arith.constant 2 : index
    %c0_8 = arith.constant 0 : index
    %c0_9 = arith.constant 0 : index
    %18 = vector.load %arg3[%c2, %c0_8, %c0_9] : memref<9x8x8xbf16, #tpu.memory_space<vmem>>, vector<1x8x8xbf16>
    %19 = vector.shape_cast %18 : vector<1x8x8xbf16> to vector<8x8xbf16>
    %cst_10 = arith.constant dense<0.000000e+00> : vector<256x8xf32>
    %20 = tpu.matmul %17, %19, %cst_10 {dimension_numbers = #tpu.dot_dimension_numbers<[1], [0], [0], [1], [0, 0, 1, 1], [], []>} : vector<256x8xbf16>, vector<8x8xbf16>, vector<256x8xf32> -> vector<256x8xf32>
    %21 = arith.addf %15, %20 : vector<256x8xf32>
    %22 = vector.extract_strided_slice %4 {offsets = [1, 0, 0], sizes = [16, 16, 8], strides = [1, 1, 1]} : vector<18x18x8xbf16> to vector<16x16x8xbf16>
    %23 = vector.shape_cast %22 : vector<16x16x8xbf16> to vector<256x8xbf16>
    %c3 = arith.constant 3 : index
    %c0_11 = arith.constant 0 : index
    %c0_12 = arith.constant 0 : index
    %24 = vector.load %arg3[%c3, %c0_11, %c0_12] : memref<9x8x8xbf16, #tpu.memory_space<vmem>>, vector<1x8x8xbf16>
    %25 = vector.shape_cast %24 : vector<1x8x8xbf16> to vector<8x8xbf16>
    %cst_13 = arith.constant dense<0.000000e+00> : vector<256x8xf32>
    %26 = tpu.matmul %23, %25, %cst_13 {dimension_numbers = #tpu.dot_dimension_numbers<[1], [0], [0], [1], [0, 0, 1, 1], [], []>} : vector<256x8xbf16>, vector<8x8xbf16>, vector<256x8xf32> -> vector<256x8xf32>
    %27 = arith.addf %21, %26 : vector<256x8xf32>
    %28 = vector.extract_strided_slice %4 {offsets = [1, 1, 0], sizes = [16, 16, 8], strides = [1, 1, 1]} : vector<18x18x8xbf16> to vector<16x16x8xbf16>
    %29 = vector.shape_cast %28 : vector<16x16x8xbf16> to vector<256x8xbf16>
    %c4 = arith.constant 4 : index
    %c0_14 = arith.constant 0 : index
    %c0_15 = arith.constant 0 : index
    %30 = vector.load %arg3[%c4, %c0_14, %c0_15] : memref<9x8x8xbf16, #tpu.memory_space<vmem>>, vector<1x8x8xbf16>
    %31 = vector.shape_cast %30 : vector<1x8x8xbf16> to vector<8x8xbf16>
    %cst_16 = arith.constant dense<0.000000e+00> : vector<256x8xf32>
    %32 = tpu.matmul %29, %31, %cst_16 {dimension_numbers = #tpu.dot_dimension_numbers<[1], [0], [0], [1], [0, 0, 1, 1], [], []>} : vector<256x8xbf16>, vector<8x8xbf16>, vector<256x8xf32> -> vector<256x8xf32>
    %33 = arith.addf %27, %32 : vector<256x8xf32>
    %34 = vector.extract_strided_slice %4 {offsets = [1, 2, 0], sizes = [16, 16, 8], strides = [1, 1, 1]} : vector<18x18x8xbf16> to vector<16x16x8xbf16>
    %35 = vector.shape_cast %34 : vector<16x16x8xbf16> to vector<256x8xbf16>
    %c5 = arith.constant 5 : index
    %c0_17 = arith.constant 0 : index
    %c0_18 = arith.constant 0 : index
    %36 = vector.load %arg3[%c5, %c0_17, %c0_18] : memref<9x8x8xbf16, #tpu.memory_space<vmem>>, vector<1x8x8xbf16>
    %37 = vector.shape_cast %36 : vector<1x8x8xbf16> to vector<8x8xbf16>
    %cst_19 = arith.constant dense<0.000000e+00> : vector<256x8xf32>
    %38 = tpu.matmul %35, %37, %cst_19 {dimension_numbers = #tpu.dot_dimension_numbers<[1], [0], [0], [1], [0, 0, 1, 1], [], []>} : vector<256x8xbf16>, vector<8x8xbf16>, vector<256x8xf32> -> vector<256x8xf32>
    %39 = arith.addf %33, %38 : vector<256x8xf32>
    %40 = vector.extract_strided_slice %4 {offsets = [2, 0, 0], sizes = [16, 16, 8], strides = [1, 1, 1]} : vector<18x18x8xbf16> to vector<16x16x8xbf16>
    %41 = vector.shape_cast %40 : vector<16x16x8xbf16> to vector<256x8xbf16>
    %c6 = arith.constant 6 : index
    %c0_20 = arith.constant 0 : index
    %c0_21 = arith.constant 0 : index
    %42 = vector.load %arg3[%c6, %c0_20, %c0_21] : memref<9x8x8xbf16, #tpu.memory_space<vmem>>, vector<1x8x8xbf16>
    %43 = vector.shape_cast %42 : vector<1x8x8xbf16> to vector<8x8xbf16>
    %cst_22 = arith.constant dense<0.000000e+00> : vector<256x8xf32>
    %44 = tpu.matmul %41, %43, %cst_22 {dimension_numbers = #tpu.dot_dimension_numbers<[1], [0], [0], [1], [0, 0, 1, 1], [], []>} : vector<256x8xbf16>, vector<8x8xbf16>, vector<256x8xf32> -> vector<256x8xf32>
    %45 = arith.addf %39, %44 : vector<256x8xf32>
    %46 = vector.extract_strided_slice %4 {offsets = [2, 1, 0], sizes = [16, 16, 8], strides = [1, 1, 1]} : vector<18x18x8xbf16> to vector<16x16x8xbf16>
    %47 = vector.shape_cast %46 : vector<16x16x8xbf16> to vector<256x8xbf16>
    %c7 = arith.constant 7 : index
    %c0_23 = arith.constant 0 : index
    %c0_24 = arith.constant 0 : index
    %48 = vector.load %arg3[%c7, %c0_23, %c0_24] : memref<9x8x8xbf16, #tpu.memory_space<vmem>>, vector<1x8x8xbf16>
    %49 = vector.shape_cast %48 : vector<1x8x8xbf16> to vector<8x8xbf16>
    %cst_25 = arith.constant dense<0.000000e+00> : vector<256x8xf32>
    %50 = tpu.matmul %47, %49, %cst_25 {dimension_numbers = #tpu.dot_dimension_numbers<[1], [0], [0], [1], [0, 0, 1, 1], [], []>} : vector<256x8xbf16>, vector<8x8xbf16>, vector<256x8xf32> -> vector<256x8xf32>
    %51 = arith.addf %45, %50 : vector<256x8xf32>
    %52 = vector.extract_strided_slice %4 {offsets = [2, 2, 0], sizes = [16, 16, 8], strides = [1, 1, 1]} : vector<18x18x8xbf16> to vector<16x16x8xbf16>
    %53 = vector.shape_cast %52 : vector<16x16x8xbf16> to vector<256x8xbf16>
    %c8 = arith.constant 8 : index
    %c0_26 = arith.constant 0 : index
    %c0_27 = arith.constant 0 : index
    %54 = vector.load %arg3[%c8, %c0_26, %c0_27] : memref<9x8x8xbf16, #tpu.memory_space<vmem>>, vector<1x8x8xbf16>
    %55 = vector.shape_cast %54 : vector<1x8x8xbf16> to vector<8x8xbf16>
    %cst_28 = arith.constant dense<0.000000e+00> : vector<256x8xf32>
    %56 = tpu.matmul %53, %55, %cst_28 {dimension_numbers = #tpu.dot_dimension_numbers<[1], [0], [0], [1], [0, 0, 1, 1], [], []>} : vector<256x8xbf16>, vector<8x8xbf16>, vector<256x8xf32> -> vector<256x8xf32>
    %57 = arith.addf %51, %56 : vector<256x8xf32>
    %58 = vector.shape_cast %57 : vector<256x8xf32> to vector<1x16x16x8xf32>
    %59 = arith.truncf %58 : vector<1x16x16x8xf32> to vector<1x16x16x8xbf16>
    %c0_29 = arith.constant 0 : index
    %c0_30 = arith.constant 0 : index
    %c0_31 = arith.constant 0 : index
    %c0_32 = arith.constant 0 : index
    %60 = vector.load %arg4[%c0_29, %c0_30, %c0_31, %c0_32] : memref<1x16x16x8xbf16, #tpu.memory_space<vmem>>, vector<1x16x16x8xbf16>
    tpu.vector_store %arg4[%c0_29, %c0_30, %c0_31, %c0_32], %59 {strides = array<i32>} : memref<1x16x16x8xbf16, #tpu.memory_space<vmem>>, vector<1x16x16x8xbf16>,
    return
  }
  func.func @transform_0(%arg0: i32, %arg1: i32) -> (i32, i32, i32, i32) {
    %c0_i32 = arith.constant 0 : i32
    %c0_i32_0 = arith.constant 0 : i32
    %c0_i32_1 = arith.constant 0 : i32
    %c0_i32_2 = arith.constant 0 : i32
    return %arg0, %c0_i32, %c0_i32_0, %c0_i32_1 : i32, i32, i32, i32
  }
  func.func @transform_1(%arg0: i32, %arg1: i32) -> (i32, i32, i32) {
    %c0_i32 = arith.constant 0 : i32
    %c0_i32_0 = arith.constant 0 : i32
    %c0_i32_1 = arith.constant 0 : i32
    %c0_i32_2 = arith.constant 0 : i32
    return %c0_i32, %c0_i32_0, %c0_i32_1 : i32, i32, i32
  }
  func.func @transform_2(%arg0: i32, %arg1: i32) -> (i32, i32, i32, i32) {
    %c0_i32 = arith.constant 0 : i32
    %c0_i32_0 = arith.constant 0 : i32
    %c0_i32_1 = arith.constant 0 : i32
    return %arg0, %arg1, %c0_i32, %c0_i32_0 : i32, i32, i32, i32
  }
}

module attributes {stable_mosaic.version = 11 : i64} {
  func.func @_pw_kernel(%arg0: i32, %arg1: i32, %arg2: memref<1x16x16x8xbf16, #tpu.memory_space<vmem>>, %arg3: memref<8x4xbf16, #tpu.memory_space<vmem>>, %arg4: memref<1x16x16x4xf32, #tpu.memory_space<vmem>>) attributes {dimension_semantics = [#tpu.dimension_semantics<parallel>, #tpu.dimension_semantics<parallel>], iteration_bounds = array<i64: 2, 1>, scalar_prefetch = 0 : i64, scratch_operands = 0 : i64, tpu.core_type = #tpu.core_type<tc>, window_params = [{transform_indices = @transform_0, window_bounds = array<i64: 1, 16, 16, 8>}, {pipeline_mode = #tpu.pipeline_mode<synchronous>, transform_indices = @transform_1, window_bounds = array<i64: 8, 4>}, {transform_indices = @transform_2, window_bounds = array<i64: 1, 16, 16, 4>}]} {
    %c0 = arith.constant 0 : index
    %c0_0 = arith.constant 0 : index
    %c0_1 = arith.constant 0 : index
    %c0_2 = arith.constant 0 : index
    %0 = vector.load %arg2[%c0, %c0_0, %c0_1, %c0_2] : memref<1x16x16x8xbf16, #tpu.memory_space<vmem>>, vector<1x16x16x8xbf16>
    %1 = vector.shape_cast %0 : vector<1x16x16x8xbf16> to vector<16x16x8xbf16>
    %2 = vector.shape_cast %1 : vector<16x16x8xbf16> to vector<256x8xbf16>
    %c0_3 = arith.constant 0 : index
    %c0_4 = arith.constant 0 : index
    %3 = vector.load %arg3[%c0_3, %c0_4] : memref<8x4xbf16, #tpu.memory_space<vmem>>, vector<8x4xbf16>
    %cst = arith.constant dense<0.000000e+00> : vector<256x4xf32>
    %4 = tpu.matmul %2, %3, %cst {dimension_numbers = #tpu.dot_dimension_numbers<[1], [0], [0], [1], [0, 0, 1, 1], [], []>} : vector<256x8xbf16>, vector<8x4xbf16>, vector<256x4xf32> -> vector<256x4xf32>
    %5 = vector.shape_cast %4 : vector<256x4xf32> to vector<1x16x16x4xf32>
    %c0_5 = arith.constant 0 : index
    %c0_6 = arith.constant 0 : index
    %c0_7 = arith.constant 0 : index
    %c0_8 = arith.constant 0 : index
    %6 = vector.load %arg4[%c0_5, %c0_6, %c0_7, %c0_8] : memref<1x16x16x4xf32, #tpu.memory_space<vmem>>, vector<1x16x16x4xf32>
    tpu.vector_store %arg4[%c0_5, %c0_6, %c0_7, %c0_8], %5 {strides = array<i32>} : memref<1x16x16x4xf32, #tpu.memory_space<vmem>>, vector<1x16x16x4xf32>,
    return
  }
  func.func @transform_0(%arg0: i32, %arg1: i32) -> (i32, i32, i32, i32) {
    %c0_i32 = arith.constant 0 : i32
    %c0_i32_0 = arith.constant 0 : i32
    %c0_i32_1 = arith.constant 0 : i32
    return %arg0, %arg1, %c0_i32, %c0_i32_0 : i32, i32, i32, i32
  }
  func.func @transform_1(%arg0: i32, %arg1: i32) -> (i32, i32) {
    %c0_i32 = arith.constant 0 : i32
    %c0_i32_0 = arith.constant 0 : i32
    %c0_i32_1 = arith.constant 0 : i32
    return %c0_i32, %c0_i32_0 : i32, i32
  }
  func.func @transform_2(%arg0: i32, %arg1: i32) -> (i32, i32, i32, i32) {
    %c0_i32 = arith.constant 0 : i32
    %c0_i32_0 = arith.constant 0 : i32
    %c0_i32_1 = arith.constant 0 : i32
    return %arg0, %arg1, %c0_i32, %c0_i32_0 : i32, i32, i32, i32
  }
}

</mosaic_0001>

<llo_original>
// kernel: depthwise_separable_conv_forward.3
$region0: #{depthwise_separable_conv_forward.3}
  #allocation0 [shape = 'u32[]', space=smem, size = 0x4, offset = 0x4, fixed_abs, tag = 'smem constant byte address 0x4 - core index']
  #allocation1 [shape = 'u32[144,128]{1,0:T(1,128)}', space=vmem, size = 0x12000, scoped, tag = 'internal scratch']
  %s0 = inlined_call_operand.vmem [shape: bf16[2,16,16,8], index: 0, kind: input, shape index: {}]
  %s1 = inlined_call_operand.vmem [shape: bf16[8,4], index: 1, kind: input, shape index: {}]
  %s2 = inlined_call_operand.vmem [shape: f32[2,16,16,4], index: 2, kind: output, shape index: {}]
  %s3 = sld [smem:[#allocation0]]
  $region41: #{depthwise_separable_conv_forward.3} parent=0
    _
  %s5 = ssub.s32 1, %s3
  %s6 = scalar_select 0, %s5, %s3
  loop: start=0, step=1, limit=4
  $region2: #{depthwise_separable_conv_forward.3} parent=0 // loop_pre_header
    _
  $region3: #{depthwise_separable_conv_forward.3} parent=0 // loop_header
    %s8 = sphi 0, %s12
    %p9 = scmp.ge.s32.totalorder %s8, 4
    %s15 = sphi 0, %s27
    %s16 = sphi 0, %s23
    %s17 = sphi 0, %s15
    %s18 = sphi 0, %s16
    %s19 = sphi 0, %s17
    %s20 = sphi 0, %s18
    %s32 = sphi 0, %s34
    %s35 = sphi 0, %s32
    %s36 = sphi 0, %s35
    %s52 = sphi 0, %s36
    %s56 = sphi 0, %s56
    %s58 = sphi 0, %s56
    %s59 = sphi 0, %s58
    %s73 = sphi 0, %s59
    %s81 = sphi 0, %s83
    %s84 = sphi 0, %s81
    %s85 = sphi 0, %s84
    %s101 = sphi 0, %s85
  $region4: #{depthwise_separable_conv_forward.3} parent=0 // loop_header_branch
    %11 = sbr.rel (%p9) target = $region8
  $region5: #{depthwise_separable_conv_forward.3} parent=0 // loop_body
    %s13 = ssub.s32 %s8, 1
    %s14 = ssub.s32 %s8, 2
    %s21 = sadd.s32 1, %s16
    %p22 = scmp.ge.s32.totalorder %s21, 1
    %s23 = scalar_select %p22, 0, %s21
    %s24 = sadd.s32 1, %s15
    %s25 = scalar_select %p22, %s24, %s15
    %p26 = scmp.ge.s32.totalorder %s25, 2
    %s27 = scalar_select %p26, 0, %s25
    %s28 = ssub.s32 %s15, %s27
    %s29 = ssub.s32 %s16, %s23
    %s30 = sor.u32 %s28, %s29
    %p31 = scmp.eq.s32.totalorder %s30, 0
    %s33 = sadd.s32 %s32, 1
    %s34 = scalar_select %p31, %s32, %s33
    %p37 = pneg %p31
    %p38 = scmp.eq.s32.totalorder %s8, 1
    %p39 = por %p37, %p38
    %p40 = scmp.ne.s32.totalorder %s32, %s35
    %p41 = scmp.eq.s32.totalorder %s8, 0
    %p42 = por %p40, %p41
    %p43 = scmp.ne.s32.totalorder %s32, %s35
    %p44 = scmp.eq.s32.totalorder %s13, 1
    %p45 = por %p43, %p44
    %p46 = scmp.ne.s32.totalorder %s35, %s36
    %p47 = scmp.eq.s32.totalorder %s13, 0
    %p48 = por %p46, %p47
    %p49 = scmp.ne.s32.totalorder %s35, %s36
    %p50 = scmp.eq.s32.totalorder %s14, 1
    %p51 = por %p49, %p50
    %p53 = scmp.ne.s32.totalorder %s36, %s52
    %p54 = scmp.eq.s32.totalorder %s14, 0
    %p55 = por %p53, %p54
    %s57 = sadd.s32 %s56, 1
    %p60 = scmp.eq.s32.totalorder %s8, 1
    %p61 = scmp.ne.s32.totalorder %s56, %s58
    %p62 = scmp.eq.s32.totalorder %s8, 0
    %p63 = por %p61, %p62
    %p64 = scmp.ne.s32.totalorder %s56, %s58
    %p65 = scmp.eq.s32.totalorder %s13, 1
    %p66 = por %p64, %p65
    %p67 = scmp.ne.s32.totalorder %s58, %s59
    %p68 = scmp.eq.s32.totalorder %s13, 0
    %p69 = por %p67, %p68
    %p70 = scmp.ne.s32.totalorder %s58, %s59
    %p71 = scmp.eq.s32.totalorder %s14, 1
    %p72 = por %p70, %p71
    %p74 = scmp.ne.s32.totalorder %s59, %s73
    %p75 = scmp.eq.s32.totalorder %s14, 0
    %p76 = por %p74, %p75
    %s77 = ssub.s32 %s15, %s27
    %s78 = ssub.s32 %s16, %s23
    %s79 = sor.u32 %s77, %s78
    %p80 = scmp.eq.s32.totalorder %s79, 0
    %s82 = sadd.s32 %s81, 1
    %s83 = scalar_select %p80, %s81, %s82
    %p86 = pneg %p80
    %p87 = scmp.eq.s32.totalorder %s8, 1
    %p88 = por %p86, %p87
    %p89 = scmp.ne.s32.totalorder %s81, %s84
    %p90 = scmp.eq.s32.totalorder %s8, 0
    %p91 = por %p89, %p90
    %p92 = scmp.ne.s32.totalorder %s81, %s84
    %p93 = scmp.eq.s32.totalorder %s13, 1
    %p94 = por %p92, %p93
    %p95 = scmp.ne.s32.totalorder %s84, %s85
    %p96 = scmp.eq.s32.totalorder %s13, 0
    %p97 = por %p95, %p96
    %p98 = scmp.ne.s32.totalorder %s84, %s85
    %p99 = scmp.eq.s32.totalorder %s14, 1
    %p100 = por %p98, %p99
    %p102 = scmp.ne.s32.totalorder %s85, %s101
    %p103 = scmp.eq.s32.totalorder %s14, 0
    %p104 = por %p102, %p103
    %p105 = scmp.le.s32.totalorder 1, %s8
    %p106 = scmp.lt.s32.totalorder %s8, 3
    %p107 = pnand %p105, %p106
    %p108 = pneg %p107
    // Predicated region
    $region9: #{depthwise_separable_conv_forward.3} parent=5 // pred_check
      _
    $region10: #{depthwise_separable_conv_forward.3} parent=5 // pred_check_branch
      %110 = sbr.rel (%p107) target = $region12
    $region11: #{depthwise_separable_conv_forward.3} parent=5 // pred_region
      %s111 = ssub.s32 %s8, 1
      // Predicated region
      $region13: #{depthwise_separable_conv_forward.3} parent=11 // pred_check
        %p112 = pneg %p69
      $region14: #{depthwise_separable_conv_forward.3} parent=11 // pred_check_branch
        %114 = sbr.rel (%p112) target = $region16
      $region15: #{depthwise_separable_conv_forward.3} parent=11 // pred_region
        _
      $region16: #{depthwise_separable_conv_forward.3} parent=11 // pred_fallthru
        _
    $region12: #{depthwise_separable_conv_forward.3} parent=5 // pred_fallthru
      _
    %p115 = scmp.lt.s32.totalorder %s8, 2
    // Predicated region
    $region17: #{depthwise_separable_conv_forward.3} parent=5 // pred_check
      %p116 = pneg %p115
    $region18: #{depthwise_separable_conv_forward.3} parent=5 // pred_check_branch
      %118 = sbr.rel (%p116) target = $region20
    $region19: #{depthwise_separable_conv_forward.3} parent=5 // pred_region
      // Predicated region
      $region21: #{depthwise_separable_conv_forward.3} parent=19 // pred_check
        %p119 = pneg %p42
      $region22: #{depthwise_separable_conv_forward.3} parent=19 // pred_check_branch
        %121 = sbr.rel (%p119) target = $region24
      $region23: #{depthwise_separable_conv_forward.3} parent=19 // pred_region
        %s122 = smul.u32 16, %s16
        %p123 = scmp.lt.s32.totalorder %s15, 1
        %s124 = scalar_select %p123, %s15, 1
        %p125 = scmp.lt.s32.totalorder %s122, 15
        %s126 = scalar_select %p125, %s122, 15
        %s127 = smul.addr %s126, 2
        %s128 = smul.addr %s124, 32
        %s129 = sadd.s32 %s127, %s128
        %s130 = smul.addr %s129, 4
        %s131 = scalar_lea.vmem %s0, %s130
        %s132 = smul.u32 16, %s16
      $region24: #{depthwise_separable_conv_forward.3} parent=19 // pred_fallthru
        _
    $region20: #{depthwise_separable_conv_forward.3} parent=5 // pred_fallthru
      _
    %p133 = scmp.le.s32.totalorder 1, %s8
    %p134 = scmp.lt.s32.totalorder %s8, 3
    %p135 = pnand %p133, %p134
    %p136 = pneg %p135
    // Predicated region
    $region25: #{depthwise_separable_conv_forward.3} parent=5 // pred_check
      _
    $region26: #{depthwise_separable_conv_forward.3} parent=5 // pred_check_branch
      %138 = sbr.rel (%p135) target = $region28
    $region27: #{depthwise_separable_conv_forward.3} parent=5 // pred_region
      %s139 = ssub.s32 %s8, 1
      %s140 = smul.u32 16, %s18
      %p141 = scmp.lt.s32.totalorder %s17, 1
      %s142 = scalar_select %p141, %s17, 1
      %p143 = scmp.lt.s32.totalorder %s140, 15
      %s144 = scalar_select %p143, %s140, 15
      %s145 = smul.addr %s144, 2
      %s146 = smul.addr %s142, 32
      %s147 = sadd.s32 %s145, %s146
      %s148 = smul.addr %s147, 4
      %s149 = scalar_lea.vmem %s0, %s148
      %p150 = pneg %p48
      %p151 = pneg %p45
      %p152 = pneg %p69
      %p153 = pneg %p66
      %p154 = pneg %p97
      %p155 = pneg %p94
      %s156 = smul.u32 16, %s18
      %p157 = scmp.lt.s32.totalorder %s17, 1
      %s158 = scalar_select %p157, %s17, 1
      %p159 = scmp.lt.s32.totalorder %s156, 15
      %s160 = scalar_select %p159, %s156, 15
      %s161 = smul.addr %s160, 2
      %s162 = smul.addr %s158, 32
      %s163 = sadd.s32 %s161, %s162
      %s164 = smul.addr %s163, 8
      %s165 = scalar_lea.vmem %s2, %s164
      %s166 = smul.u32 16, %s18
      %p167 = scmp.lt.s32.totalorder %s17, 1
      %s168 = scalar_select %p167, %s17, 1
      %p169 = scmp.lt.s32.totalorder %s166, 15
      %s170 = scalar_select %p169, %s166, 15
      %s171 = smul.addr %s170, 2
      %s172 = smul.addr %s168, 32
      %s173 = sadd.s32 %s171, %s172
      %s174 = smul.addr %s173, 4
      %s175 = scalar_lea.vmem %s0, %s174
      %s176 = smul.u32 16, %s18
      %s177 = smul.u32 16, %s18
      %p178 = scmp.lt.s32.totalorder %s17, 1
      %s179 = scalar_select %p178, %s17, 1
      %p180 = scmp.lt.s32.totalorder %s177, 15
      %s181 = scalar_select %p180, %s177, 15
      %s182 = smul.addr %s181, 2
      %s183 = smul.addr %s179, 32
      %s184 = sadd.s32 %s182, %s183
      %s185 = smul.addr %s184, 8
      %s186 = scalar_lea.vmem %s2, %s185
      %s187 = smul.u32 16, %s18
      %v189 = vld [vmem:[%s175] sm:$0xf]
      %v190 = vld [vmem:[%s175 + $0x4] sm:$0xf]
      %v191 = vld [vmem:[%s175 + $0x8] sm:$0xf]
      %v192 = vld [vmem:[%s175 + $0xc] sm:$0xf]
      %v193 = vld [vmem:[%s175 + $0x10] sm:$0xf]
      %v194 = vld [vmem:[%s175 + $0x14] sm:$0xf]
      %v195 = vld [vmem:[%s175 + $0x18] sm:$0xf]
      %v196 = vld [vmem:[%s175 + $0x1c] sm:$0xf]
      %v197 = vld [vmem:[%s175 + $0x20] sm:$0xf]
      %v198 = vld [vmem:[%s175 + $0x24] sm:$0xf]
      %v199 = vld [vmem:[%s175 + $0x28] sm:$0xf]
      %v200 = vld [vmem:[%s175 + $0x2c] sm:$0xf]
      %v201 = vld [vmem:[%s175 + $0x30] sm:$0xf]
      %v202 = vld [vmem:[%s175 + $0x34] sm:$0xf]
      %v203 = vld [vmem:[%s175 + $0x38] sm:$0xf]
      %v204 = vld [vmem:[%s175 + $0x3c] sm:$0xf]
      %v205 = vld [vmem:[%s175 + $0x40] sm:$0xf]
      %v206 = vld [vmem:[%s175 + $0x44] sm:$0xf]
      %v207 = vld [vmem:[%s175 + $0x48] sm:$0xf]
      %v208 = vld [vmem:[%s175 + $0x4c] sm:$0xf]
      %v209 = vld [vmem:[%s175 + $0x50] sm:$0xf]
      %v210 = vld [vmem:[%s175 + $0x54] sm:$0xf]
      %v211 = vld [vmem:[%s175 + $0x58] sm:$0xf]
      %v212 = vld [vmem:[%s175 + $0x5c] sm:$0xf]
      %v213 = vld [vmem:[%s175 + $0x60] sm:$0xf]
      %v214 = vld [vmem:[%s175 + $0x64] sm:$0xf]
      %v215 = vld [vmem:[%s175 + $0x68] sm:$0xf]
      %v216 = vld [vmem:[%s175 + $0x6c] sm:$0xf]
      %v217 = vld [vmem:[%s175 + $0x70] sm:$0xf]
      %v218 = vld [vmem:[%s175 + $0x74] sm:$0xf]
      %v219 = vld [vmem:[%s175 + $0x78] sm:$0xf]
      %v220 = vld [vmem:[%s175 + $0x7c] sm:$0xf]
      %v221 = vld [vmem:[%s1] sm:$0xf]
      %v254 = vunpack.c.l.b16 %v189
      %v255 = vunpack.c.l.b16 %v190
      %v256 = vunpack.c.l.b16 %v191
      %v257 = vunpack.c.l.b16 %v192
      %v258 = vunpack.c.l.b16 %v193
      %v259 = vunpack.c.l.b16 %v194
      %v260 = vunpack.c.l.b16 %v195
      %v261 = vunpack.c.l.b16 %v196
      %v262 = vunpack.c.l.b16 %v197
      %v263 = vunpack.c.l.b16 %v198
      %v264 = vunpack.c.l.b16 %v199
      %v265 = vunpack.c.l.b16 %v200
      %v266 = vunpack.c.l.b16 %v201
      %v267 = vunpack.c.l.b16 %v202
      %v268 = vunpack.c.l.b16 %v203
      %v269 = vunpack.c.l.b16 %v204
      %v270 = vunpack.c.l.b16 %v205
      %v271 = vunpack.c.l.b16 %v206
      %v272 = vunpack.c.l.b16 %v207
      %v273 = vunpack.c.l.b16 %v208
      %v274 = vunpack.c.l.b16 %v209
      %v275 = vunpack.c.l.b16 %v210
      %v276 = vunpack.c.l.b16 %v211
      %v277 = vunpack.c.l.b16 %v212
      %v278 = vunpack.c.l.b16 %v213
      %v279 = vunpack.c.l.b16 %v214
      %v280 = vunpack.c.l.b16 %v215
      %v281 = vunpack.c.l.b16 %v216
      %v282 = vunpack.c.l.b16 %v217
      %v283 = vunpack.c.l.b16 %v218
      %v284 = vunpack.c.l.b16 %v219
      %v285 = vunpack.c.l.b16 %v220
      %v286 = vpack.c.b16 %v255, %v254
      %v287 = vpack.c.b16 %v257, %v256
      %v288 = vpack.c.b16 %v259, %v258
      %v289 = vpack.c.b16 %v261, %v260
      %v290 = vpack.c.b16 %v263, %v262
      %v291 = vpack.c.b16 %v265, %v264
      %v292 = vpack.c.b16 %v267, %v266
      %v293 = vpack.c.b16 %v269, %v268
      %v294 = vpack.c.b16 %v271, %v270
      %v295 = vpack.c.b16 %v273, %v272
      %v296 = vpack.c.b16 %v275, %v274
      %v297 = vpack.c.b16 %v277, %v276
      %v298 = vpack.c.b16 %v279, %v278
      %v299 = vpack.c.b16 %v281, %v280
      %v300 = vpack.c.b16 %v283, %v282
      %v301 = vpack.c.b16 %v285, %v284
      %vm302 = vcmask 64512
      %v304 = vsel %vm302, %v286, 0
      %v307 = vsel %vm302, %v287, 0
      %v310 = vsel %vm302, %v288, 0
      %v313 = vsel %vm302, %v289, 0
      %v316 = vsel %vm302, %v290, 0
      %v319 = vsel %vm302, %v291, 0
      %v322 = vsel %vm302, %v292, 0
      %v325 = vsel %vm302, %v293, 0
      %v328 = vsel %vm302, %v294, 0
      %v331 = vsel %vm302, %v295, 0
      %v334 = vsel %vm302, %v296, 0
      %v337 = vsel %vm302, %v297, 0
      %v340 = vsel %vm302, %v298, 0
      %v343 = vsel %vm302, %v299, 0
      %v346 = vsel %vm302, %v300, 0
      %v349 = vsel %vm302, %v301, 0
      %vm351 = vcmask 1043456
      %v353 = vsel %vm351, %v221, 0
      %355 = vmatprep.subr.bf16.mxu0 0
      %356 = vmatpush1.bf16.msra.mxu0 0
      %357 = vmatprep.subr.bf16.mxu0 0
      %358 = vmatpush1.bf16.msra.mxu0 0
      %359 = vmatprep.subr.bf16.mxu0 0
      %360 = vmatpush1.bf16.msra.mxu0 0
      %361 = vmatprep.subr.bf16.mxu0 0
      %362 = vmatpush1.bf16.msra.mxu0 0
      %363 = vmatprep.subr.bf16.mxu0 0
      %364 = vmatpush1.bf16.msra.mxu0 0
      %365 = vmatprep.subr.bf16.mxu0 0
      %366 = vmatpush1.bf16.msra.mxu0 0
      %367 = vmatprep.subr.bf16.mxu0 0
      %368 = vmatpush1.bf16.msra.mxu0 0
      %369 = vmatprep.subr.bf16.mxu0 0
      %370 = vmatpush1.bf16.msra.mxu0 %v353
      %371 = vmatprep.subr.bf16.mxu0 0
      %372 = vmatpush2.bf16.msra.mxu0 0
      %373 = vmatprep.subr.bf16.mxu0 0
      %374 = vmatpush2.bf16.msra.mxu0 0
      %375 = vmatprep.subr.bf16.mxu0 0
      %376 = vmatpush2.bf16.msra.mxu0 0
      %377 = vmatprep.subr.bf16.mxu0 0
      %378 = vmatpush2.bf16.msra.mxu0 0
      %379 = vmatprep.subr.bf16.mxu0 0
      %380 = vmatpush2.bf16.msra.mxu0 0
      %381 = vmatprep.subr.bf16.mxu0 0
      %382 = vmatpush2.bf16.msra.mxu0 0
      %383 = vmatprep.subr.bf16.mxu0 0
      %384 = vmatpush2.bf16.msra.mxu0 0
      %385 = vmatprep.subr.bf16.mxu0 0
      %386 = vmatpush2.bf16.msra.mxu0 0
      %387 = vmatprep.mubr.bf16.mxu0 0
      %388 = vmatmul.mubr.bf16.gmra.mxu0 %v304
      %v389 = vpop.f32.mrf.mxu0
      %v390 = vadd.f32 0.0, %v389
      %v391 = vpop.f32.mrf.mxu0
      %v392 = vpop.f32.mrf.mxu0
      %v393 = vadd.f32 0.0, %v392
      %v394 = vpop.f32.mrf.mxu0
      %395 = vmatprep.mubr.bf16.mxu0 0
      %396 = vmatmul.mubr.bf16.gmra.mxu0 %v307
      %v397 = vpop.f32.mrf.mxu0
      %v398 = vadd.f32 0.0, %v397
      %v399 = vpop.f32.mrf.mxu0
      %v400 = vpop.f32.mrf.mxu0
      %v401 = vadd.f32 0.0, %v400
      %v402 = vpop.f32.mrf.mxu0
      %403 = vmatprep.mubr.bf16.mxu0 0
      %404 = vmatmul.mubr.bf16.gmra.mxu0 %v310
      %v405 = vpop.f32.mrf.mxu0
      %v406 = vadd.f32 0.0, %v405
      %v407 = vpop.f32.mrf.mxu0
      %v408 = vpop.f32.mrf.mxu0
      %v409 = vadd.f32 0.0, %v408
      %v410 = vpop.f32.mrf.mxu0
      %411 = vmatprep.mubr.bf16.mxu0 0
      %412 = vmatmul.mubr.bf16.gmra.mxu0 %v313
      %v413 = vpop.f32.mrf.mxu0
      %v414 = vadd.f32 0.0, %v413
      %v415 = vpop.f32.mrf.mxu0
      %v416 = vpop.f32.mrf.mxu0
      %v417 = vadd.f32 0.0, %v416
      %v418 = vpop.f32.mrf.mxu0
      %419 = vmatprep.mubr.bf16.mxu0 0
      %420 = vmatmul.mubr.bf16.gmra.mxu0 %v316
      %v421 = vpop.f32.mrf.mxu0
      %v422 = vadd.f32 0.0, %v421
      %v423 = vpop.f32.mrf.mxu0
      %v424 = vpop.f32.mrf.mxu0
      %v425 = vadd.f32 0.0, %v424
      %v426 = vpop.f32.mrf.mxu0
      %427 = vmatprep.mubr.bf16.mxu0 0
      %428 = vmatmul.mubr.bf16.gmra.mxu0 %v319
      %v429 = vpop.f32.mrf.mxu0
      %v430 = vadd.f32 0.0, %v429
      %v431 = vpop.f32.mrf.mxu0
      %v432 = vpop.f32.mrf.mxu0
      %v433 = vadd.f32 0.0, %v432
      %v434 = vpop.f32.mrf.mxu0
      %435 = vmatprep.mubr.bf16.mxu0 0
      %436 = vmatmul.mubr.bf16.gmra.mxu0 %v322
      %v437 = vpop.f32.mrf.mxu0
      %v438 = vadd.f32 0.0, %v437
      %v439 = vpop.f32.mrf.mxu0
      %v440 = vpop.f32.mrf.mxu0
      %v441 = vadd.f32 0.0, %v440
      %v442 = vpop.f32.mrf.mxu0
      %443 = vmatprep.mubr.bf16.mxu0 0
      %444 = vmatmul.mubr.bf16.gmra.mxu0 %v325
      %v445 = vpop.f32.mrf.mxu0
      %v446 = vadd.f32 0.0, %v445
      %v447 = vpop.f32.mrf.mxu0
      %v448 = vpop.f32.mrf.mxu0
      %v449 = vadd.f32 0.0, %v448
      %v450 = vpop.f32.mrf.mxu0
      %451 = vmatprep.mubr.bf16.mxu0 0
      %452 = vmatmul.mubr.bf16.gmra.mxu0 %v328
      %v453 = vpop.f32.mrf.mxu0
      %v454 = vadd.f32 0.0, %v453
      %v455 = vpop.f32.mrf.mxu0
      %v456 = vpop.f32.mrf.mxu0
      %v457 = vadd.f32 0.0, %v456
      %v458 = vpop.f32.mrf.mxu0
      %459 = vmatprep.mubr.bf16.mxu0 0
      %460 = vmatmul.mubr.bf16.gmra.mxu0 %v331
      %v461 = vpop.f32.mrf.mxu0
      %v462 = vadd.f32 0.0, %v461
      %v463 = vpop.f32.mrf.mxu0
      %v464 = vpop.f32.mrf.mxu0
      %v465 = vadd.f32 0.0, %v464
      %v466 = vpop.f32.mrf.mxu0
      %467 = vmatprep.mubr.bf16.mxu0 0
      %468 = vmatmul.mubr.bf16.gmra.mxu0 %v334
      %v469 = vpop.f32.mrf.mxu0
      %v470 = vadd.f32 0.0, %v469
      %v471 = vpop.f32.mrf.mxu0
      %v472 = vpop.f32.mrf.mxu0
      %v473 = vadd.f32 0.0, %v472
      %v474 = vpop.f32.mrf.mxu0
      %475 = vmatprep.mubr.bf16.mxu0 0
      %476 = vmatmul.mubr.bf16.gmra.mxu0 %v337
      %v477 = vpop.f32.mrf.mxu0
      %v478 = vadd.f32 0.0, %v477
      %v479 = vpop.f32.mrf.mxu0
      %v480 = vpop.f32.mrf.mxu0
      %v481 = vadd.f32 0.0, %v480
      %v482 = vpop.f32.mrf.mxu0
      %483 = vmatprep.mubr.bf16.mxu0 0
      %484 = vmatmul.mubr.bf16.gmra.mxu0 %v340
      %v485 = vpop.f32.mrf.mxu0
      %v486 = vadd.f32 0.0, %v485
      %v487 = vpop.f32.mrf.mxu0
      %v488 = vpop.f32.mrf.mxu0
      %v489 = vadd.f32 0.0, %v488
      %v490 = vpop.f32.mrf.mxu0
      %491 = vmatprep.mubr.bf16.mxu0 0
      %492 = vmatmul.mubr.bf16.gmra.mxu0 %v343
      %v493 = vpop.f32.mrf.mxu0
      %v494 = vadd.f32 0.0, %v493
      %v495 = vpop.f32.mrf.mxu0
      %v496 = vpop.f32.mrf.mxu0
      %v497 = vadd.f32 0.0, %v496
      %v498 = vpop.f32.mrf.mxu0
      %499 = vmatprep.mubr.bf16.mxu0 0
      %500 = vmatmul.mubr.bf16.gmra.mxu0 %v346
      %v501 = vpop.f32.mrf.mxu0
      %v502 = vadd.f32 0.0, %v501
      %v503 = vpop.f32.mrf.mxu0
      %v504 = vpop.f32.mrf.mxu0
      %v505 = vadd.f32 0.0, %v504
      %v506 = vpop.f32.mrf.mxu0
      %507 = vmatprep.mubr.bf16.mxu0 0
      %508 = vmatmul.mubr.bf16.gmra.mxu0 %v349
      %v509 = vpop.f32.mrf.mxu0
      %v510 = vadd.f32 0.0, %v509
      %v511 = vpop.f32.mrf.mxu0
      %v512 = vpop.f32.mrf.mxu0
      %v513 = vadd.f32 0.0, %v512
      %v514 = vpop.f32.mrf.mxu0
      %515 = vdwg.mxu0
      %vm516 = vcmask 31744
      %517 = vst.msk [vmem:[%s186] sm:$0xff] %vm516, %v390
      %518 = vst.msk [vmem:[%s186 + $0x8] sm:$0xff] %vm516, %v393
      %519 = vst.msk [vmem:[%s186 + $0x10] sm:$0xff] %vm516, %v398
      %520 = vst.msk [vmem:[%s186 + $0x18] sm:$0xff] %vm516, %v401
      %521 = vst.msk [vmem:[%s186 + $0x20] sm:$0xff] %vm516, %v406
      %522 = vst.msk [vmem:[%s186 + $0x28] sm:$0xff] %vm516, %v409
      %523 = vst.msk [vmem:[%s186 + $0x30] sm:$0xff] %vm516, %v414
      %524 = vst.msk [vmem:[%s186 + $0x38] sm:$0xff] %vm516, %v417
      %525 = vst.msk [vmem:[%s186 + $0x40] sm:$0xff] %vm516, %v422
      %526 = vst.msk [vmem:[%s186 + $0x48] sm:$0xff] %vm516, %v425
      %527 = vst.msk [vmem:[%s186 + $0x50] sm:$0xff] %vm516, %v430
      %528 = vst.msk [vmem:[%s186 + $0x58] sm:$0xff] %vm516, %v433
      %529 = vst.msk [vmem:[%s186 + $0x60] sm:$0xff] %vm516, %v438
      %530 = vst.msk [vmem:[%s186 + $0x68] sm:$0xff] %vm516, %v441
      %531 = vst.msk [vmem:[%s186 + $0x70] sm:$0xff] %vm516, %v446
      %532 = vst.msk [vmem:[%s186 + $0x78] sm:$0xff] %vm516, %v449
      %533 = vst.msk [vmem:[%s186 + $0x80] sm:$0xff] %vm516, %v454
      %534 = vst.msk [vmem:[%s186 + $0x88] sm:$0xff] %vm516, %v457
      %535 = vst.msk [vmem:[%s186 + $0x90] sm:$0xff] %vm516, %v462
      %536 = vst.msk [vmem:[%s186 + $0x98] sm:$0xff] %vm516, %v465
      %537 = vst.msk [vmem:[%s186 + $0xa0] sm:$0xff] %vm516, %v470
      %538 = vst.msk [vmem:[%s186 + $0xa8] sm:$0xff] %vm516, %v473
      %539 = vst.msk [vmem:[%s186 + $0xb0] sm:$0xff] %vm516, %v478
      %540 = vst.msk [vmem:[%s186 + $0xb8] sm:$0xff] %vm516, %v481
      %541 = vst.msk [vmem:[%s186 + $0xc0] sm:$0xff] %vm516, %v486
      %542 = vst.msk [vmem:[%s186 + $0xc8] sm:$0xff] %vm516, %v489
      %543 = vst.msk [vmem:[%s186 + $0xd0] sm:$0xff] %vm516, %v494
      %544 = vst.msk [vmem:[%s186 + $0xd8] sm:$0xff] %vm516, %v497
      %545 = vst.msk [vmem:[%s186 + $0xe0] sm:$0xff] %vm516, %v502
      %546 = vst.msk [vmem:[%s186 + $0xe8] sm:$0xff] %vm516, %v505
      %547 = vst.msk [vmem:[%s186 + $0xf0] sm:$0xff] %vm516, %v510
      %548 = vst.msk [vmem:[%s186 + $0xf8] sm:$0xff] %vm516, %v513
      %s549 = smul.u32 16, %s18
      %p550 = scmp.lt.s32.totalorder %s17, 1
      %s551 = scalar_select %p550, %s17, 1
      %p552 = scmp.lt.s32.totalorder %s549, 15
      %s553 = scalar_select %p552, %s549, 15
      %s554 = smul.addr %s553, 2
      %s555 = smul.addr %s551, 32
      %s556 = sadd.s32 %s554, %s555
      %s557 = smul.addr %s556, 8
      %s558 = scalar_lea.vmem %s2, %s557
      // Predicated region
      $region29: #{depthwise_separable_conv_forward.3} parent=27 // pred_check
        %p559 = pneg %p94
      $region30: #{depthwise_separable_conv_forward.3} parent=27 // pred_check_branch
        %561 = sbr.rel (%p559) target = $region32
      $region31: #{depthwise_separable_conv_forward.3} parent=27 // pred_region
        %s562 = smul.u32 16, %s18
      $region32: #{depthwise_separable_conv_forward.3} parent=27 // pred_fallthru
        _
    $region28: #{depthwise_separable_conv_forward.3} parent=5 // pred_fallthru
      _
    %p563 = scmp.le.s32.totalorder 2, %s8
    // Predicated region
    $region33: #{depthwise_separable_conv_forward.3} parent=5 // pred_check
      %p564 = pneg %p563
    $region34: #{depthwise_separable_conv_forward.3} parent=5 // pred_check_branch
      %566 = sbr.rel (%p564) target = $region36
    $region35: #{depthwise_separable_conv_forward.3} parent=5 // pred_region
      %s567 = ssub.s32 %s8, 2
      // Predicated region
      $region37: #{depthwise_separable_conv_forward.3} parent=35 // pred_check
        %p568 = pneg %p100
      $region38: #{depthwise_separable_conv_forward.3} parent=35 // pred_check_branch
        %570 = sbr.rel (%p568) target = $region40
      $region39: #{depthwise_separable_conv_forward.3} parent=35 // pred_region
        %s571 = smul.u32 16, %s20
        %p572 = scmp.lt.s32.totalorder %s19, 1
        %s573 = scalar_select %p572, %s19, 1
        %p574 = scmp.lt.s32.totalorder %s571, 15
        %s575 = scalar_select %p574, %s571, 15
        %s576 = smul.addr %s575, 2
        %s577 = smul.addr %s573, 32
        %s578 = sadd.s32 %s576, %s577
        %s579 = smul.addr %s578, 8
        %s580 = scalar_lea.vmem %s2, %s579
      $region40: #{depthwise_separable_conv_forward.3} parent=35 // pred_fallthru
        _
    $region36: #{depthwise_separable_conv_forward.3} parent=5 // pred_fallthru
      _
  $region6: #{depthwise_separable_conv_forward.3} parent=0 // loop_footer
    %s12 = sadd.s32 1, %s8
  $region7: #{depthwise_separable_conv_forward.3} parent=0 // loop_footer_branch
    %7 = sbr.rel target = $region3
  $region8: #{depthwise_separable_conv_forward.3} parent=0 // loop_exit
    _

// kernel: depthwise_separable_conv_forward.2
$region0: #{depthwise_separable_conv_forward.2}
  #allocation0 [shape = 'u32[]', space=smem, size = 0x4, offset = 0x4, fixed_abs, tag = 'smem constant byte address 0x4 - core index']
  #allocation1 [shape = 'u32[144,128]{1,0:T(1,128)}', space=vmem, size = 0x12000, scoped, tag = 'internal scratch']
  %s0 = inlined_call_operand.vmem [shape: bf16[2,18,18,8], index: 0, kind: input, shape index: {}]
  %s1 = inlined_call_operand.vmem [shape: bf16[9,8,8], index: 1, kind: input, shape index: {}]
  %s2 = inlined_call_operand.vmem [shape: bf16[2,16,16,8], index: 2, kind: output, shape index: {}]
  %s3 = sld [smem:[#allocation0]]
  $region41: #{depthwise_separable_conv_forward.2} parent=0
    _
  %s5 = ssub.s32 1, %s3
  %s6 = scalar_select 0, %s5, %s3
  loop: start=0, step=1, limit=4
  $region2: #{depthwise_separable_conv_forward.2} parent=0 // loop_pre_header
    _
  $region3: #{depthwise_separable_conv_forward.2} parent=0 // loop_header
    %s8 = sphi 0, %s12
    %p9 = scmp.ge.s32.totalorder %s8, 4
    %s15 = sphi 0, %s27
    %s16 = sphi 0, %s23
    %s17 = sphi 0, %s15
    %s18 = sphi 0, %s16
    %s19 = sphi 0, %s17
    %s20 = sphi 0, %s18
    %s30 = sphi 0, %s32
    %s33 = sphi 0, %s30
    %s34 = sphi 0, %s33
    %s50 = sphi 0, %s34
    %s54 = sphi 0, %s54
    %s56 = sphi 0, %s54
    %s57 = sphi 0, %s56
    %s71 = sphi 0, %s57
    %s79 = sphi 0, %s81
    %s82 = sphi 0, %s79
    %s83 = sphi 0, %s82
    %s99 = sphi 0, %s83
  $region4: #{depthwise_separable_conv_forward.2} parent=0 // loop_header_branch
    %11 = sbr.rel (%p9) target = $region8
  $region5: #{depthwise_separable_conv_forward.2} parent=0 // loop_body
    %s13 = ssub.s32 %s8, 1
    %s14 = ssub.s32 %s8, 2
    %s21 = sadd.s32 1, %s16
    %p22 = scmp.ge.s32.totalorder %s21, 1
    %s23 = scalar_select %p22, 0, %s21
    %s24 = sadd.s32 1, %s15
    %s25 = scalar_select %p22, %s24, %s15
    %p26 = scmp.ge.s32.totalorder %s25, 2
    %s27 = scalar_select %p26, 0, %s25
    %s28 = ssub.s32 %s15, %s27
    %p29 = scmp.eq.s32.totalorder %s28, 0
    %s31 = sadd.s32 %s30, 1
    %s32 = scalar_select %p29, %s30, %s31
    %p35 = pneg %p29
    %p36 = scmp.eq.s32.totalorder %s8, 1
    %p37 = por %p35, %p36
    %p38 = scmp.ne.s32.totalorder %s30, %s33
    %p39 = scmp.eq.s32.totalorder %s8, 0
    %p40 = por %p38, %p39
    %p41 = scmp.ne.s32.totalorder %s30, %s33
    %p42 = scmp.eq.s32.totalorder %s13, 1
    %p43 = por %p41, %p42
    %p44 = scmp.ne.s32.totalorder %s33, %s34
    %p45 = scmp.eq.s32.totalorder %s13, 0
    %p46 = por %p44, %p45
    %p47 = scmp.ne.s32.totalorder %s33, %s34
    %p48 = scmp.eq.s32.totalorder %s14, 1
    %p49 = por %p47, %p48
    %p51 = scmp.ne.s32.totalorder %s34, %s50
    %p52 = scmp.eq.s32.totalorder %s14, 0
    %p53 = por %p51, %p52
    %s55 = sadd.s32 %s54, 1
    %p58 = scmp.eq.s32.totalorder %s8, 1
    %p59 = scmp.ne.s32.totalorder %s54, %s56
    %p60 = scmp.eq.s32.totalorder %s8, 0
    %p61 = por %p59, %p60
    %p62 = scmp.ne.s32.totalorder %s54, %s56
    %p63 = scmp.eq.s32.totalorder %s13, 1
    %p64 = por %p62, %p63
    %p65 = scmp.ne.s32.totalorder %s56, %s57
    %p66 = scmp.eq.s32.totalorder %s13, 0
    %p67 = por %p65, %p66
    %p68 = scmp.ne.s32.totalorder %s56, %s57
    %p69 = scmp.eq.s32.totalorder %s14, 1
    %p70 = por %p68, %p69
    %p72 = scmp.ne.s32.totalorder %s57, %s71
    %p73 = scmp.eq.s32.totalorder %s14, 0
    %p74 = por %p72, %p73
    %s75 = ssub.s32 %s15, %s27
    %s76 = ssub.s32 %s16, %s23
    %s77 = sor.u32 %s75, %s76
    %p78 = scmp.eq.s32.totalorder %s77, 0
    %s80 = sadd.s32 %s79, 1
    %s81 = scalar_select %p78, %s79, %s80
    %p84 = pneg %p78
    %p85 = scmp.eq.s32.totalorder %s8, 1
    %p86 = por %p84, %p85
    %p87 = scmp.ne.s32.totalorder %s79, %s82
    %p88 = scmp.eq.s32.totalorder %s8, 0
    %p89 = por %p87, %p88
    %p90 = scmp.ne.s32.totalorder %s79, %s82
    %p91 = scmp.eq.s32.totalorder %s13, 1
    %p92 = por %p90, %p91
    %p93 = scmp.ne.s32.totalorder %s82, %s83
    %p94 = scmp.eq.s32.totalorder %s13, 0
    %p95 = por %p93, %p94
    %p96 = scmp.ne.s32.totalorder %s82, %s83
    %p97 = scmp.eq.s32.totalorder %s14, 1
    %p98 = por %p96, %p97
    %p100 = scmp.ne.s32.totalorder %s83, %s99
    %p101 = scmp.eq.s32.totalorder %s14, 0
    %p102 = por %p100, %p101
    %p103 = scmp.le.s32.totalorder 1, %s8
    %p104 = scmp.lt.s32.totalorder %s8, 3
    %p105 = pnand %p103, %p104
    %p106 = pneg %p105
    // Predicated region
    $region9: #{depthwise_separable_conv_forward.2} parent=5 // pred_check
      _
    $region10: #{depthwise_separable_conv_forward.2} parent=5 // pred_check_branch
      %108 = sbr.rel (%p105) target = $region12
    $region11: #{depthwise_separable_conv_forward.2} parent=5 // pred_region
      %s109 = ssub.s32 %s8, 1
      // Predicated region
      $region13: #{depthwise_separable_conv_forward.2} parent=11 // pred_check
        %p110 = pneg %p67
      $region14: #{depthwise_separable_conv_forward.2} parent=11 // pred_check_branch
        %112 = sbr.rel (%p110) target = $region16
      $region15: #{depthwise_separable_conv_forward.2} parent=11 // pred_region
        _
      $region16: #{depthwise_separable_conv_forward.2} parent=11 // pred_fallthru
        _
    $region12: #{depthwise_separable_conv_forward.2} parent=5 // pred_fallthru
      _
    %p113 = scmp.lt.s32.totalorder %s8, 2
    // Predicated region
    $region17: #{depthwise_separable_conv_forward.2} parent=5 // pred_check
      %p114 = pneg %p113
    $region18: #{depthwise_separable_conv_forward.2} parent=5 // pred_check_branch
      %116 = sbr.rel (%p114) target = $region20
    $region19: #{depthwise_separable_conv_forward.2} parent=5 // pred_region
      // Predicated region
      $region21: #{depthwise_separable_conv_forward.2} parent=19 // pred_check
        %p117 = pneg %p40
      $region22: #{depthwise_separable_conv_forward.2} parent=19 // pred_check_branch
        %119 = sbr.rel (%p117) target = $region24
      $region23: #{depthwise_separable_conv_forward.2} parent=19 // pred_region
        %p120 = scmp.lt.s32.totalorder %s15, 1
        %s121 = scalar_select %p120, %s15, 1
        %s122 = smul.addr %s121, 54
        %s123 = smul.addr %s122, 4
        %s124 = scalar_lea.vmem %s0, %s123
      $region24: #{depthwise_separable_conv_forward.2} parent=19 // pred_fallthru
        _
    $region20: #{depthwise_separable_conv_forward.2} parent=5 // pred_fallthru
      _
    %p125 = scmp.le.s32.totalorder 1, %s8
    %p126 = scmp.lt.s32.totalorder %s8, 3
    %p127 = pnand %p125, %p126
    %p128 = pneg %p127
    // Predicated region
    $region25: #{depthwise_separable_conv_forward.2} parent=5 // pred_check
      _
    $region26: #{depthwise_separable_conv_forward.2} parent=5 // pred_check_branch
      %130 = sbr.rel (%p127) target = $region28
    $region27: #{depthwise_separable_conv_forward.2} parent=5 // pred_region
      %s131 = ssub.s32 %s8, 1
      %p132 = scmp.lt.s32.totalorder %s17, 1
      %s133 = scalar_select %p132, %s17, 1
      %s134 = smul.addr %s133, 54
      %s135 = smul.addr %s134, 4
      %s136 = scalar_lea.vmem %s0, %s135
      %p137 = pneg %p46
      %p138 = pneg %p43
      %p139 = pneg %p67
      %p140 = pneg %p64
      %p141 = pneg %p95
      %p142 = pneg %p92
      %s143 = smul.u32 16, %s18
      %p144 = scmp.lt.s32.totalorder %s17, 1
      %s145 = scalar_select %p144, %s17, 1
      %p146 = scmp.lt.s32.totalorder %s143, 15
      %s147 = scalar_select %p146, %s143, 15
      %s148 = smul.addr %s147, 2
      %s149 = smul.addr %s145, 32
      %s150 = sadd.s32 %s148, %s149
      %s151 = smul.addr %s150, 4
      %s152 = scalar_lea.vmem %s2, %s151
      %p153 = scmp.lt.s32.totalorder %s17, 1
      %s154 = scalar_select %p153, %s17, 1
      %s155 = smul.addr %s154, 54
      %s156 = smul.addr %s155, 4
      %s157 = scalar_lea.vmem %s0, %s156
      %s158 = smul.u32 16, %s18
      %p159 = scmp.lt.s32.totalorder %s17, 1
      %s160 = scalar_select %p159, %s17, 1
      %p161 = scmp.lt.s32.totalorder %s158, 15
      %s162 = scalar_select %p161, %s158, 15
      %s163 = smul.addr %s162, 2
      %s164 = smul.addr %s160, 32
      %s165 = sadd.s32 %s163, %s164
      %s166 = smul.addr %s165, 4
      %s167 = scalar_lea.vmem %s2, %s166
      %s168 = smul.u32 16, %s18
      %s170 = smul.u32 %s18, 16
      %s171 = smul.u32 %s170, 3
      %s172 = smul.addr %s171, 4
      %s173 = scalar_lea.vmem %s157, %s172
      %v174 = vld [vmem:[%s173] sm:$0xf]
      %v175 = vld [vmem:[%s173 + $0x4] sm:$0xf]
      %v176 = vld [vmem:[%s173 + $0x8] sm:$0x1]
      %v177 = vld [vmem:[%s173 + $0xc] sm:$0xf]
      %v178 = vld [vmem:[%s173 + $0x10] sm:$0xf]
      %v179 = vld [vmem:[%s173 + $0x14] sm:$0x1]
      %v180 = vld [vmem:[%s173 + $0x18] sm:$0xf]
      %v181 = vld [vmem:[%s173 + $0x1c] sm:$0xf]
      %v182 = vld [vmem:[%s173 + $0x20] sm:$0x1]
      %v183 = vld [vmem:[%s173 + $0x24] sm:$0xf]
      %v184 = vld [vmem:[%s173 + $0x28] sm:$0xf]
      %v185 = vld [vmem:[%s173 + $0x2c] sm:$0x1]
      %v186 = vld [vmem:[%s173 + $0x30] sm:$0xf]
      %v187 = vld [vmem:[%s173 + $0x34] sm:$0xf]
      %v188 = vld [vmem:[%s173 + $0x38] sm:$0x1]
      %v189 = vld [vmem:[%s173 + $0x3c] sm:$0xf]
      %v190 = vld [vmem:[%s173 + $0x40] sm:$0xf]
      %v191 = vld [vmem:[%s173 + $0x44] sm:$0x1]
      %v192 = vld [vmem:[%s173 + $0x48] sm:$0xf]
      %v193 = vld [vmem:[%s173 + $0x4c] sm:$0xf]
      %v194 = vld [vmem:[%s173 + $0x50] sm:$0x1]
      %v195 = vld [vmem:[%s173 + $0x54] sm:$0xf]
      %v196 = vld [vmem:[%s173 + $0x58] sm:$0xf]
      %v197 = vld [vmem:[%s173 + $0x5c] sm:$0x1]
      %v198 = vld [vmem:[%s173 + $0x60] sm:$0xf]
      %v199 = vld [vmem:[%s173 + $0x64] sm:$0xf]
      %v200 = vld [vmem:[%s173 + $0x68] sm:$0x1]
      %v201 = vld [vmem:[%s173 + $0x6c] sm:$0xf]
      %v202 = vld [vmem:[%s173 + $0x70] sm:$0xf]
      %v203 = vld [vmem:[%s173 + $0x74] sm:$0x1]
      %v204 = vld [vmem:[%s173 + $0x78] sm:$0xf]
      %v205 = vld [vmem:[%s173 + $0x7c] sm:$0xf]
      %v206 = vld [vmem:[%s173 + $0x80] sm:$0x1]
      %v207 = vld [vmem:[%s173 + $0x84] sm:$0xf]
      %v208 = vld [vmem:[%s173 + $0x88] sm:$0xf]
      %v209 = vld [vmem:[%s173 + $0x8c] sm:$0x1]
      %v210 = vld [vmem:[%s173 + $0x90] sm:$0xf]
      %v211 = vld [vmem:[%s173 + $0x94] sm:$0xf]
      %v212 = vld [vmem:[%s173 + $0x98] sm:$0x1]
      %v213 = vld [vmem:[%s173 + $0x9c] sm:$0xf]
      %v214 = vld [vmem:[%s173 + $0xa0] sm:$0xf]
      %v215 = vld [vmem:[%s173 + $0xa4] sm:$0x1]
      %v216 = vld [vmem:[%s173 + $0xa8] sm:$0xf]
      %v217 = vld [vmem:[%s173 + $0xac] sm:$0xf]
      %v218 = vld [vmem:[%s173 + $0xb0] sm:$0x1]
      %v219 = vld [vmem:[%s173 + $0xb4] sm:$0xf]
      %v220 = vld [vmem:[%s173 + $0xb8] sm:$0xf]
      %v221 = vld [vmem:[%s173 + $0xbc] sm:$0x1]
      %v222 = vld [vmem:[%s173 + $0xc0] sm:$0xf]
      %v223 = vld [vmem:[%s173 + $0xc4] sm:$0xf]
      %v224 = vld [vmem:[%s173 + $0xc8] sm:$0x1]
      %v225 = vld [vmem:[%s173 + $0xcc] sm:$0xf]
      %v226 = vld [vmem:[%s173 + $0xd0] sm:$0xf]
      %v227 = vld [vmem:[%s173 + $0xd4] sm:$0x1]
      %v228 = vld [vmem:[%s1] sm:$0xf]
      %vm229 = vsmask.f32 3328
      %vm230 = vsmask.f32 7440
      %vm231 = vmor %vm229, %vm230
      %v233 = vshrl.u32 %v174, 16
      %v235 = vrot.slane %v233, 4
      %v236 = vshll.u32 %v174, 16
      %v238 = vrot.slane %v236, 5
      %v239 = vor.u32 %v235, %v238
      %v240 = vrot.slane %v239, 4
      %v242 = vshll.u32 %v175, 16
      %v244 = vrot.slane %v242, 5
      %v245 = vsel %vm231, %v240, %v244
      %v246 = vshrl.u32 %v175, 16
      %v248 = vrot.slane %v246, 4
      %v249 = vor.u32 %v248, %v244
      %v250 = vrot.slane %v249, 4
      %v252 = vshll.u32 %v176, 16
      %v254 = vrot.slane %v252, 5
      %v255 = vsel %vm231, %v250, %v254
      %v257 = vshrl.u32 %v177, 16
      %v259 = vrot.slane %v257, 4
      %v260 = vshll.u32 %v177, 16
      %v262 = vrot.slane %v260, 5
      %v263 = vor.u32 %v259, %v262
      %v264 = vrot.slane %v263, 4
      %v266 = vshll.u32 %v178, 16
      %v268 = vrot.slane %v266, 5
      %v269 = vsel %vm231, %v264, %v268
      %v270 = vshrl.u32 %v178, 16
      %v272 = vrot.slane %v270, 4
      %v273 = vor.u32 %v272, %v268
      %v274 = vrot.slane %v273, 4
      %v276 = vshll.u32 %v179, 16
      %v278 = vrot.slane %v276, 5
      %v279 = vsel %vm231, %v274, %v278
      %v281 = vshrl.u32 %v180, 16
      %v283 = vrot.slane %v281, 4
      %v284 = vshll.u32 %v180, 16
      %v286 = vrot.slane %v284, 5
      %v287 = vor.u32 %v283, %v286
      %v288 = vrot.slane %v287, 4
      %v290 = vshll.u32 %v181, 16
      %v292 = vrot.slane %v290, 5
      %v293 = vsel %vm231, %v288, %v292
      %v294 = vshrl.u32 %v181, 16
      %v296 = vrot.slane %v294, 4
      %v297 = vor.u32 %v296, %v292
      %v298 = vrot.slane %v297, 4
      %v300 = vshll.u32 %v182, 16
      %v302 = vrot.slane %v300, 5
      %v303 = vsel %vm231, %v298, %v302
      %v305 = vshrl.u32 %v183, 16
      %v307 = vrot.slane %v305, 4
      %v308 = vshll.u32 %v183, 16
      %v310 = vrot.slane %v308, 5
      %v311 = vor.u32 %v307, %v310
      %v312 = vrot.slane %v311, 4
      %v314 = vshll.u32 %v184, 16
      %v316 = vrot.slane %v314, 5
      %v317 = vsel %vm231, %v312, %v316
      %v318 = vshrl.u32 %v184, 16
      %v320 = vrot.slane %v318, 4
      %v321 = vor.u32 %v320, %v316
      %v322 = vrot.slane %v321, 4
      %v324 = vshll.u32 %v185, 16
      %v326 = vrot.slane %v324, 5
      %v327 = vsel %vm231, %v322, %v326
      %v329 = vshrl.u32 %v186, 16
      %v331 = vrot.slane %v329, 4
      %v332 = vshll.u32 %v186, 16
      %v334 = vrot.slane %v332, 5
      %v335 = vor.u32 %v331, %v334
      %v336 = vrot.slane %v335, 4
      %v338 = vshll.u32 %v187, 16
      %v340 = vrot.slane %v338, 5
      %v341 = vsel %vm231, %v336, %v340
      %v342 = vshrl.u32 %v187, 16
      %v344 = vrot.slane %v342, 4
      %v345 = vor.u32 %v344, %v340
      %v346 = vrot.slane %v345, 4
      %v348 = vshll.u32 %v188, 16
      %v350 = vrot.slane %v348, 5
      %v351 = vsel %vm231, %v346, %v350
      %v353 = vshrl.u32 %v189, 16
      %v355 = vrot.slane %v353, 4
      %v356 = vshll.u32 %v189, 16
      %v358 = vrot.slane %v356, 5
      %v359 = vor.u32 %v355, %v358
      %v360 = vrot.slane %v359, 4
      %v362 = vshll.u32 %v190, 16
      %v364 = vrot.slane %v362, 5
      %v365 = vsel %vm231, %v360, %v364
      %v366 = vshrl.u32 %v190, 16
      %v368 = vrot.slane %v366, 4
      %v369 = vor.u32 %v368, %v364
      %v370 = vrot.slane %v369, 4
      %v372 = vshll.u32 %v191, 16
      %v374 = vrot.slane %v372, 5
      %v375 = vsel %vm231, %v370, %v374
      %v377 = vshrl.u32 %v192, 16
      %v379 = vrot.slane %v377, 4
      %v380 = vshll.u32 %v192, 16
      %v382 = vrot.slane %v380, 5
      %v383 = vor.u32 %v379, %v382
      %v384 = vrot.slane %v383, 4
      %v386 = vshll.u32 %v193, 16
      %v388 = vrot.slane %v386, 5
      %v389 = vsel %vm231, %v384, %v388
      %v390 = vshrl.u32 %v193, 16
      %v392 = vrot.slane %v390, 4
      %v393 = vor.u32 %v392, %v388
      %v394 = vrot.slane %v393, 4
      %v396 = vshll.u32 %v194, 16
      %v398 = vrot.slane %v396, 5
      %v399 = vsel %vm231, %v394, %v398
      %v401 = vshrl.u32 %v195, 16
      %v403 = vrot.slane %v401, 4
      %v404 = vshll.u32 %v195, 16
      %v406 = vrot.slane %v404, 5
      %v407 = vor.u32 %v403, %v406
      %v408 = vrot.slane %v407, 4
      %v410 = vshll.u32 %v196, 16
      %v412 = vrot.slane %v410, 5
      %v413 = vsel %vm231, %v408, %v412
      %v414 = vshrl.u32 %v196, 16
      %v416 = vrot.slane %v414, 4
      %v417 = vor.u32 %v416, %v412
      %v418 = vrot.slane %v417, 4
      %v420 = vshll.u32 %v197, 16
      %v422 = vrot.slane %v420, 5
      %v423 = vsel %vm231, %v418, %v422
      %v425 = vshrl.u32 %v198, 16
      %v427 = vrot.slane %v425, 4
      %v428 = vshll.u32 %v198, 16
      %v430 = vrot.slane %v428, 5
      %v431 = vor.u32 %v427, %v430
      %v432 = vrot.slane %v431, 4
      %v434 = vshll.u32 %v199, 16
      %v436 = vrot.slane %v434, 5
      %v437 = vsel %vm231, %v432, %v436
      %v438 = vshrl.u32 %v199, 16
      %v440 = vrot.slane %v438, 4
      %v441 = vor.u32 %v440, %v436
      %v442 = vrot.slane %v441, 4
      %v444 = vshll.u32 %v200, 16
      %v446 = vrot.slane %v444, 5
      %v447 = vsel %vm231, %v442, %v446
      %v449 = vshrl.u32 %v201, 16
      %v451 = vrot.slane %v449, 4
      %v452 = vshll.u32 %v201, 16
      %v454 = vrot.slane %v452, 5
      %v455 = vor.u32 %v451, %v454
      %v456 = vrot.slane %v455, 4
      %v458 = vshll.u32 %v202, 16
      %v460 = vrot.slane %v458, 5
      %v461 = vsel %vm231, %v456, %v460
      %v462 = vshrl.u32 %v202, 16
      %v464 = vrot.slane %v462, 4
      %v465 = vor.u32 %v464, %v460
      %v466 = vrot.slane %v465, 4
      %v468 = vshll.u32 %v203, 16
      %v470 = vrot.slane %v468, 5
      %v471 = vsel %vm231, %v466, %v470
      %v473 = vshrl.u32 %v204, 16
      %v475 = vrot.slane %v473, 4
      %v476 = vshll.u32 %v204, 16
      %v478 = vrot.slane %v476, 5
      %v479 = vor.u32 %v475, %v478
      %v480 = vrot.slane %v479, 4
      %v482 = vshll.u32 %v205, 16
      %v484 = vrot.slane %v482, 5
      %v485 = vsel %vm231, %v480, %v484
      %v486 = vshrl.u32 %v205, 16
      %v488 = vrot.slane %v486, 4
      %v489 = vor.u32 %v488, %v484
      %v490 = vrot.slane %v489, 4
      %v492 = vshll.u32 %v206, 16
      %v494 = vrot.slane %v492, 5
      %v495 = vsel %vm231, %v490, %v494
      %v497 = vshrl.u32 %v207, 16
      %v499 = vrot.slane %v497, 4
      %v500 = vshll.u32 %v207, 16
      %v502 = vrot.slane %v500, 5
      %v503 = vor.u32 %v499, %v502
      %v504 = vrot.slane %v503, 4
      %v506 = vshll.u32 %v208, 16
      %v508 = vrot.slane %v506, 5
      %v509 = vsel %vm231, %v504, %v508
      %v510 = vshrl.u32 %v208, 16
      %v512 = vrot.slane %v510, 4
      %v513 = vor.u32 %v512, %v508
      %v514 = vrot.slane %v513, 4
      %v516 = vshll.u32 %v209, 16
      %v518 = vrot.slane %v516, 5
      %v519 = vsel %vm231, %v514, %v518
      %v521 = vshrl.u32 %v210, 16
      %v523 = vrot.slane %v521, 4
      %v524 = vshll.u32 %v210, 16
      %v526 = vrot.slane %v524, 5
      %v527 = vor.u32 %v523, %v526
      %v528 = vrot.slane %v527, 4
      %v530 = vshll.u32 %v211, 16
      %v532 = vrot.slane %v530, 5
      %v533 = vsel %vm231, %v528, %v532
      %v534 = vshrl.u32 %v211, 16
      %v536 = vrot.slane %v534, 4
      %v537 = vor.u32 %v536, %v532
      %v538 = vrot.slane %v537, 4
      %v540 = vshll.u32 %v212, 16
      %v542 = vrot.slane %v540, 5
      %v543 = vsel %vm231, %v538, %v542
      %v545 = vshrl.u32 %v213, 16
      %v547 = vrot.slane %v545, 4
      %v548 = vshll.u32 %v213, 16
      %v550 = vrot.slane %v548, 5
      %v551 = vor.u32 %v547, %v550
      %v552 = vrot.slane %v551, 4
      %v554 = vshll.u32 %v214, 16
      %v556 = vrot.slane %v554, 5
      %v557 = vsel %vm231, %v552, %v556
      %v558 = vshrl.u32 %v214, 16
      %v560 = vrot.slane %v558, 4
      %v561 = vor.u32 %v560, %v556
      %v562 = vrot.slane %v561, 4
      %v564 = vshll.u32 %v215, 16
      %v566 = vrot.slane %v564, 5
      %v567 = vsel %vm231, %v562, %v566
      %v569 = vshrl.u32 %v216, 16
      %v571 = vrot.slane %v569, 4
      %v572 = vshll.u32 %v216, 16
      %v574 = vrot.slane %v572, 5
      %v575 = vor.u32 %v571, %v574
      %v576 = vrot.slane %v575, 4
      %v578 = vshll.u32 %v217, 16
      %v580 = vrot.slane %v578, 5
      %v581 = vsel %vm231, %v576, %v580
      %v582 = vshrl.u32 %v217, 16
      %v584 = vrot.slane %v582, 4
      %v585 = vor.u32 %v584, %v580
      %v586 = vrot.slane %v585, 4
      %v588 = vshll.u32 %v218, 16
      %v590 = vrot.slane %v588, 5
      %v591 = vsel %vm231, %v586, %v590
      %v593 = vshrl.u32 %v219, 16
      %v595 = vrot.slane %v593, 4
      %v596 = vshll.u32 %v219, 16
      %v598 = vrot.slane %v596, 5
      %v599 = vor.u32 %v595, %v598
      %v600 = vrot.slane %v599, 4
      %v602 = vshll.u32 %v220, 16
      %v604 = vrot.slane %v602, 5
      %v605 = vsel %vm231, %v600, %v604
      %v606 = vshrl.u32 %v220, 16
      %v608 = vrot.slane %v606, 4
      %v609 = vor.u32 %v608, %v604
      %v610 = vrot.slane %v609, 4
      %v612 = vshll.u32 %v221, 16
      %v614 = vrot.slane %v612, 5
      %v615 = vsel %vm231, %v610, %v614
      %s616 = scalar_lea.vmem %s1, 4
      %v617 = vld [vmem:[%s616] sm:$0xf]
      %v618 = vunpack.c.l.b16 %v245
      %v619 = vunpack.c.l.b16 %v255
      %v620 = vunpack.c.l.b16 %v269
      %v621 = vunpack.c.l.b16 %v279
      %v622 = vunpack.c.l.b16 %v293
      %v623 = vunpack.c.l.b16 %v303
      %v624 = vunpack.c.l.b16 %v317
      %v625 = vunpack.c.l.b16 %v327
      %v626 = vunpack.c.l.b16 %v341
      %v627 = vunpack.c.l.b16 %v351
      %v628 = vunpack.c.l.b16 %v365
      %v629 = vunpack.c.l.b16 %v375
      %v630 = vunpack.c.l.b16 %v389
      %v631 = vunpack.c.l.b16 %v399
      %v632 = vunpack.c.l.b16 %v413
      %v633 = vunpack.c.l.b16 %v423
      %v634 = vunpack.c.l.b16 %v437
      %v635 = vunpack.c.l.b16 %v447
      %v636 = vunpack.c.l.b16 %v461
      %v637 = vunpack.c.l.b16 %v471
      %v638 = vunpack.c.l.b16 %v485
      %v639 = vunpack.c.l.b16 %v495
      %v640 = vunpack.c.l.b16 %v509
      %v641 = vunpack.c.l.b16 %v519
      %v642 = vunpack.c.l.b16 %v533
      %v643 = vunpack.c.l.b16 %v543
      %v644 = vunpack.c.l.b16 %v557
      %v645 = vunpack.c.l.b16 %v567
      %v646 = vunpack.c.l.b16 %v581
      %v647 = vunpack.c.l.b16 %v591
      %v648 = vunpack.c.l.b16 %v605
      %v649 = vunpack.c.l.b16 %v615
      %v650 = vpack.c.b16 %v619, %v618
      %v651 = vpack.c.b16 %v621, %v620
      %v652 = vpack.c.b16 %v623, %v622
      %v653 = vpack.c.b16 %v625, %v624
      %v654 = vpack.c.b16 %v627, %v626
      %v655 = vpack.c.b16 %v629, %v628
      %v656 = vpack.c.b16 %v631, %v630
      %v657 = vpack.c.b16 %v633, %v632
      %v658 = vpack.c.b16 %v635, %v634
      %v659 = vpack.c.b16 %v637, %v636
      %v660 = vpack.c.b16 %v639, %v638
      %v661 = vpack.c.b16 %v641, %v640
      %v662 = vpack.c.b16 %v643, %v642
      %v663 = vpack.c.b16 %v645, %v644
      %v664 = vpack.c.b16 %v647, %v646
      %v665 = vpack.c.b16 %v649, %v648
      %vm666 = vcmask 64512
      %v668 = vsel %vm666, %v650, 0
      %v671 = vsel %vm666, %v651, 0
      %v674 = vsel %vm666, %v652, 0
      %v677 = vsel %vm666, %v653, 0
      %v680 = vsel %vm666, %v654, 0
      %v683 = vsel %vm666, %v655, 0
      %v686 = vsel %vm666, %v656, 0
      %v689 = vsel %vm666, %v657, 0
      %v692 = vsel %vm666, %v658, 0
      %v695 = vsel %vm666, %v659, 0
      %v698 = vsel %vm666, %v660, 0
      %v701 = vsel %vm666, %v661, 0
      %v704 = vsel %vm666, %v662, 0
      %v707 = vsel %vm666, %v663, 0
      %v710 = vsel %vm666, %v664, 0
      %v713 = vsel %vm666, %v665, 0
      %vm715 = vcmask 1043456
      %v717 = vsel %vm715, %v617, 0
      %719 = vmatprep.subr.bf16.mxu0 0
      %720 = vmatpush1.bf16.msra.mxu0 0
      %721 = vmatprep.subr.bf16.mxu0 0
      %722 = vmatpush1.bf16.msra.mxu0 0
      %723 = vmatprep.subr.bf16.mxu0 0
      %724 = vmatpush1.bf16.msra.mxu0 0
      %725 = vmatprep.subr.bf16.mxu0 0
      %726 = vmatpush1.bf16.msra.mxu0 0
      %727 = vmatprep.subr.bf16.mxu0 0
      %728 = vmatpush1.bf16.msra.mxu0 0
      %729 = vmatprep.subr.bf16.mxu0 0
      %730 = vmatpush1.bf16.msra.mxu0 0
      %731 = vmatprep.subr.bf16.mxu0 0
      %732 = vmatpush1.bf16.msra.mxu0 0
      %733 = vmatprep.subr.bf16.mxu0 0
      %734 = vmatpush1.bf16.msra.mxu0 %v717
      %735 = vmatprep.subr.bf16.mxu0 0
      %736 = vmatpush2.bf16.msra.mxu0 0
      %737 = vmatprep.subr.bf16.mxu0 0
      %738 = vmatpush2.bf16.msra.mxu0 0
      %739 = vmatprep.subr.bf16.mxu0 0
      %740 = vmatpush2.bf16.msra.mxu0 0
      %741 = vmatprep.subr.bf16.mxu0 0
      %742 = vmatpush2.bf16.msra.mxu0 0
      %743 = vmatprep.subr.bf16.mxu0 0
      %744 = vmatpush2.bf16.msra.mxu0 0
      %745 = vmatprep.subr.bf16.mxu0 0
      %746 = vmatpush2.bf16.msra.mxu0 0
      %747 = vmatprep.subr.bf16.mxu0 0
      %748 = vmatpush2.bf16.msra.mxu0 0
      %749 = vmatprep.subr.bf16.mxu0 0
      %750 = vmatpush2.bf16.msra.mxu0 0
      %751 = vmatprep.mubr.bf16.mxu0 0
      %752 = vmatmul.mubr.bf16.gmra.mxu0 %v668
      %v753 = vpop.f32.mrf.mxu0
      %v754 = vadd.f32 0.0, %v753
      %v755 = vpop.f32.mrf.mxu0
      %v756 = vpop.f32.mrf.mxu0
      %v757 = vadd.f32 0.0, %v756
      %v758 = vpop.f32.mrf.mxu0
      %759 = vmatprep.mubr.bf16.mxu0 0
      %760 = vmatmul.mubr.bf16.gmra.mxu0 %v671
      %v761 = vpop.f32.mrf.mxu0
      %v762 = vadd.f32 0.0, %v761
      %v763 = vpop.f32.mrf.mxu0
      %v764 = vpop.f32.mrf.mxu0
      %v765 = vadd.f32 0.0, %v764
      %v766 = vpop.f32.mrf.mxu0
      %767 = vmatprep.mubr.bf16.mxu0 0
      %768 = vmatmul.mubr.bf16.gmra.mxu0 %v674
      %v769 = vpop.f32.mrf.mxu0
      %v770 = vadd.f32 0.0, %v769
      %v771 = vpop.f32.mrf.mxu0
      %v772 = vpop.f32.mrf.mxu0
      %v773 = vadd.f32 0.0, %v772
      %v774 = vpop.f32.mrf.mxu0
      %775 = vmatprep.mubr.bf16.mxu0 0
      %776 = vmatmul.mubr.bf16.gmra.mxu0 %v677
      %v777 = vpop.f32.mrf.mxu0
      %v778 = vadd.f32 0.0, %v777
      %v779 = vpop.f32.mrf.mxu0
      %v780 = vpop.f32.mrf.mxu0
      %v781 = vadd.f32 0.0, %v780
      %v782 = vpop.f32.mrf.mxu0
      %783 = vmatprep.mubr.bf16.mxu0 0
      %784 = vmatmul.mubr.bf16.gmra.mxu0 %v680
      %v785 = vpop.f32.mrf.mxu0
      %v786 = vadd.f32 0.0, %v785
      %v787 = vpop.f32.mrf.mxu0
      %v788 = vpop.f32.mrf.mxu0
      %v789 = vadd.f32 0.0, %v788
      %v790 = vpop.f32.mrf.mxu0
      %791 = vmatprep.mubr.bf16.mxu0 0
      %792 = vmatmul.mubr.bf16.gmra.mxu0 %v683
      %v793 = vpop.f32.mrf.mxu0
      %v794 = vadd.f32 0.0, %v793
      %v795 = vpop.f32.mrf.mxu0
      %v796 = vpop.f32.mrf.mxu0
      %v797 = vadd.f32 0.0, %v796
      %v798 = vpop.f32.mrf.mxu0
      %799 = vmatprep.mubr.bf16.mxu0 0
      %800 = vmatmul.mubr.bf16.gmra.mxu0 %v686
      %v801 = vpop.f32.mrf.mxu0
      %v802 = vadd.f32 0.0, %v801
      %v803 = vpop.f32.mrf.mxu0
      %v804 = vpop.f32.mrf.mxu0
      %v805 = vadd.f32 0.0, %v804
      %v806 = vpop.f32.mrf.mxu0
      %807 = vmatprep.mubr.bf16.mxu0 0
      %808 = vmatmul.mubr.bf16.gmra.mxu0 %v689
      %v809 = vpop.f32.mrf.mxu0
      %v810 = vadd.f32 0.0, %v809
      %v811 = vpop.f32.mrf.mxu0
      %v812 = vpop.f32.mrf.mxu0
      %v813 = vadd.f32 0.0, %v812
      %v814 = vpop.f32.mrf.mxu0
      %815 = vmatprep.mubr.bf16.mxu0 0
      %816 = vmatmul.mubr.bf16.gmra.mxu0 %v692
      %v817 = vpop.f32.mrf.mxu0
      %v818 = vadd.f32 0.0, %v817
      %v819 = vpop.f32.mrf.mxu0
      %v820 = vpop.f32.mrf.mxu0
      %v821 = vadd.f32 0.0, %v820
      %v822 = vpop.f32.mrf.mxu0
      %823 = vmatprep.mubr.bf16.mxu0 0
      %824 = vmatmul.mubr.bf16.gmra.mxu0 %v695
      %v825 = vpop.f32.mrf.mxu0
      %v826 = vadd.f32 0.0, %v825
      %v827 = vpop.f32.mrf.mxu0
      %v828 = vpop.f32.mrf.mxu0
      %v829 = vadd.f32 0.0, %v828
      %v830 = vpop.f32.mrf.mxu0
      %831 = vmatprep.mubr.bf16.mxu0 0
      %832 = vmatmul.mubr.bf16.gmra.mxu0 %v698
      %v833 = vpop.f32.mrf.mxu0
      %v834 = vadd.f32 0.0, %v833
      %v835 = vpop.f32.mrf.mxu0
      %v836 = vpop.f32.mrf.mxu0
      %v837 = vadd.f32 0.0, %v836
      %v838 = vpop.f32.mrf.mxu0
      %839 = vmatprep.mubr.bf16.mxu0 0
      %840 = vmatmul.mubr.bf16.gmra.mxu0 %v701
      %v841 = vpop.f32.mrf.mxu0
      %v842 = vadd.f32 0.0, %v841
      %v843 = vpop.f32.mrf.mxu0
      %v844 = vpop.f32.mrf.mxu0
      %v845 = vadd.f32 0.0, %v844
      %v846 = vpop.f32.mrf.mxu0
      %847 = vmatprep.mubr.bf16.mxu0 0
      %848 = vmatmul.mubr.bf16.gmra.mxu0 %v704
      %v849 = vpop.f32.mrf.mxu0
      %v850 = vadd.f32 0.0, %v849
      %v851 = vpop.f32.mrf.mxu0
      %v852 = vpop.f32.mrf.mxu0
      %v853 = vadd.f32 0.0, %v852
      %v854 = vpop.f32.mrf.mxu0
      %855 = vmatprep.mubr.bf16.mxu0 0
      %856 = vmatmul.mubr.bf16.gmra.mxu0 %v707
      %v857 = vpop.f32.mrf.mxu0
      %v858 = vadd.f32 0.0, %v857
      %v859 = vpop.f32.mrf.mxu0
      %v860 = vpop.f32.mrf.mxu0
      %v861 = vadd.f32 0.0, %v860
      %v862 = vpop.f32.mrf.mxu0
      %863 = vmatprep.mubr.bf16.mxu0 0
      %864 = vmatmul.mubr.bf16.gmra.mxu0 %v710
      %v865 = vpop.f32.mrf.mxu0
      %v866 = vadd.f32 0.0, %v865
      %v867 = vpop.f32.mrf.mxu0
      %v868 = vpop.f32.mrf.mxu0
      %v869 = vadd.f32 0.0, %v868
      %v870 = vpop.f32.mrf.mxu0
      %871 = vmatprep.mubr.bf16.mxu0 0
      %872 = vmatmul.mubr.bf16.gmra.mxu0 %v713
      %v873 = vpop.f32.mrf.mxu0
      %v874 = vadd.f32 0.0, %v873
      %v875 = vpop.f32.mrf.mxu0
      %v876 = vpop.f32.mrf.mxu0
      %v877 = vadd.f32 0.0, %v876
      %v878 = vpop.f32.mrf.mxu0
      %879 = vdwg.mxu0
      %v912 = vunpack.c.l.b16 %v174
      %v913 = vunpack.c.l.b16 %v175
      %v914 = vunpack.c.l.b16 %v177
      %v915 = vunpack.c.l.b16 %v178
      %v916 = vunpack.c.l.b16 %v180
      %v917 = vunpack.c.l.b16 %v181
      %v918 = vunpack.c.l.b16 %v183
      %v919 = vunpack.c.l.b16 %v184
      %v920 = vunpack.c.l.b16 %v186
      %v921 = vunpack.c.l.b16 %v187
      %v922 = vunpack.c.l.b16 %v189
      %v923 = vunpack.c.l.b16 %v190
      %v924 = vunpack.c.l.b16 %v192
      %v925 = vunpack.c.l.b16 %v193
      %v926 = vunpack.c.l.b16 %v195
      %v927 = vunpack.c.l.b16 %v196
      %v928 = vunpack.c.l.b16 %v198
      %v929 = vunpack.c.l.b16 %v199
      %v930 = vunpack.c.l.b16 %v201
      %v931 = vunpack.c.l.b16 %v202
      %v932 = vunpack.c.l.b16 %v204
      %v933 = vunpack.c.l.b16 %v205
      %v934 = vunpack.c.l.b16 %v207
      %v935 = vunpack.c.l.b16 %v208
      %v936 = vunpack.c.l.b16 %v210
      %v937 = vunpack.c.l.b16 %v211
      %v938 = vunpack.c.l.b16 %v213
      %v939 = vunpack.c.l.b16 %v214
      %v940 = vunpack.c.l.b16 %v216
      %v941 = vunpack.c.l.b16 %v217
      %v942 = vunpack.c.l.b16 %v219
      %v943 = vunpack.c.l.b16 %v220
      %v944 = vpack.c.b16 %v913, %v912
      %v945 = vpack.c.b16 %v915, %v914
      %v946 = vpack.c.b16 %v917, %v916
      %v947 = vpack.c.b16 %v919, %v918
      %v948 = vpack.c.b16 %v921, %v920
      %v949 = vpack.c.b16 %v923, %v922
      %v950 = vpack.c.b16 %v925, %v924
      %v951 = vpack.c.b16 %v927, %v926
      %v952 = vpack.c.b16 %v929, %v928
      %v953 = vpack.c.b16 %v931, %v930
      %v954 = vpack.c.b16 %v933, %v932
      %v955 = vpack.c.b16 %v935, %v934
      %v956 = vpack.c.b16 %v937, %v936
      %v957 = vpack.c.b16 %v939, %v938
      %v958 = vpack.c.b16 %v941, %v940
      %v959 = vpack.c.b16 %v943, %v942
      %v961 = vsel %vm666, %v944, 0
      %v964 = vsel %vm666, %v945, 0
      %v967 = vsel %vm666, %v946, 0
      %v970 = vsel %vm666, %v947, 0
      %v973 = vsel %vm666, %v948, 0
      %v976 = vsel %vm666, %v949, 0
      %v979 = vsel %vm666, %v950, 0
      %v982 = vsel %vm666, %v951, 0
      %v985 = vsel %vm666, %v952, 0
      %v988 = vsel %vm666, %v953, 0
      %v991 = vsel %vm666, %v954, 0
      %v994 = vsel %vm666, %v955, 0
      %v997 = vsel %vm666, %v956, 0
      %v1000 = vsel %vm666, %v957, 0
      %v1003 = vsel %vm666, %v958, 0
      %v1006 = vsel %vm666, %v959, 0
      %v1009 = vsel %vm715, %v228, 0
      %1011 = vmatprep.subr.bf16.mxu0 0
      %1012 = vmatpush1.bf16.msra.mxu0 0
      %1013 = vmatprep.subr.bf16.mxu0 0
      %1014 = vmatpush1.bf16.msra.mxu0 0
      %1015 = vmatprep.subr.bf16.mxu0 0
      %1016 = vmatpush1.bf16.msra.mxu0 0
      %1017 = vmatprep.subr.bf16.mxu0 0
      %1018 = vmatpush1.bf16.msra.mxu0 0
      %1019 = vmatprep.subr.bf16.mxu0 0
      %1020 = vmatpush1.bf16.msra.mxu0 0
      %1021 = vmatprep.subr.bf16.mxu0 0
      %1022 = vmatpush1.bf16.msra.mxu0 0
      %1023 = vmatprep.subr.bf16.mxu0 0
      %1024 = vmatpush1.bf16.msra.mxu0 0
      %1025 = vmatprep.subr.bf16.mxu0 0
      %1026 = vmatpush1.bf16.msra.mxu0 %v1009
      %1027 = vmatprep.subr.bf16.mxu0 0
      %1028 = vmatpush2.bf16.msra.mxu0 0
      %1029 = vmatprep.subr.bf16.mxu0 0
      %1030 = vmatpush2.bf16.msra.mxu0 0
      %1031 = vmatprep.subr.bf16.mxu0 0
      %1032 = vmatpush2.bf16.msra.mxu0 0
      %1033 = vmatprep.subr.bf16.mxu0 0
      %1034 = vmatpush2.bf16.msra.mxu0 0
      %1035 = vmatprep.subr.bf16.mxu0 0
      %1036 = vmatpush2.bf16.msra.mxu0 0
      %1037 = vmatprep.subr.bf16.mxu0 0
      %1038 = vmatpush2.bf16.msra.mxu0 0
      %1039 = vmatprep.subr.bf16.mxu0 0
      %1040 = vmatpush2.bf16.msra.mxu0 0
      %1041 = vmatprep.subr.bf16.mxu0 0
      %1042 = vmatpush2.bf16.msra.mxu0 0
      %1043 = vmatprep.mubr.bf16.mxu0 0
      %1044 = vmatmul.mubr.bf16.gmra.mxu0 %v961
      %v1045 = vpop.f32.mrf.mxu0
      %v1046 = vadd.f32 %v754, %v1045
      %v1047 = vpop.f32.mrf.mxu0
      %v1048 = vpop.f32.mrf.mxu0
      %v1049 = vadd.f32 %v757, %v1048
      %v1050 = vpop.f32.mrf.mxu0
      %1051 = vmatprep.mubr.bf16.mxu0 0
      %1052 = vmatmul.mubr.bf16.gmra.mxu0 %v964
      %v1053 = vpop.f32.mrf.mxu0
      %v1054 = vadd.f32 %v762, %v1053
      %v1055 = vpop.f32.mrf.mxu0
      %v1056 = vpop.f32.mrf.mxu0
      %v1057 = vadd.f32 %v765, %v1056
      %v1058 = vpop.f32.mrf.mxu0
      %1059 = vmatprep.mubr.bf16.mxu0 0
      %1060 = vmatmul.mubr.bf16.gmra.mxu0 %v967
      %v1061 = vpop.f32.mrf.mxu0
      %v1062 = vadd.f32 %v770, %v1061
      %v1063 = vpop.f32.mrf.mxu0
      %v1064 = vpop.f32.mrf.mxu0
      %v1065 = vadd.f32 %v773, %v1064
      %v1066 = vpop.f32.mrf.mxu0
      %1067 = vmatprep.mubr.bf16.mxu0 0
      %1068 = vmatmul.mubr.bf16.gmra.mxu0 %v970
      %v1069 = vpop.f32.mrf.mxu0
      %v1070 = vadd.f32 %v778, %v1069
      %v1071 = vpop.f32.mrf.mxu0
      %v1072 = vpop.f32.mrf.mxu0
      %v1073 = vadd.f32 %v781, %v1072
      %v1074 = vpop.f32.mrf.mxu0
      %1075 = vmatprep.mubr.bf16.mxu0 0
      %1076 = vmatmul.mubr.bf16.gmra.mxu0 %v973
      %v1077 = vpop.f32.mrf.mxu0
      %v1078 = vadd.f32 %v786, %v1077
      %v1079 = vpop.f32.mrf.mxu0
      %v1080 = vpop.f32.mrf.mxu0
      %v1081 = vadd.f32 %v789, %v1080
      %v1082 = vpop.f32.mrf.mxu0
      %1083 = vmatprep.mubr.bf16.mxu0 0
      %1084 = vmatmul.mubr.bf16.gmra.mxu0 %v976
      %v1085 = vpop.f32.mrf.mxu0
      %v1086 = vadd.f32 %v794, %v1085
      %v1087 = vpop.f32.mrf.mxu0
      %v1088 = vpop.f32.mrf.mxu0
      %v1089 = vadd.f32 %v797, %v1088
      %v1090 = vpop.f32.mrf.mxu0
      %1091 = vmatprep.mubr.bf16.mxu0 0
      %1092 = vmatmul.mubr.bf16.gmra.mxu0 %v979
      %v1093 = vpop.f32.mrf.mxu0
      %v1094 = vadd.f32 %v802, %v1093
      %v1095 = vpop.f32.mrf.mxu0
      %v1096 = vpop.f32.mrf.mxu0
      %v1097 = vadd.f32 %v805, %v1096
      %v1098 = vpop.f32.mrf.mxu0
      %1099 = vmatprep.mubr.bf16.mxu0 0
      %1100 = vmatmul.mubr.bf16.gmra.mxu0 %v982
      %v1101 = vpop.f32.mrf.mxu0
      %v1102 = vadd.f32 %v810, %v1101
      %v1103 = vpop.f32.mrf.mxu0
      %v1104 = vpop.f32.mrf.mxu0
      %v1105 = vadd.f32 %v813, %v1104
      %v1106 = vpop.f32.mrf.mxu0
      %1107 = vmatprep.mubr.bf16.mxu0 0
      %1108 = vmatmul.mubr.bf16.gmra.mxu0 %v985
      %v1109 = vpop.f32.mrf.mxu0
      %v1110 = vadd.f32 %v818, %v1109
      %v1111 = vpop.f32.mrf.mxu0
      %v1112 = vpop.f32.mrf.mxu0
      %v1113 = vadd.f32 %v821, %v1112
      %v1114 = vpop.f32.mrf.mxu0
      %1115 = vmatprep.mubr.bf16.mxu0 0
      %1116 = vmatmul.mubr.bf16.gmra.mxu0 %v988
      %v1117 = vpop.f32.mrf.mxu0
      %v1118 = vadd.f32 %v826, %v1117
      %v1119 = vpop.f32.mrf.mxu0
      %v1120 = vpop.f32.mrf.mxu0
      %v1121 = vadd.f32 %v829, %v1120
      %v1122 = vpop.f32.mrf.mxu0
      %1123 = vmatprep.mubr.bf16.mxu0 0
      %1124 = vmatmul.mubr.bf16.gmra.mxu0 %v991
      %v1125 = vpop.f32.mrf.mxu0
      %v1126 = vadd.f32 %v834, %v1125
      %v1127 = vpop.f32.mrf.mxu0
      %v1128 = vpop.f32.mrf.mxu0
      %v1129 = vadd.f32 %v837, %v1128
      %v1130 = vpop.f32.mrf.mxu0
      %1131 = vmatprep.mubr.bf16.mxu0 0
      %1132 = vmatmul.mubr.bf16.gmra.mxu0 %v994
      %v1133 = vpop.f32.mrf.mxu0
      %v1134 = vadd.f32 %v842, %v1133
      %v1135 = vpop.f32.mrf.mxu0
      %v1136 = vpop.f32.mrf.mxu0
      %v1137 = vadd.f32 %v845, %v1136
      %v1138 = vpop.f32.mrf.mxu0
      %1139 = vmatprep.mubr.bf16.mxu0 0
      %1140 = vmatmul.mubr.bf16.gmra.mxu0 %v997
      %v1141 = vpop.f32.mrf.mxu0
      %v1142 = vadd.f32 %v850, %v1141
      %v1143 = vpop.f32.mrf.mxu0
      %v1144 = vpop.f32.mrf.mxu0
      %v1145 = vadd.f32 %v853, %v1144
      %v1146 = vpop.f32.mrf.mxu0
      %1147 = vmatprep.mubr.bf16.mxu0 0
      %1148 = vmatmul.mubr.bf16.gmra.mxu0 %v1000
      %v1149 = vpop.f32.mrf.mxu0
      %v1150 = vadd.f32 %v858, %v1149
      %v1151 = vpop.f32.mrf.mxu0
      %v1152 = vpop.f32.mrf.mxu0
      %v1153 = vadd.f32 %v861, %v1152
      %v1154 = vpop.f32.mrf.mxu0
      %1155 = vmatprep.mubr.bf16.mxu0 0
      %1156 = vmatmul.mubr.bf16.gmra.mxu0 %v1003
      %v1157 = vpop.f32.mrf.mxu0
      %v1158 = vadd.f32 %v866, %v1157
      %v1159 = vpop.f32.mrf.mxu0
      %v1160 = vpop.f32.mrf.mxu0
      %v1161 = vadd.f32 %v869, %v1160
      %v1162 = vpop.f32.mrf.mxu0
      %1163 = vmatprep.mubr.bf16.mxu0 0
      %1164 = vmatmul.mubr.bf16.gmra.mxu0 %v1006
      %v1165 = vpop.f32.mrf.mxu0
      %v1166 = vadd.f32 %v874, %v1165
      %v1167 = vpop.f32.mrf.mxu0
      %v1168 = vpop.f32.mrf.mxu0
      %v1169 = vadd.f32 %v877, %v1168
      %v1170 = vpop.f32.mrf.mxu0
      %1171 = vdwg.mxu0
      %vm1188 = vcmask 1042432
      %vm1189 = vcmask 1046532
      %vm1190 = vmor %vm1188, %vm1189
      %v1191 = vrot.slane %v174, 5
      %v1192 = vrot.slane %v1191, 4
      %v1193 = vrot.slane %v175, 5
      %v1194 = vsel %vm1190, %v1192, %v1193
      %v1195 = vrot.slane %v1193, 4
      %v1196 = vrot.slane %v176, 5
      %v1197 = vsel %vm1190, %v1195, %v1196
      %v1198 = vrot.slane %v177, 5
      %v1199 = vrot.slane %v1198, 4
      %v1200 = vrot.slane %v178, 5
      %v1201 = vsel %vm1190, %v1199, %v1200
      %v1202 = vrot.slane %v1200, 4
      %v1203 = vrot.slane %v179, 5
      %v1204 = vsel %vm1190, %v1202, %v1203
      %v1205 = vrot.slane %v180, 5
      %v1206 = vrot.slane %v1205, 4
      %v1207 = vrot.slane %v181, 5
      %v1208 = vsel %vm1190, %v1206, %v1207
      %v1209 = vrot.slane %v1207, 4
      %v1210 = vrot.slane %v182, 5
      %v1211 = vsel %vm1190, %v1209, %v1210
      %v1212 = vrot.slane %v183, 5
      %v1213 = vrot.slane %v1212, 4
      %v1214 = vrot.slane %v184, 5
      %v1215 = vsel %vm1190, %v1213, %v1214
      %v1216 = vrot.slane %v1214, 4
      %v1217 = vrot.slane %v185, 5
      %v1218 = vsel %vm1190, %v1216, %v1217
      %v1219 = vrot.slane %v186, 5
      %v1220 = vrot.slane %v1219, 4
      %v1221 = vrot.slane %v187, 5
      %v1222 = vsel %vm1190, %v1220, %v1221
      %v1223 = vrot.slane %v1221, 4
      %v1224 = vrot.slane %v188, 5
      %v1225 = vsel %vm1190, %v1223, %v1224
      %v1226 = vrot.slane %v189, 5
      %v1227 = vrot.slane %v1226, 4
      %v1228 = vrot.slane %v190, 5
      %v1229 = vsel %vm1190, %v1227, %v1228
      %v1230 = vrot.slane %v1228, 4
      %v1231 = vrot.slane %v191, 5
      %v1232 = vsel %vm1190, %v1230, %v1231
      %v1233 = vrot.slane %v192, 5
      %v1234 = vrot.slane %v1233, 4
      %v1235 = vrot.slane %v193, 5
      %v1236 = vsel %vm1190, %v1234, %v1235
      %v1237 = vrot.slane %v1235, 4
      %v1238 = vrot.slane %v194, 5
      %v1239 = vsel %vm1190, %v1237, %v1238
      %v1240 = vrot.slane %v195, 5
      %v1241 = vrot.slane %v1240, 4
      %v1242 = vrot.slane %v196, 5
      %v1243 = vsel %vm1190, %v1241, %v1242
      %v1244 = vrot.slane %v1242, 4
      %v1245 = vrot.slane %v197, 5
      %v1246 = vsel %vm1190, %v1244, %v1245
      %v1247 = vrot.slane %v198, 5
      %v1248 = vrot.slane %v1247, 4
      %v1249 = vrot.slane %v199, 5
      %v1250 = vsel %vm1190, %v1248, %v1249
      %v1251 = vrot.slane %v1249, 4
      %v1252 = vrot.slane %v200, 5
      %v1253 = vsel %vm1190, %v1251, %v1252
      %v1254 = vrot.slane %v201, 5
      %v1255 = vrot.slane %v1254, 4
      %v1256 = vrot.slane %v202, 5
      %v1257 = vsel %vm1190, %v1255, %v1256
      %v1258 = vrot.slane %v1256, 4
      %v1259 = vrot.slane %v203, 5
      %v1260 = vsel %vm1190, %v1258, %v1259
      %v1261 = vrot.slane %v204, 5
      %v1262 = vrot.slane %v1261, 4
      %v1263 = vrot.slane %v205, 5
      %v1264 = vsel %vm1190, %v1262, %v1263
      %v1265 = vrot.slane %v1263, 4
      %v1266 = vrot.slane %v206, 5
      %v1267 = vsel %vm1190, %v1265, %v1266
      %v1268 = vrot.slane %v207, 5
      %v1269 = vrot.slane %v1268, 4
      %v1270 = vrot.slane %v208, 5
      %v1271 = vsel %vm1190, %v1269, %v1270
      %v1272 = vrot.slane %v1270, 4
      %v1273 = vrot.slane %v209, 5
      %v1274 = vsel %vm1190, %v1272, %v1273
      %v1275 = vrot.slane %v210, 5
      %v1276 = vrot.slane %v1275, 4
      %v1277 = vrot.slane %v211, 5
      %v1278 = vsel %vm1190, %v1276, %v1277
      %v1279 = vrot.slane %v1277, 4
      %v1280 = vrot.slane %v212, 5
      %v1281 = vsel %vm1190, %v1279, %v1280
      %v1282 = vrot.slane %v213, 5
      %v1283 = vrot.slane %v1282, 4
      %v1284 = vrot.slane %v214, 5
      %v1285 = vsel %vm1190, %v1283, %v1284
      %v1286 = vrot.slane %v1284, 4
      %v1287 = vrot.slane %v215, 5
      %v1288 = vsel %vm1190, %v1286, %v1287
      %v1289 = vrot.slane %v216, 5
      %v1290 = vrot.slane %v1289, 4
      %v1291 = vrot.slane %v217, 5
      %v1292 = vsel %vm1190, %v1290, %v1291
      %v1293 = vrot.slane %v1291, 4
      %v1294 = vrot.slane %v218, 5
      %v1295 = vsel %vm1190, %v1293, %v1294
      %v1296 = vrot.slane %v219, 5
      %v1297 = vrot.slane %v1296, 4
      %v1298 = vrot.slane %v220, 5
      %v1299 = vsel %vm1190, %v1297, %v1298
      %v1300 = vrot.slane %v1298, 4
      %v1301 = vrot.slane %v221, 5
      %v1302 = vsel %vm1190, %v1300, %v1301
      %s1303 = scalar_lea.vmem %s1, 8
      %v1304 = vld [vmem:[%s1303] sm:$0xf]
      %v1305 = vunpack.c.l.b16 %v1194
      %v1306 = vunpack.c.l.b16 %v1197
      %v1307 = vunpack.c.l.b16 %v1201
      %v1308 = vunpack.c.l.b16 %v1204
      %v1309 = vunpack.c.l.b16 %v1208
      %v1310 = vunpack.c.l.b16 %v1211
      %v1311 = vunpack.c.l.b16 %v1215
      %v1312 = vunpack.c.l.b16 %v1218
      %v1313 = vunpack.c.l.b16 %v1222
      %v1314 = vunpack.c.l.b16 %v1225
      %v1315 = vunpack.c.l.b16 %v1229
      %v1316 = vunpack.c.l.b16 %v1232
      %v1317 = vunpack.c.l.b16 %v1236
      %v1318 = vunpack.c.l.b16 %v1239
      %v1319 = vunpack.c.l.b16 %v1243
      %v1320 = vunpack.c.l.b16 %v1246
      %v1321 = vunpack.c.l.b16 %v1250
      %v1322 = vunpack.c.l.b16 %v1253
      %v1323 = vunpack.c.l.b16 %v1257
      %v1324 = vunpack.c.l.b16 %v1260
      %v1325 = vunpack.c.l.b16 %v1264
      %v1326 = vunpack.c.l.b16 %v1267
      %v1327 = vunpack.c.l.b16 %v1271
      %v1328 = vunpack.c.l.b16 %v1274
      %v1329 = vunpack.c.l.b16 %v1278
      %v1330 = vunpack.c.l.b16 %v1281
      %v1331 = vunpack.c.l.b16 %v1285
      %v1332 = vunpack.c.l.b16 %v1288
      %v1333 = vunpack.c.l.b16 %v1292
      %v1334 = vunpack.c.l.b16 %v1295
      %v1335 = vunpack.c.l.b16 %v1299
      %v1336 = vunpack.c.l.b16 %v1302
      %v1337 = vpack.c.b16 %v1306, %v1305
      %v1338 = vpack.c.b16 %v1308, %v1307
      %v1339 = vpack.c.b16 %v1310, %v1309
      %v1340 = vpack.c.b16 %v1312, %v1311
      %v1341 = vpack.c.b16 %v1314, %v1313
      %v1342 = vpack.c.b16 %v1316, %v1315
      %v1343 = vpack.c.b16 %v1318, %v1317
      %v1344 = vpack.c.b16 %v1320, %v1319
      %v1345 = vpack.c.b16 %v1322, %v1321
      %v1346 = vpack.c.b16 %v1324, %v1323
      %v1347 = vpack.c.b16 %v1326, %v1325
      %v1348 = vpack.c.b16 %v1328, %v1327
      %v1349 = vpack.c.b16 %v1330, %v1329
      %v1350 = vpack.c.b16 %v1332, %v1331
      %v1351 = vpack.c.b16 %v1334, %v1333
      %v1352 = vpack.c.b16 %v1336, %v1335
      %v1354 = vsel %vm666, %v1337, 0
      %v1357 = vsel %vm666, %v1338, 0
      %v1360 = vsel %vm666, %v1339, 0
      %v1363 = vsel %vm666, %v1340, 0
      %v1366 = vsel %vm666, %v1341, 0
      %v1369 = vsel %vm666, %v1342, 0
      %v1372 = vsel %vm666, %v1343, 0
      %v1375 = vsel %vm666, %v1344, 0
      %v1378 = vsel %vm666, %v1345, 0
      %v1381 = vsel %vm666, %v1346, 0
      %v1384 = vsel %vm666, %v1347, 0
      %v1387 = vsel %vm666, %v1348, 0
      %v1390 = vsel %vm666, %v1349, 0
      %v1393 = vsel %vm666, %v1350, 0
      %v1396 = vsel %vm666, %v1351, 0
      %v1399 = vsel %vm666, %v1352, 0
      %v1402 = vsel %vm715, %v1304, 0
      %1404 = vmatprep.subr.bf16.mxu0 0
      %1405 = vmatpush1.bf16.msra.mxu0 0
      %1406 = vmatprep.subr.bf16.mxu0 0
      %1407 = vmatpush1.bf16.msra.mxu0 0
      %1408 = vmatprep.subr.bf16.mxu0 0
      %1409 = vmatpush1.bf16.msra.mxu0 0
      %1410 = vmatprep.subr.bf16.mxu0 0
      %1411 = vmatpush1.bf16.msra.mxu0 0
      %1412 = vmatprep.subr.bf16.mxu0 0
      %1413 = vmatpush1.bf16.msra.mxu0 0
      %1414 = vmatprep.subr.bf16.mxu0 0
      %1415 = vmatpush1.bf16.msra.mxu0 0
      %1416 = vmatprep.subr.bf16.mxu0 0
      %1417 = vmatpush1.bf16.msra.mxu0 0
      %1418 = vmatprep.subr.bf16.mxu0 0
      %1419 = vmatpush1.bf16.msra.mxu0 %v1402
      %1420 = vmatprep.subr.bf16.mxu0 0
      %1421 = vmatpush2.bf16.msra.mxu0 0
      %1422 = vmatprep.subr.bf16.mxu0 0
      %1423 = vmatpush2.bf16.msra.mxu0 0
      %1424 = vmatprep.subr.bf16.mxu0 0
      %1425 = vmatpush2.bf16.msra.mxu0 0
      %1426 = vmatprep.subr.bf16.mxu0 0
      %1427 = vmatpush2.bf16.msra.mxu0 0
      %1428 = vmatprep.subr.bf16.mxu0 0
      %1429 = vmatpush2.bf16.msra.mxu0 0
      %1430 = vmatprep.subr.bf16.mxu0 0
      %1431 = vmatpush2.bf16.msra.mxu0 0
      %1432 = vmatprep.subr.bf16.mxu0 0
      %1433 = vmatpush2.bf16.msra.mxu0 0
      %1434 = vmatprep.subr.bf16.mxu0 0
      %1435 = vmatpush2.bf16.msra.mxu0 0
      %1436 = vmatprep.mubr.bf16.mxu0 0
      %1437 = vmatmul.mubr.bf16.gmra.mxu0 %v1354
      %v1438 = vpop.f32.mrf.mxu0
      %v1439 = vadd.f32 0.0, %v1438
      %v1440 = vpop.f32.mrf.mxu0
      %v1441 = vpop.f32.mrf.mxu0
      %v1442 = vadd.f32 0.0, %v1441
      %v1443 = vpop.f32.mrf.mxu0
      %1444 = vmatprep.mubr.bf16.mxu0 0
      %1445 = vmatmul.mubr.bf16.gmra.mxu0 %v1357
      %v1446 = vpop.f32.mrf.mxu0
      %v1447 = vadd.f32 0.0, %v1446
      %v1448 = vpop.f32.mrf.mxu0
      %v1449 = vpop.f32.mrf.mxu0
      %v1450 = vadd.f32 0.0, %v1449
      %v1451 = vpop.f32.mrf.mxu0
      %1452 = vmatprep.mubr.bf16.mxu0 0
      %1453 = vmatmul.mubr.bf16.gmra.mxu0 %v1360
      %v1454 = vpop.f32.mrf.mxu0
      %v1455 = vadd.f32 0.0, %v1454
      %v1456 = vpop.f32.mrf.mxu0
      %v1457 = vpop.f32.mrf.mxu0
      %v1458 = vadd.f32 0.0, %v1457
      %v1459 = vpop.f32.mrf.mxu0
      %1460 = vmatprep.mubr.bf16.mxu0 0
      %1461 = vmatmul.mubr.bf16.gmra.mxu0 %v1363
      %v1462 = vpop.f32.mrf.mxu0
      %v1463 = vadd.f32 0.0, %v1462
      %v1464 = vpop.f32.mrf.mxu0
      %v1465 = vpop.f32.mrf.mxu0
      %v1466 = vadd.f32 0.0, %v1465
      %v1467 = vpop.f32.mrf.mxu0
      %1468 = vmatprep.mubr.bf16.mxu0 0
      %1469 = vmatmul.mubr.bf16.gmra.mxu0 %v1366
      %v1470 = vpop.f32.mrf.mxu0
      %v1471 = vadd.f32 0.0, %v1470
      %v1472 = vpop.f32.mrf.mxu0
      %v1473 = vpop.f32.mrf.mxu0
      %v1474 = vadd.f32 0.0, %v1473
      %v1475 = vpop.f32.mrf.mxu0
      %1476 = vmatprep.mubr.bf16.mxu0 0
      %1477 = vmatmul.mubr.bf16.gmra.mxu0 %v1369
      %v1478 = vpop.f32.mrf.mxu0
      %v1479 = vadd.f32 0.0, %v1478
      %v1480 = vpop.f32.mrf.mxu0
      %v1481 = vpop.f32.mrf.mxu0
      %v1482 = vadd.f32 0.0, %v1481
      %v1483 = vpop.f32.mrf.mxu0
      %1484 = vmatprep.mubr.bf16.mxu0 0
      %1485 = vmatmul.mubr.bf16.gmra.mxu0 %v1372
      %v1486 = vpop.f32.mrf.mxu0
      %v1487 = vadd.f32 0.0, %v1486
      %v1488 = vpop.f32.mrf.mxu0
      %v1489 = vpop.f32.mrf.mxu0
      %v1490 = vadd.f32 0.0, %v1489
      %v1491 = vpop.f32.mrf.mxu0
      %1492 = vmatprep.mubr.bf16.mxu0 0
      %1493 = vmatmul.mubr.bf16.gmra.mxu0 %v1375
      %v1494 = vpop.f32.mrf.mxu0
      %v1495 = vadd.f32 0.0, %v1494
      %v1496 = vpop.f32.mrf.mxu0
      %v1497 = vpop.f32.mrf.mxu0
      %v1498 = vadd.f32 0.0, %v1497
      %v1499 = vpop.f32.mrf.mxu0
      %1500 = vmatprep.mubr.bf16.mxu0 0
      %1501 = vmatmul.mubr.bf16.gmra.mxu0 %v1378
      %v1502 = vpop.f32.mrf.mxu0
      %v1503 = vadd.f32 0.0, %v1502
      %v1504 = vpop.f32.mrf.mxu0
      %v1505 = vpop.f32.mrf.mxu0
      %v1506 = vadd.f32 0.0, %v1505
      %v1507 = vpop.f32.mrf.mxu0
      %1508 = vmatprep.mubr.bf16.mxu0 0
      %1509 = vmatmul.mubr.bf16.gmra.mxu0 %v1381
      %v1510 = vpop.f32.mrf.mxu0
      %v1511 = vadd.f32 0.0, %v1510
      %v1512 = vpop.f32.mrf.mxu0
      %v1513 = vpop.f32.mrf.mxu0
      %v1514 = vadd.f32 0.0, %v1513
      %v1515 = vpop.f32.mrf.mxu0
      %1516 = vmatprep.mubr.bf16.mxu0 0
      %1517 = vmatmul.mubr.bf16.gmra.mxu0 %v1384
      %v1518 = vpop.f32.mrf.mxu0
      %v1519 = vadd.f32 0.0, %v1518
      %v1520 = vpop.f32.mrf.mxu0
      %v1521 = vpop.f32.mrf.mxu0
      %v1522 = vadd.f32 0.0, %v1521
      %v1523 = vpop.f32.mrf.mxu0
      %1524 = vmatprep.mubr.bf16.mxu0 0
      %1525 = vmatmul.mubr.bf16.gmra.mxu0 %v1387
      %v1526 = vpop.f32.mrf.mxu0
      %v1527 = vadd.f32 0.0, %v1526
      %v1528 = vpop.f32.mrf.mxu0
      %v1529 = vpop.f32.mrf.mxu0
      %v1530 = vadd.f32 0.0, %v1529
      %v1531 = vpop.f32.mrf.mxu0
      %1532 = vmatprep.mubr.bf16.mxu0 0
      %1533 = vmatmul.mubr.bf16.gmra.mxu0 %v1390
      %v1534 = vpop.f32.mrf.mxu0
      %v1535 = vadd.f32 0.0, %v1534
      %v1536 = vpop.f32.mrf.mxu0
      %v1537 = vpop.f32.mrf.mxu0
      %v1538 = vadd.f32 0.0, %v1537
      %v1539 = vpop.f32.mrf.mxu0
      %1540 = vmatprep.mubr.bf16.mxu0 0
      %1541 = vmatmul.mubr.bf16.gmra.mxu0 %v1393
      %v1542 = vpop.f32.mrf.mxu0
      %v1543 = vadd.f32 0.0, %v1542
      %v1544 = vpop.f32.mrf.mxu0
      %v1545 = vpop.f32.mrf.mxu0
      %v1546 = vadd.f32 0.0, %v1545
      %v1547 = vpop.f32.mrf.mxu0
      %1548 = vmatprep.mubr.bf16.mxu0 0
      %1549 = vmatmul.mubr.bf16.gmra.mxu0 %v1396
      %v1550 = vpop.f32.mrf.mxu0
      %v1551 = vadd.f32 0.0, %v1550
      %v1552 = vpop.f32.mrf.mxu0
      %v1553 = vpop.f32.mrf.mxu0
      %v1554 = vadd.f32 0.0, %v1553
      %v1555 = vpop.f32.mrf.mxu0
      %1556 = vmatprep.mubr.bf16.mxu0 0
      %1557 = vmatmul.mubr.bf16.gmra.mxu0 %v1399
      %v1558 = vpop.f32.mrf.mxu0
      %v1559 = vadd.f32 0.0, %v1558
      %v1560 = vpop.f32.mrf.mxu0
      %v1561 = vpop.f32.mrf.mxu0
      %v1562 = vadd.f32 0.0, %v1561
      %v1563 = vpop.f32.mrf.mxu0
      %1564 = vdwg.mxu0
      %v1565 = vadd.f32 %v1046, %v1439
      %v1566 = vadd.f32 %v1049, %v1442
      %v1567 = vadd.f32 %v1054, %v1447
      %v1568 = vadd.f32 %v1057, %v1450
      %v1569 = vadd.f32 %v1062, %v1455
      %v1570 = vadd.f32 %v1065, %v1458
      %v1571 = vadd.f32 %v1070, %v1463
      %v1572 = vadd.f32 %v1073, %v1466
      %v1573 = vadd.f32 %v1078, %v1471
      %v1574 = vadd.f32 %v1081, %v1474
      %v1575 = vadd.f32 %v1086, %v1479
      %v1576 = vadd.f32 %v1089, %v1482
      %v1577 = vadd.f32 %v1094, %v1487
      %v1578 = vadd.f32 %v1097, %v1490
      %v1579 = vadd.f32 %v1102, %v1495
      %v1580 = vadd.f32 %v1105, %v1498
      %v1581 = vadd.f32 %v1110, %v1503
      %v1582 = vadd.f32 %v1113, %v1506
      %v1583 = vadd.f32 %v1118, %v1511
      %v1584 = vadd.f32 %v1121, %v1514
      %v1585 = vadd.f32 %v1126, %v1519
      %v1586 = vadd.f32 %v1129, %v1522
      %v1587 = vadd.f32 %v1134, %v1527
      %v1588 = vadd.f32 %v1137, %v1530
      %v1589 = vadd.f32 %v1142, %v1535
      %v1590 = vadd.f32 %v1145, %v1538
      %v1591 = vadd.f32 %v1150, %v1543
      %v1592 = vadd.f32 %v1153, %v1546
      %v1593 = vadd.f32 %v1158, %v1551
      %v1594 = vadd.f32 %v1161, %v1554
      %v1595 = vadd.f32 %v1166, %v1559
      %v1596 = vadd.f32 %v1169, %v1562
      %s1597 = scalar_lea.vmem %s1, 12
      %v1598 = vld [vmem:[%s1597] sm:$0xf]
      %v1601 = vunpack.c.l.b16 %v222
      %v1602 = vunpack.c.l.b16 %v223
      %v1603 = vpack.c.b16 %v1602, %v1601
      %v1605 = vsel %vm666, %v1603, 0
      %v1608 = vsel %vm715, %v1598, 0
      %1610 = vmatprep.subr.bf16.mxu0 0
      %1611 = vmatpush1.bf16.msra.mxu0 0
      %1612 = vmatprep.subr.bf16.mxu0 0
      %1613 = vmatpush1.bf16.msra.mxu0 0
      %1614 = vmatprep.subr.bf16.mxu0 0
      %1615 = vmatpush1.bf16.msra.mxu0 0
      %1616 = vmatprep.subr.bf16.mxu0 0
      %1617 = vmatpush1.bf16.msra.mxu0 0
      %1618 = vmatprep.subr.bf16.mxu0 0
      %1619 = vmatpush1.bf16.msra.mxu0 0
      %1620 = vmatprep.subr.bf16.mxu0 0
      %1621 = vmatpush1.bf16.msra.mxu0 0
      %1622 = vmatprep.subr.bf16.mxu0 0
      %1623 = vmatpush1.bf16.msra.mxu0 0
      %1624 = vmatprep.subr.bf16.mxu0 0
      %1625 = vmatpush1.bf16.msra.mxu0 %v1608
      %1626 = vmatprep.subr.bf16.mxu0 0
      %1627 = vmatpush2.bf16.msra.mxu0 0
      %1628 = vmatprep.subr.bf16.mxu0 0
      %1629 = vmatpush2.bf16.msra.mxu0 0
      %1630 = vmatprep.subr.bf16.mxu0 0
      %1631 = vmatpush2.bf16.msra.mxu0 0
      %1632 = vmatprep.subr.bf16.mxu0 0
      %1633 = vmatpush2.bf16.msra.mxu0 0
      %1634 = vmatprep.subr.bf16.mxu0 0
      %1635 = vmatpush2.bf16.msra.mxu0 0
      %1636 = vmatprep.subr.bf16.mxu0 0
      %1637 = vmatpush2.bf16.msra.mxu0 0
      %1638 = vmatprep.subr.bf16.mxu0 0
      %1639 = vmatpush2.bf16.msra.mxu0 0
      %1640 = vmatprep.subr.bf16.mxu0 0
      %1641 = vmatpush2.bf16.msra.mxu0 0
      %1642 = vmatprep.mubr.bf16.mxu0 0
      %1643 = vmatmul.mubr.bf16.gmra.mxu0 %v964
      %v1644 = vpop.f32.mrf.mxu0
      %v1645 = vadd.f32 0.0, %v1644
      %v1646 = vpop.f32.mrf.mxu0
      %v1647 = vpop.f32.mrf.mxu0
      %v1648 = vadd.f32 0.0, %v1647
      %v1649 = vpop.f32.mrf.mxu0
      %1650 = vmatprep.mubr.bf16.mxu0 0
      %1651 = vmatmul.mubr.bf16.gmra.mxu0 %v967
      %v1652 = vpop.f32.mrf.mxu0
      %v1653 = vadd.f32 0.0, %v1652
      %v1654 = vpop.f32.mrf.mxu0
      %v1655 = vpop.f32.mrf.mxu0
      %v1656 = vadd.f32 0.0, %v1655
      %v1657 = vpop.f32.mrf.mxu0
      %1658 = vmatprep.mubr.bf16.mxu0 0
      %1659 = vmatmul.mubr.bf16.gmra.mxu0 %v970
      %v1660 = vpop.f32.mrf.mxu0
      %v1661 = vadd.f32 0.0, %v1660
      %v1662 = vpop.f32.mrf.mxu0
      %v1663 = vpop.f32.mrf.mxu0
      %v1664 = vadd.f32 0.0, %v1663
      %v1665 = vpop.f32.mrf.mxu0
      %1666 = vmatprep.mubr.bf16.mxu0 0
      %1667 = vmatmul.mubr.bf16.gmra.mxu0 %v973
      %v1668 = vpop.f32.mrf.mxu0
      %v1669 = vadd.f32 0.0, %v1668
      %v1670 = vpop.f32.mrf.mxu0
      %v1671 = vpop.f32.mrf.mxu0
      %v1672 = vadd.f32 0.0, %v1671
      %v1673 = vpop.f32.mrf.mxu0
      %1674 = vmatprep.mubr.bf16.mxu0 0
      %1675 = vmatmul.mubr.bf16.gmra.mxu0 %v976
      %v1676 = vpop.f32.mrf.mxu0
      %v1677 = vadd.f32 0.0, %v1676
      %v1678 = vpop.f32.mrf.mxu0
      %v1679 = vpop.f32.mrf.mxu0
      %v1680 = vadd.f32 0.0, %v1679
      %v1681 = vpop.f32.mrf.mxu0
      %1682 = vmatprep.mubr.bf16.mxu0 0
      %1683 = vmatmul.mubr.bf16.gmra.mxu0 %v979
      %v1684 = vpop.f32.mrf.mxu0
      %v1685 = vadd.f32 0.0, %v1684
      %v1686 = vpop.f32.mrf.mxu0
      %v1687 = vpop.f32.mrf.mxu0
      %v1688 = vadd.f32 0.0, %v1687
      %v1689 = vpop.f32.mrf.mxu0
      %1690 = vmatprep.mubr.bf16.mxu0 0
      %1691 = vmatmul.mubr.bf16.gmra.mxu0 %v982
      %v1692 = vpop.f32.mrf.mxu0
      %v1693 = vadd.f32 0.0, %v1692
      %v1694 = vpop.f32.mrf.mxu0
      %v1695 = vpop.f32.mrf.mxu0
      %v1696 = vadd.f32 0.0, %v1695
      %v1697 = vpop.f32.mrf.mxu0
      %1698 = vmatprep.mubr.bf16.mxu0 0
      %1699 = vmatmul.mubr.bf16.gmra.mxu0 %v985
      %v1700 = vpop.f32.mrf.mxu0
      %v1701 = vadd.f32 0.0, %v1700
      %v1702 = vpop.f32.mrf.mxu0
      %v1703 = vpop.f32.mrf.mxu0
      %v1704 = vadd.f32 0.0, %v1703
      %v1705 = vpop.f32.mrf.mxu0
      %1706 = vmatprep.mubr.bf16.mxu0 0
      %1707 = vmatmul.mubr.bf16.gmra.mxu0 %v988
      %v1708 = vpop.f32.mrf.mxu0
      %v1709 = vadd.f32 0.0, %v1708
      %v1710 = vpop.f32.mrf.mxu0
      %v1711 = vpop.f32.mrf.mxu0
      %v1712 = vadd.f32 0.0, %v1711
      %v1713 = vpop.f32.mrf.mxu0
      %1714 = vmatprep.mubr.bf16.mxu0 0
      %1715 = vmatmul.mubr.bf16.gmra.mxu0 %v991
      %v1716 = vpop.f32.mrf.mxu0
      %v1717 = vadd.f32 0.0, %v1716
      %v1718 = vpop.f32.mrf.mxu0
      %v1719 = vpop.f32.mrf.mxu0
      %v1720 = vadd.f32 0.0, %v1719
      %v1721 = vpop.f32.mrf.mxu0
      %1722 = vmatprep.mubr.bf16.mxu0 0
      %1723 = vmatmul.mubr.bf16.gmra.mxu0 %v994
      %v1724 = vpop.f32.mrf.mxu0
      %v1725 = vadd.f32 0.0, %v1724
      %v1726 = vpop.f32.mrf.mxu0
      %v1727 = vpop.f32.mrf.mxu0
      %v1728 = vadd.f32 0.0, %v1727
      %v1729 = vpop.f32.mrf.mxu0
      %1730 = vmatprep.mubr.bf16.mxu0 0
      %1731 = vmatmul.mubr.bf16.gmra.mxu0 %v997
      %v1732 = vpop.f32.mrf.mxu0
      %v1733 = vadd.f32 0.0, %v1732
      %v1734 = vpop.f32.mrf.mxu0
      %v1735 = vpop.f32.mrf.mxu0
      %v1736 = vadd.f32 0.0, %v1735
      %v1737 = vpop.f32.mrf.mxu0
      %1738 = vmatprep.mubr.bf16.mxu0 0
      %1739 = vmatmul.mubr.bf16.gmra.mxu0 %v1000
      %v1740 = vpop.f32.mrf.mxu0
      %v1741 = vadd.f32 0.0, %v1740
      %v1742 = vpop.f32.mrf.mxu0
      %v1743 = vpop.f32.mrf.mxu0
      %v1744 = vadd.f32 0.0, %v1743
      %v1745 = vpop.f32.mrf.mxu0
      %1746 = vmatprep.mubr.bf16.mxu0 0
      %1747 = vmatmul.mubr.bf16.gmra.mxu0 %v1003
      %v1748 = vpop.f32.mrf.mxu0
      %v1749 = vadd.f32 0.0, %v1748
      %v1750 = vpop.f32.mrf.mxu0
      %v1751 = vpop.f32.mrf.mxu0
      %v1752 = vadd.f32 0.0, %v1751
      %v1753 = vpop.f32.mrf.mxu0
      %1754 = vmatprep.mubr.bf16.mxu0 0
      %1755 = vmatmul.mubr.bf16.gmra.mxu0 %v1006
      %v1756 = vpop.f32.mrf.mxu0
      %v1757 = vadd.f32 0.0, %v1756
      %v1758 = vpop.f32.mrf.mxu0
      %v1759 = vpop.f32.mrf.mxu0
      %v1760 = vadd.f32 0.0, %v1759
      %v1761 = vpop.f32.mrf.mxu0
      %1762 = vmatprep.mubr.bf16.mxu0 0
      %1763 = vmatmul.mubr.bf16.gmra.mxu0 %v1605
      %v1764 = vpop.f32.mrf.mxu0
      %v1765 = vadd.f32 0.0, %v1764
      %v1766 = vpop.f32.mrf.mxu0
      %v1767 = vpop.f32.mrf.mxu0
      %v1768 = vadd.f32 0.0, %v1767
      %v1769 = vpop.f32.mrf.mxu0
      %1770 = vdwg.mxu0
      %v1771 = vadd.f32 %v1565, %v1645
      %v1772 = vadd.f32 %v1566, %v1648
      %v1773 = vadd.f32 %v1567, %v1653
      %v1774 = vadd.f32 %v1568, %v1656
      %v1775 = vadd.f32 %v1569, %v1661
      %v1776 = vadd.f32 %v1570, %v1664
      %v1777 = vadd.f32 %v1571, %v1669
      %v1778 = vadd.f32 %v1572, %v1672
      %v1779 = vadd.f32 %v1573, %v1677
      %v1780 = vadd.f32 %v1574, %v1680
      %v1781 = vadd.f32 %v1575, %v1685
      %v1782 = vadd.f32 %v1576, %v1688
      %v1783 = vadd.f32 %v1577, %v1693
      %v1784 = vadd.f32 %v1578, %v1696
      %v1785 = vadd.f32 %v1579, %v1701
      %v1786 = vadd.f32 %v1580, %v1704
      %v1787 = vadd.f32 %v1581, %v1709
      %v1788 = vadd.f32 %v1582, %v1712
      %v1789 = vadd.f32 %v1583, %v1717
      %v1790 = vadd.f32 %v1584, %v1720
      %v1791 = vadd.f32 %v1585, %v1725
      %v1792 = vadd.f32 %v1586, %v1728
      %v1793 = vadd.f32 %v1587, %v1733
      %v1794 = vadd.f32 %v1588, %v1736
      %v1795 = vadd.f32 %v1589, %v1741
      %v1796 = vadd.f32 %v1590, %v1744
      %v1797 = vadd.f32 %v1591, %v1749
      %v1798 = vadd.f32 %v1592, %v1752
      %v1799 = vadd.f32 %v1593, %v1757
      %v1800 = vadd.f32 %v1594, %v1760
      %v1801 = vadd.f32 %v1595, %v1765
      %v1802 = vadd.f32 %v1596, %v1768
      %v1804 = vshrl.u32 %v222, 16
      %v1806 = vrot.slane %v1804, 4
      %v1807 = vshll.u32 %v222, 16
      %v1809 = vrot.slane %v1807, 5
      %v1810 = vor.u32 %v1806, %v1809
      %v1811 = vrot.slane %v1810, 4
      %v1813 = vshll.u32 %v223, 16
      %v1815 = vrot.slane %v1813, 5
      %v1816 = vsel %vm231, %v1811, %v1815
      %v1817 = vshrl.u32 %v223, 16
      %v1819 = vrot.slane %v1817, 4
      %v1820 = vor.u32 %v1819, %v1815
      %v1821 = vrot.slane %v1820, 4
      %v1823 = vshll.u32 %v224, 16
      %v1825 = vrot.slane %v1823, 5
      %v1826 = vsel %vm231, %v1821, %v1825
      %s1827 = scalar_lea.vmem %s1, 16
      %v1828 = vld [vmem:[%s1827] sm:$0xf]
      %v1829 = vunpack.c.l.b16 %v1816
      %v1830 = vunpack.c.l.b16 %v1826
      %v1831 = vpack.c.b16 %v1830, %v1829
      %v1833 = vsel %vm666, %v1831, 0
      %v1836 = vsel %vm715, %v1828, 0
      %1838 = vmatprep.subr.bf16.mxu0 0
      %1839 = vmatpush1.bf16.msra.mxu0 0
      %1840 = vmatprep.subr.bf16.mxu0 0
      %1841 = vmatpush1.bf16.msra.mxu0 0
      %1842 = vmatprep.subr.bf16.mxu0 0
      %1843 = vmatpush1.bf16.msra.mxu0 0
      %1844 = vmatprep.subr.bf16.mxu0 0
      %1845 = vmatpush1.bf16.msra.mxu0 0
      %1846 = vmatprep.subr.bf16.mxu0 0
      %1847 = vmatpush1.bf16.msra.mxu0 0
      %1848 = vmatprep.subr.bf16.mxu0 0
      %1849 = vmatpush1.bf16.msra.mxu0 0
      %1850 = vmatprep.subr.bf16.mxu0 0
      %1851 = vmatpush1.bf16.msra.mxu0 0
      %1852 = vmatprep.subr.bf16.mxu0 0
      %1853 = vmatpush1.bf16.msra.mxu0 %v1836
      %1854 = vmatprep.subr.bf16.mxu0 0
      %1855 = vmatpush2.bf16.msra.mxu0 0
      %1856 = vmatprep.subr.bf16.mxu0 0
      %1857 = vmatpush2.bf16.msra.mxu0 0
      %1858 = vmatprep.subr.bf16.mxu0 0
      %1859 = vmatpush2.bf16.msra.mxu0 0
      %1860 = vmatprep.subr.bf16.mxu0 0
      %1861 = vmatpush2.bf16.msra.mxu0 0
      %1862 = vmatprep.subr.bf16.mxu0 0
      %1863 = vmatpush2.bf16.msra.mxu0 0
      %1864 = vmatprep.subr.bf16.mxu0 0
      %1865 = vmatpush2.bf16.msra.mxu0 0
      %1866 = vmatprep.subr.bf16.mxu0 0
      %1867 = vmatpush2.bf16.msra.mxu0 0
      %1868 = vmatprep.subr.bf16.mxu0 0
      %1869 = vmatpush2.bf16.msra.mxu0 0
      %1870 = vmatprep.mubr.bf16.mxu0 0
      %1871 = vmatmul.mubr.bf16.gmra.mxu0 %v671
      %v1872 = vpop.f32.mrf.mxu0
      %v1873 = vadd.f32 0.0, %v1872
      %v1874 = vpop.f32.mrf.mxu0
      %v1875 = vpop.f32.mrf.mxu0
      %v1876 = vadd.f32 0.0, %v1875
      %v1877 = vpop.f32.mrf.mxu0
      %1878 = vmatprep.mubr.bf16.mxu0 0
      %1879 = vmatmul.mubr.bf16.gmra.mxu0 %v674
      %v1880 = vpop.f32.mrf.mxu0
      %v1881 = vadd.f32 0.0, %v1880
      %v1882 = vpop.f32.mrf.mxu0
      %v1883 = vpop.f32.mrf.mxu0
      %v1884 = vadd.f32 0.0, %v1883
      %v1885 = vpop.f32.mrf.mxu0
      %1886 = vmatprep.mubr.bf16.mxu0 0
      %1887 = vmatmul.mubr.bf16.gmra.mxu0 %v677
      %v1888 = vpop.f32.mrf.mxu0
      %v1889 = vadd.f32 0.0, %v1888
      %v1890 = vpop.f32.mrf.mxu0
      %v1891 = vpop.f32.mrf.mxu0
      %v1892 = vadd.f32 0.0, %v1891
      %v1893 = vpop.f32.mrf.mxu0
      %1894 = vmatprep.mubr.bf16.mxu0 0
      %1895 = vmatmul.mubr.bf16.gmra.mxu0 %v680
      %v1896 = vpop.f32.mrf.mxu0
      %v1897 = vadd.f32 0.0, %v1896
      %v1898 = vpop.f32.mrf.mxu0
      %v1899 = vpop.f32.mrf.mxu0
      %v1900 = vadd.f32 0.0, %v1899
      %v1901 = vpop.f32.mrf.mxu0
      %1902 = vmatprep.mubr.bf16.mxu0 0
      %1903 = vmatmul.mubr.bf16.gmra.mxu0 %v683
      %v1904 = vpop.f32.mrf.mxu0
      %v1905 = vadd.f32 0.0, %v1904
      %v1906 = vpop.f32.mrf.mxu0
      %v1907 = vpop.f32.mrf.mxu0
      %v1908 = vadd.f32 0.0, %v1907
      %v1909 = vpop.f32.mrf.mxu0
      %1910 = vmatprep.mubr.bf16.mxu0 0
      %1911 = vmatmul.mubr.bf16.gmra.mxu0 %v686
      %v1912 = vpop.f32.mrf.mxu0
      %v1913 = vadd.f32 0.0, %v1912
      %v1914 = vpop.f32.mrf.mxu0
      %v1915 = vpop.f32.mrf.mxu0
      %v1916 = vadd.f32 0.0, %v1915
      %v1917 = vpop.f32.mrf.mxu0
      %1918 = vmatprep.mubr.bf16.mxu0 0
      %1919 = vmatmul.mubr.bf16.gmra.mxu0 %v689
      %v1920 = vpop.f32.mrf.mxu0
      %v1921 = vadd.f32 0.0, %v1920
      %v1922 = vpop.f32.mrf.mxu0
      %v1923 = vpop.f32.mrf.mxu0
      %v1924 = vadd.f32 0.0, %v1923
      %v1925 = vpop.f32.mrf.mxu0
      %1926 = vmatprep.mubr.bf16.mxu0 0
      %1927 = vmatmul.mubr.bf16.gmra.mxu0 %v692
      %v1928 = vpop.f32.mrf.mxu0
      %v1929 = vadd.f32 0.0, %v1928
      %v1930 = vpop.f32.mrf.mxu0
      %v1931 = vpop.f32.mrf.mxu0
      %v1932 = vadd.f32 0.0, %v1931
      %v1933 = vpop.f32.mrf.mxu0
      %1934 = vmatprep.mubr.bf16.mxu0 0
      %1935 = vmatmul.mubr.bf16.gmra.mxu0 %v695
      %v1936 = vpop.f32.mrf.mxu0
      %v1937 = vadd.f32 0.0, %v1936
      %v1938 = vpop.f32.mrf.mxu0
      %v1939 = vpop.f32.mrf.mxu0
      %v1940 = vadd.f32 0.0, %v1939
      %v1941 = vpop.f32.mrf.mxu0
      %1942 = vmatprep.mubr.bf16.mxu0 0
      %1943 = vmatmul.mubr.bf16.gmra.mxu0 %v698
      %v1944 = vpop.f32.mrf.mxu0
      %v1945 = vadd.f32 0.0, %v1944
      %v1946 = vpop.f32.mrf.mxu0
      %v1947 = vpop.f32.mrf.mxu0
      %v1948 = vadd.f32 0.0, %v1947
      %v1949 = vpop.f32.mrf.mxu0
      %1950 = vmatprep.mubr.bf16.mxu0 0
      %1951 = vmatmul.mubr.bf16.gmra.mxu0 %v701
      %v1952 = vpop.f32.mrf.mxu0
      %v1953 = vadd.f32 0.0, %v1952
      %v1954 = vpop.f32.mrf.mxu0
      %v1955 = vpop.f32.mrf.mxu0
      %v1956 = vadd.f32 0.0, %v1955
      %v1957 = vpop.f32.mrf.mxu0
      %1958 = vmatprep.mubr.bf16.mxu0 0
      %1959 = vmatmul.mubr.bf16.gmra.mxu0 %v704
      %v1960 = vpop.f32.mrf.mxu0
      %v1961 = vadd.f32 0.0, %v1960
      %v1962 = vpop.f32.mrf.mxu0
      %v1963 = vpop.f32.mrf.mxu0
      %v1964 = vadd.f32 0.0, %v1963
      %v1965 = vpop.f32.mrf.mxu0
      %1966 = vmatprep.mubr.bf16.mxu0 0
      %1967 = vmatmul.mubr.bf16.gmra.mxu0 %v707
      %v1968 = vpop.f32.mrf.mxu0
      %v1969 = vadd.f32 0.0, %v1968
      %v1970 = vpop.f32.mrf.mxu0
      %v1971 = vpop.f32.mrf.mxu0
      %v1972 = vadd.f32 0.0, %v1971
      %v1973 = vpop.f32.mrf.mxu0
      %1974 = vmatprep.mubr.bf16.mxu0 0
      %1975 = vmatmul.mubr.bf16.gmra.mxu0 %v710
      %v1976 = vpop.f32.mrf.mxu0
      %v1977 = vadd.f32 0.0, %v1976
      %v1978 = vpop.f32.mrf.mxu0
      %v1979 = vpop.f32.mrf.mxu0
      %v1980 = vadd.f32 0.0, %v1979
      %v1981 = vpop.f32.mrf.mxu0
      %1982 = vmatprep.mubr.bf16.mxu0 0
      %1983 = vmatmul.mubr.bf16.gmra.mxu0 %v713
      %v1984 = vpop.f32.mrf.mxu0
      %v1985 = vadd.f32 0.0, %v1984
      %v1986 = vpop.f32.mrf.mxu0
      %v1987 = vpop.f32.mrf.mxu0
      %v1988 = vadd.f32 0.0, %v1987
      %v1989 = vpop.f32.mrf.mxu0
      %1990 = vmatprep.mubr.bf16.mxu0 0
      %1991 = vmatmul.mubr.bf16.gmra.mxu0 %v1833
      %v1992 = vpop.f32.mrf.mxu0
      %v1993 = vadd.f32 0.0, %v1992
      %v1994 = vpop.f32.mrf.mxu0
      %v1995 = vpop.f32.mrf.mxu0
      %v1996 = vadd.f32 0.0, %v1995
      %v1997 = vpop.f32.mrf.mxu0
      %1998 = vdwg.mxu0
      %v1999 = vadd.f32 %v1771, %v1873
      %v2000 = vadd.f32 %v1772, %v1876
      %v2001 = vadd.f32 %v1773, %v1881
      %v2002 = vadd.f32 %v1774, %v1884
      %v2003 = vadd.f32 %v1775, %v1889
      %v2004 = vadd.f32 %v1776, %v1892
      %v2005 = vadd.f32 %v1777, %v1897
      %v2006 = vadd.f32 %v1778, %v1900
      %v2007 = vadd.f32 %v1779, %v1905
      %v2008 = vadd.f32 %v1780, %v1908
      %v2009 = vadd.f32 %v1781, %v1913
      %v2010 = vadd.f32 %v1782, %v1916
      %v2011 = vadd.f32 %v1783, %v1921
      %v2012 = vadd.f32 %v1784, %v1924
      %v2013 = vadd.f32 %v1785, %v1929
      %v2014 = vadd.f32 %v1786, %v1932
      %v2015 = vadd.f32 %v1787, %v1937
      %v2016 = vadd.f32 %v1788, %v1940
      %v2017 = vadd.f32 %v1789, %v1945
      %v2018 = vadd.f32 %v1790, %v1948
      %v2019 = vadd.f32 %v1791, %v1953
      %v2020 = vadd.f32 %v1792, %v1956
      %v2021 = vadd.f32 %v1793, %v1961
      %v2022 = vadd.f32 %v1794, %v1964
      %v2023 = vadd.f32 %v1795, %v1969
      %v2024 = vadd.f32 %v1796, %v1972
      %v2025 = vadd.f32 %v1797, %v1977
      %v2026 = vadd.f32 %v1798, %v1980
      %v2027 = vadd.f32 %v1799, %v1985
      %v2028 = vadd.f32 %v1800, %v1988
      %v2029 = vadd.f32 %v1801, %v1993
      %v2030 = vadd.f32 %v1802, %v1996
      %v2032 = vrot.slane %v222, 5
      %v2033 = vrot.slane %v2032, 4
      %v2034 = vrot.slane %v223, 5
      %v2035 = vsel %vm1190, %v2033, %v2034
      %v2036 = vrot.slane %v2034, 4
      %v2037 = vrot.slane %v224, 5
      %v2038 = vsel %vm1190, %v2036, %v2037
      %s2039 = scalar_lea.vmem %s1, 20
      %v2040 = vld [vmem:[%s2039] sm:$0xf]
      %v2041 = vunpack.c.l.b16 %v2035
      %v2042 = vunpack.c.l.b16 %v2038
      %v2043 = vpack.c.b16 %v2042, %v2041
      %v2045 = vsel %vm666, %v2043, 0
      %v2048 = vsel %vm715, %v2040, 0
      %2050 = vmatprep.subr.bf16.mxu0 0
      %2051 = vmatpush1.bf16.msra.mxu0 0
      %2052 = vmatprep.subr.bf16.mxu0 0
      %2053 = vmatpush1.bf16.msra.mxu0 0
      %2054 = vmatprep.subr.bf16.mxu0 0
      %2055 = vmatpush1.bf16.msra.mxu0 0
      %2056 = vmatprep.subr.bf16.mxu0 0
      %2057 = vmatpush1.bf16.msra.mxu0 0
      %2058 = vmatprep.subr.bf16.mxu0 0
      %2059 = vmatpush1.bf16.msra.mxu0 0
      %2060 = vmatprep.subr.bf16.mxu0 0
      %2061 = vmatpush1.bf16.msra.mxu0 0
      %2062 = vmatprep.subr.bf16.mxu0 0
      %2063 = vmatpush1.bf16.msra.mxu0 0
      %2064 = vmatprep.subr.bf16.mxu0 0
      %2065 = vmatpush1.bf16.msra.mxu0 %v2048
      %2066 = vmatprep.subr.bf16.mxu0 0
      %2067 = vmatpush2.bf16.msra.mxu0 0
      %2068 = vmatprep.subr.bf16.mxu0 0
      %2069 = vmatpush2.bf16.msra.mxu0 0
      %2070 = vmatprep.subr.bf16.mxu0 0
      %2071 = vmatpush2.bf16.msra.mxu0 0
      %2072 = vmatprep.subr.bf16.mxu0 0
      %2073 = vmatpush2.bf16.msra.mxu0 0
      %2074 = vmatprep.subr.bf16.mxu0 0
      %2075 = vmatpush2.bf16.msra.mxu0 0
      %2076 = vmatprep.subr.bf16.mxu0 0
      %2077 = vmatpush2.bf16.msra.mxu0 0
      %2078 = vmatprep.subr.bf16.mxu0 0
      %2079 = vmatpush2.bf16.msra.mxu0 0
      %2080 = vmatprep.subr.bf16.mxu0 0
      %2081 = vmatpush2.bf16.msra.mxu0 0
      %2082 = vmatprep.mubr.bf16.mxu0 0
      %2083 = vmatmul.mubr.bf16.gmra.mxu0 %v1357
      %v2084 = vpop.f32.mrf.mxu0
      %v2085 = vadd.f32 0.0, %v2084
      %v2086 = vpop.f32.mrf.mxu0
      %v2087 = vpop.f32.mrf.mxu0
      %v2088 = vadd.f32 0.0, %v2087
      %v2089 = vpop.f32.mrf.mxu0
      %2090 = vmatprep.mubr.bf16.mxu0 0
      %2091 = vmatmul.mubr.bf16.gmra.mxu0 %v1360
      %v2092 = vpop.f32.mrf.mxu0
      %v2093 = vadd.f32 0.0, %v2092
      %v2094 = vpop.f32.mrf.mxu0
      %v2095 = vpop.f32.mrf.mxu0
      %v2096 = vadd.f32 0.0, %v2095
      %v2097 = vpop.f32.mrf.mxu0
      %2098 = vmatprep.mubr.bf16.mxu0 0
      %2099 = vmatmul.mubr.bf16.gmra.mxu0 %v1363
      %v2100 = vpop.f32.mrf.mxu0
      %v2101 = vadd.f32 0.0, %v2100
      %v2102 = vpop.f32.mrf.mxu0
      %v2103 = vpop.f32.mrf.mxu0
      %v2104 = vadd.f32 0.0, %v2103
      %v2105 = vpop.f32.mrf.mxu0
      %2106 = vmatprep.mubr.bf16.mxu0 0
      %2107 = vmatmul.mubr.bf16.gmra.mxu0 %v1366
      %v2108 = vpop.f32.mrf.mxu0
      %v2109 = vadd.f32 0.0, %v2108
      %v2110 = vpop.f32.mrf.mxu0
      %v2111 = vpop.f32.mrf.mxu0
      %v2112 = vadd.f32 0.0, %v2111
      %v2113 = vpop.f32.mrf.mxu0
      %2114 = vmatprep.mubr.bf16.mxu0 0
      %2115 = vmatmul.mubr.bf16.gmra.mxu0 %v1369
      %v2116 = vpop.f32.mrf.mxu0
      %v2117 = vadd.f32 0.0, %v2116
      %v2118 = vpop.f32.mrf.mxu0
      %v2119 = vpop.f32.mrf.mxu0
      %v2120 = vadd.f32 0.0, %v2119
      %v2121 = vpop.f32.mrf.mxu0
      %2122 = vmatprep.mubr.bf16.mxu0 0
      %2123 = vmatmul.mubr.bf16.gmra.mxu0 %v1372
      %v2124 = vpop.f32.mrf.mxu0
      %v2125 = vadd.f32 0.0, %v2124
      %v2126 = vpop.f32.mrf.mxu0
      %v2127 = vpop.f32.mrf.mxu0
      %v2128 = vadd.f32 0.0, %v2127
      %v2129 = vpop.f32.mrf.mxu0
      %2130 = vmatprep.mubr.bf16.mxu0 0
      %2131 = vmatmul.mubr.bf16.gmra.mxu0 %v1375
      %v2132 = vpop.f32.mrf.mxu0
      %v2133 = vadd.f32 0.0, %v2132
      %v2134 = vpop.f32.mrf.mxu0
      %v2135 = vpop.f32.mrf.mxu0
      %v2136 = vadd.f32 0.0, %v2135
      %v2137 = vpop.f32.mrf.mxu0
      %2138 = vmatprep.mubr.bf16.mxu0 0
      %2139 = vmatmul.mubr.bf16.gmra.mxu0 %v1378
      %v2140 = vpop.f32.mrf.mxu0
      %v2141 = vadd.f32 0.0, %v2140
      %v2142 = vpop.f32.mrf.mxu0
      %v2143 = vpop.f32.mrf.mxu0
      %v2144 = vadd.f32 0.0, %v2143
      %v2145 = vpop.f32.mrf.mxu0
      %2146 = vmatprep.mubr.bf16.mxu0 0
      %2147 = vmatmul.mubr.bf16.gmra.mxu0 %v1381
      %v2148 = vpop.f32.mrf.mxu0
      %v2149 = vadd.f32 0.0, %v2148
      %v2150 = vpop.f32.mrf.mxu0
      %v2151 = vpop.f32.mrf.mxu0
      %v2152 = vadd.f32 0.0, %v2151
      %v2153 = vpop.f32.mrf.mxu0
      %2154 = vmatprep.mubr.bf16.mxu0 0
      %2155 = vmatmul.mubr.bf16.gmra.mxu0 %v1384
      %v2156 = vpop.f32.mrf.mxu0
      %v2157 = vadd.f32 0.0, %v2156
      %v2158 = vpop.f32.mrf.mxu0
      %v2159 = vpop.f32.mrf.mxu0
      %v2160 = vadd.f32 0.0, %v2159
      %v2161 = vpop.f32.mrf.mxu0
      %2162 = vmatprep.mubr.bf16.mxu0 0
      %2163 = vmatmul.mubr.bf16.gmra.mxu0 %v1387
      %v2164 = vpop.f32.mrf.mxu0
      %v2165 = vadd.f32 0.0, %v2164
      %v2166 = vpop.f32.mrf.mxu0
      %v2167 = vpop.f32.mrf.mxu0
      %v2168 = vadd.f32 0.0, %v2167
      %v2169 = vpop.f32.mrf.mxu0
      %2170 = vmatprep.mubr.bf16.mxu0 0
      %2171 = vmatmul.mubr.bf16.gmra.mxu0 %v1390
      %v2172 = vpop.f32.mrf.mxu0
      %v2173 = vadd.f32 0.0, %v2172
      %v2174 = vpop.f32.mrf.mxu0
      %v2175 = vpop.f32.mrf.mxu0
      %v2176 = vadd.f32 0.0, %v2175
      %v2177 = vpop.f32.mrf.mxu0
      %2178 = vmatprep.mubr.bf16.mxu0 0
      %2179 = vmatmul.mubr.bf16.gmra.mxu0 %v1393
      %v2180 = vpop.f32.mrf.mxu0
      %v2181 = vadd.f32 0.0, %v2180
      %v2182 = vpop.f32.mrf.mxu0
      %v2183 = vpop.f32.mrf.mxu0
      %v2184 = vadd.f32 0.0, %v2183
      %v2185 = vpop.f32.mrf.mxu0
      %2186 = vmatprep.mubr.bf16.mxu0 0
      %2187 = vmatmul.mubr.bf16.gmra.mxu0 %v1396
      %v2188 = vpop.f32.mrf.mxu0
      %v2189 = vadd.f32 0.0, %v2188
      %v2190 = vpop.f32.mrf.mxu0
      %v2191 = vpop.f32.mrf.mxu0
      %v2192 = vadd.f32 0.0, %v2191
      %v2193 = vpop.f32.mrf.mxu0
      %2194 = vmatprep.mubr.bf16.mxu0 0
      %2195 = vmatmul.mubr.bf16.gmra.mxu0 %v1399
      %v2196 = vpop.f32.mrf.mxu0
      %v2197 = vadd.f32 0.0, %v2196
      %v2198 = vpop.f32.mrf.mxu0
      %v2199 = vpop.f32.mrf.mxu0
      %v2200 = vadd.f32 0.0, %v2199
      %v2201 = vpop.f32.mrf.mxu0
      %2202 = vmatprep.mubr.bf16.mxu0 0
      %2203 = vmatmul.mubr.bf16.gmra.mxu0 %v2045
      %v2204 = vpop.f32.mrf.mxu0
      %v2205 = vadd.f32 0.0, %v2204
      %v2206 = vpop.f32.mrf.mxu0
      %v2207 = vpop.f32.mrf.mxu0
      %v2208 = vadd.f32 0.0, %v2207
      %v2209 = vpop.f32.mrf.mxu0
      %2210 = vdwg.mxu0
      %v2211 = vadd.f32 %v1999, %v2085
      %v2212 = vadd.f32 %v2000, %v2088
      %v2213 = vadd.f32 %v2001, %v2093
      %v2214 = vadd.f32 %v2002, %v2096
      %v2215 = vadd.f32 %v2003, %v2101
      %v2216 = vadd.f32 %v2004, %v2104
      %v2217 = vadd.f32 %v2005, %v2109
      %v2218 = vadd.f32 %v2006, %v2112
      %v2219 = vadd.f32 %v2007, %v2117
      %v2220 = vadd.f32 %v2008, %v2120
      %v2221 = vadd.f32 %v2009, %v2125
      %v2222 = vadd.f32 %v2010, %v2128
      %v2223 = vadd.f32 %v2011, %v2133
      %v2224 = vadd.f32 %v2012, %v2136
      %v2225 = vadd.f32 %v2013, %v2141
      %v2226 = vadd.f32 %v2014, %v2144
      %v2227 = vadd.f32 %v2015, %v2149
      %v2228 = vadd.f32 %v2016, %v2152
      %v2229 = vadd.f32 %v2017, %v2157
      %v2230 = vadd.f32 %v2018, %v2160
      %v2231 = vadd.f32 %v2019, %v2165
      %v2232 = vadd.f32 %v2020, %v2168
      %v2233 = vadd.f32 %v2021, %v2173
      %v2234 = vadd.f32 %v2022, %v2176
      %v2235 = vadd.f32 %v2023, %v2181
      %v2236 = vadd.f32 %v2024, %v2184
      %v2237 = vadd.f32 %v2025, %v2189
      %v2238 = vadd.f32 %v2026, %v2192
      %v2239 = vadd.f32 %v2027, %v2197
      %v2240 = vadd.f32 %v2028, %v2200
      %v2241 = vadd.f32 %v2029, %v2205
      %v2242 = vadd.f32 %v2030, %v2208
      %s2243 = scalar_lea.vmem %s1, 24
      %v2244 = vld [vmem:[%s2243] sm:$0xf]
      %v2247 = vunpack.c.l.b16 %v225
      %v2248 = vunpack.c.l.b16 %v226
      %v2249 = vpack.c.b16 %v2248, %v2247
      %v2251 = vsel %vm666, %v2249, 0
      %v2254 = vsel %vm715, %v2244, 0
      %2256 = vmatprep.subr.bf16.mxu0 0
      %2257 = vmatpush1.bf16.msra.mxu0 0
      %2258 = vmatprep.subr.bf16.mxu0 0
      %2259 = vmatpush1.bf16.msra.mxu0 0
      %2260 = vmatprep.subr.bf16.mxu0 0
      %2261 = vmatpush1.bf16.msra.mxu0 0
      %2262 = vmatprep.subr.bf16.mxu0 0
      %2263 = vmatpush1.bf16.msra.mxu0 0
      %2264 = vmatprep.subr.bf16.mxu0 0
      %2265 = vmatpush1.bf16.msra.mxu0 0
      %2266 = vmatprep.subr.bf16.mxu0 0
      %2267 = vmatpush1.bf16.msra.mxu0 0
      %2268 = vmatprep.subr.bf16.mxu0 0
      %2269 = vmatpush1.bf16.msra.mxu0 0
      %2270 = vmatprep.subr.bf16.mxu0 0
      %2271 = vmatpush1.bf16.msra.mxu0 %v2254
      %2272 = vmatprep.subr.bf16.mxu0 0
      %2273 = vmatpush2.bf16.msra.mxu0 0
      %2274 = vmatprep.subr.bf16.mxu0 0
      %2275 = vmatpush2.bf16.msra.mxu0 0
      %2276 = vmatprep.subr.bf16.mxu0 0
      %2277 = vmatpush2.bf16.msra.mxu0 0
      %2278 = vmatprep.subr.bf16.mxu0 0
      %2279 = vmatpush2.bf16.msra.mxu0 0
      %2280 = vmatprep.subr.bf16.mxu0 0
      %2281 = vmatpush2.bf16.msra.mxu0 0
      %2282 = vmatprep.subr.bf16.mxu0 0
      %2283 = vmatpush2.bf16.msra.mxu0 0
      %2284 = vmatprep.subr.bf16.mxu0 0
      %2285 = vmatpush2.bf16.msra.mxu0 0
      %2286 = vmatprep.subr.bf16.mxu0 0
      %2287 = vmatpush2.bf16.msra.mxu0 0
      %2288 = vmatprep.mubr.bf16.mxu0 0
      %2289 = vmatmul.mubr.bf16.gmra.mxu0 %v967
      %v2290 = vpop.f32.mrf.mxu0
      %v2291 = vadd.f32 0.0, %v2290
      %v2292 = vpop.f32.mrf.mxu0
      %v2293 = vpop.f32.mrf.mxu0
      %v2294 = vadd.f32 0.0, %v2293
      %v2295 = vpop.f32.mrf.mxu0
      %2296 = vmatprep.mubr.bf16.mxu0 0
      %2297 = vmatmul.mubr.bf16.gmra.mxu0 %v970
      %v2298 = vpop.f32.mrf.mxu0
      %v2299 = vadd.f32 0.0, %v2298
      %v2300 = vpop.f32.mrf.mxu0
      %v2301 = vpop.f32.mrf.mxu0
      %v2302 = vadd.f32 0.0, %v2301
      %v2303 = vpop.f32.mrf.mxu0
      %2304 = vmatprep.mubr.bf16.mxu0 0
      %2305 = vmatmul.mubr.bf16.gmra.mxu0 %v973
      %v2306 = vpop.f32.mrf.mxu0
      %v2307 = vadd.f32 0.0, %v2306
      %v2308 = vpop.f32.mrf.mxu0
      %v2309 = vpop.f32.mrf.mxu0
      %v2310 = vadd.f32 0.0, %v2309
      %v2311 = vpop.f32.mrf.mxu0
      %2312 = vmatprep.mubr.bf16.mxu0 0
      %2313 = vmatmul.mubr.bf16.gmra.mxu0 %v976
      %v2314 = vpop.f32.mrf.mxu0
      %v2315 = vadd.f32 0.0, %v2314
      %v2316 = vpop.f32.mrf.mxu0
      %v2317 = vpop.f32.mrf.mxu0
      %v2318 = vadd.f32 0.0, %v2317
      %v2319 = vpop.f32.mrf.mxu0
      %2320 = vmatprep.mubr.bf16.mxu0 0
      %2321 = vmatmul.mubr.bf16.gmra.mxu0 %v979
      %v2322 = vpop.f32.mrf.mxu0
      %v2323 = vadd.f32 0.0, %v2322
      %v2324 = vpop.f32.mrf.mxu0
      %v2325 = vpop.f32.mrf.mxu0
      %v2326 = vadd.f32 0.0, %v2325
      %v2327 = vpop.f32.mrf.mxu0
      %2328 = vmatprep.mubr.bf16.mxu0 0
      %2329 = vmatmul.mubr.bf16.gmra.mxu0 %v982
      %v2330 = vpop.f32.mrf.mxu0
      %v2331 = vadd.f32 0.0, %v2330
      %v2332 = vpop.f32.mrf.mxu0
      %v2333 = vpop.f32.mrf.mxu0
      %v2334 = vadd.f32 0.0, %v2333
      %v2335 = vpop.f32.mrf.mxu0
      %2336 = vmatprep.mubr.bf16.mxu0 0
      %2337 = vmatmul.mubr.bf16.gmra.mxu0 %v985
      %v2338 = vpop.f32.mrf.mxu0
      %v2339 = vadd.f32 0.0, %v2338
      %v2340 = vpop.f32.mrf.mxu0
      %v2341 = vpop.f32.mrf.mxu0
      %v2342 = vadd.f32 0.0, %v2341
      %v2343 = vpop.f32.mrf.mxu0
      %2344 = vmatprep.mubr.bf16.mxu0 0
      %2345 = vmatmul.mubr.bf16.gmra.mxu0 %v988
      %v2346 = vpop.f32.mrf.mxu0
      %v2347 = vadd.f32 0.0, %v2346
      %v2348 = vpop.f32.mrf.mxu0
      %v2349 = vpop.f32.mrf.mxu0
      %v2350 = vadd.f32 0.0, %v2349
      %v2351 = vpop.f32.mrf.mxu0
      %2352 = vmatprep.mubr.bf16.mxu0 0
      %2353 = vmatmul.mubr.bf16.gmra.mxu0 %v991
      %v2354 = vpop.f32.mrf.mxu0
      %v2355 = vadd.f32 0.0, %v2354
      %v2356 = vpop.f32.mrf.mxu0
      %v2357 = vpop.f32.mrf.mxu0
      %v2358 = vadd.f32 0.0, %v2357
      %v2359 = vpop.f32.mrf.mxu0
      %2360 = vmatprep.mubr.bf16.mxu0 0
      %2361 = vmatmul.mubr.bf16.gmra.mxu0 %v994
      %v2362 = vpop.f32.mrf.mxu0
      %v2363 = vadd.f32 0.0, %v2362
      %v2364 = vpop.f32.mrf.mxu0
      %v2365 = vpop.f32.mrf.mxu0
      %v2366 = vadd.f32 0.0, %v2365
      %v2367 = vpop.f32.mrf.mxu0
      %2368 = vmatprep.mubr.bf16.mxu0 0
      %2369 = vmatmul.mubr.bf16.gmra.mxu0 %v997
      %v2370 = vpop.f32.mrf.mxu0
      %v2371 = vadd.f32 0.0, %v2370
      %v2372 = vpop.f32.mrf.mxu0
      %v2373 = vpop.f32.mrf.mxu0
      %v2374 = vadd.f32 0.0, %v2373
      %v2375 = vpop.f32.mrf.mxu0
      %2376 = vmatprep.mubr.bf16.mxu0 0
      %2377 = vmatmul.mubr.bf16.gmra.mxu0 %v1000
      %v2378 = vpop.f32.mrf.mxu0
      %v2379 = vadd.f32 0.0, %v2378
      %v2380 = vpop.f32.mrf.mxu0
      %v2381 = vpop.f32.mrf.mxu0
      %v2382 = vadd.f32 0.0, %v2381
      %v2383 = vpop.f32.mrf.mxu0
      %2384 = vmatprep.mubr.bf16.mxu0 0
      %2385 = vmatmul.mubr.bf16.gmra.mxu0 %v1003
      %v2386 = vpop.f32.mrf.mxu0
      %v2387 = vadd.f32 0.0, %v2386
      %v2388 = vpop.f32.mrf.mxu0
      %v2389 = vpop.f32.mrf.mxu0
      %v2390 = vadd.f32 0.0, %v2389
      %v2391 = vpop.f32.mrf.mxu0
      %2392 = vmatprep.mubr.bf16.mxu0 0
      %2393 = vmatmul.mubr.bf16.gmra.mxu0 %v1006
      %v2394 = vpop.f32.mrf.mxu0
      %v2395 = vadd.f32 0.0, %v2394
      %v2396 = vpop.f32.mrf.mxu0
      %v2397 = vpop.f32.mrf.mxu0
      %v2398 = vadd.f32 0.0, %v2397
      %v2399 = vpop.f32.mrf.mxu0
      %2400 = vmatprep.mubr.bf16.mxu0 0
      %2401 = vmatmul.mubr.bf16.gmra.mxu0 %v1605
      %v2402 = vpop.f32.mrf.mxu0
      %v2403 = vadd.f32 0.0, %v2402
      %v2404 = vpop.f32.mrf.mxu0
      %v2405 = vpop.f32.mrf.mxu0
      %v2406 = vadd.f32 0.0, %v2405
      %v2407 = vpop.f32.mrf.mxu0
      %2408 = vmatprep.mubr.bf16.mxu0 0
      %2409 = vmatmul.mubr.bf16.gmra.mxu0 %v2251
      %v2410 = vpop.f32.mrf.mxu0
      %v2411 = vadd.f32 0.0, %v2410
      %v2412 = vpop.f32.mrf.mxu0
      %v2413 = vpop.f32.mrf.mxu0
      %v2414 = vadd.f32 0.0, %v2413
      %v2415 = vpop.f32.mrf.mxu0
      %2416 = vdwg.mxu0
      %v2417 = vadd.f32 %v2211, %v2291
      %v2418 = vadd.f32 %v2212, %v2294
      %v2419 = vadd.f32 %v2213, %v2299
      %v2420 = vadd.f32 %v2214, %v2302
      %v2421 = vadd.f32 %v2215, %v2307
      %v2422 = vadd.f32 %v2216, %v2310
      %v2423 = vadd.f32 %v2217, %v2315
      %v2424 = vadd.f32 %v2218, %v2318
      %v2425 = vadd.f32 %v2219, %v2323
      %v2426 = vadd.f32 %v2220, %v2326
      %v2427 = vadd.f32 %v2221, %v2331
      %v2428 = vadd.f32 %v2222, %v2334
      %v2429 = vadd.f32 %v2223, %v2339
      %v2430 = vadd.f32 %v2224, %v2342
      %v2431 = vadd.f32 %v2225, %v2347
      %v2432 = vadd.f32 %v2226, %v2350
      %v2433 = vadd.f32 %v2227, %v2355
      %v2434 = vadd.f32 %v2228, %v2358
      %v2435 = vadd.f32 %v2229, %v2363
      %v2436 = vadd.f32 %v2230, %v2366
      %v2437 = vadd.f32 %v2231, %v2371
      %v2438 = vadd.f32 %v2232, %v2374
      %v2439 = vadd.f32 %v2233, %v2379
      %v2440 = vadd.f32 %v2234, %v2382
      %v2441 = vadd.f32 %v2235, %v2387
      %v2442 = vadd.f32 %v2236, %v2390
      %v2443 = vadd.f32 %v2237, %v2395
      %v2444 = vadd.f32 %v2238, %v2398
      %v2445 = vadd.f32 %v2239, %v2403
      %v2446 = vadd.f32 %v2240, %v2406
      %v2447 = vadd.f32 %v2241, %v2411
      %v2448 = vadd.f32 %v2242, %v2414
      %v2450 = vshrl.u32 %v225, 16
      %v2452 = vrot.slane %v2450, 4
      %v2453 = vshll.u32 %v225, 16
      %v2455 = vrot.slane %v2453, 5
      %v2456 = vor.u32 %v2452, %v2455
      %v2457 = vrot.slane %v2456, 4
      %v2459 = vshll.u32 %v226, 16
      %v2461 = vrot.slane %v2459, 5
      %v2462 = vsel %vm231, %v2457, %v2461
      %v2463 = vshrl.u32 %v226, 16
      %v2465 = vrot.slane %v2463, 4
      %v2466 = vor.u32 %v2465, %v2461
      %v2467 = vrot.slane %v2466, 4
      %v2469 = vshll.u32 %v227, 16
      %v2471 = vrot.slane %v2469, 5
      %v2472 = vsel %vm231, %v2467, %v2471
      %s2473 = scalar_lea.vmem %s1, 28
      %v2474 = vld [vmem:[%s2473] sm:$0xf]
      %v2475 = vunpack.c.l.b16 %v2462
      %v2476 = vunpack.c.l.b16 %v2472
      %v2477 = vpack.c.b16 %v2476, %v2475
      %v2479 = vsel %vm666, %v2477, 0
      %v2482 = vsel %vm715, %v2474, 0
      %2484 = vmatprep.subr.bf16.mxu0 0
      %2485 = vmatpush1.bf16.msra.mxu0 0
      %2486 = vmatprep.subr.bf16.mxu0 0
      %2487 = vmatpush1.bf16.msra.mxu0 0
      %2488 = vmatprep.subr.bf16.mxu0 0
      %2489 = vmatpush1.bf16.msra.mxu0 0
      %2490 = vmatprep.subr.bf16.mxu0 0
      %2491 = vmatpush1.bf16.msra.mxu0 0
      %2492 = vmatprep.subr.bf16.mxu0 0
      %2493 = vmatpush1.bf16.msra.mxu0 0
      %2494 = vmatprep.subr.bf16.mxu0 0
      %2495 = vmatpush1.bf16.msra.mxu0 0
      %2496 = vmatprep.subr.bf16.mxu0 0
      %2497 = vmatpush1.bf16.msra.mxu0 0
      %2498 = vmatprep.subr.bf16.mxu0 0
      %2499 = vmatpush1.bf16.msra.mxu0 %v2482
      %2500 = vmatprep.subr.bf16.mxu0 0
      %2501 = vmatpush2.bf16.msra.mxu0 0
      %2502 = vmatprep.subr.bf16.mxu0 0
      %2503 = vmatpush2.bf16.msra.mxu0 0
      %2504 = vmatprep.subr.bf16.mxu0 0
      %2505 = vmatpush2.bf16.msra.mxu0 0
      %2506 = vmatprep.subr.bf16.mxu0 0
      %2507 = vmatpush2.bf16.msra.mxu0 0
      %2508 = vmatprep.subr.bf16.mxu0 0
      %2509 = vmatpush2.bf16.msra.mxu0 0
      %2510 = vmatprep.subr.bf16.mxu0 0
      %2511 = vmatpush2.bf16.msra.mxu0 0
      %2512 = vmatprep.subr.bf16.mxu0 0
      %2513 = vmatpush2.bf16.msra.mxu0 0
      %2514 = vmatprep.subr.bf16.mxu0 0
      %2515 = vmatpush2.bf16.msra.mxu0 0
      %2516 = vmatprep.mubr.bf16.mxu0 0
      %2517 = vmatmul.mubr.bf16.gmra.mxu0 %v674
      %v2518 = vpop.f32.mrf.mxu0
      %v2519 = vadd.f32 0.0, %v2518
      %v2520 = vpop.f32.mrf.mxu0
      %v2521 = vpop.f32.mrf.mxu0
      %v2522 = vadd.f32 0.0, %v2521
      %v2523 = vpop.f32.mrf.mxu0
      %2524 = vmatprep.mubr.bf16.mxu0 0
      %2525 = vmatmul.mubr.bf16.gmra.mxu0 %v677
      %v2526 = vpop.f32.mrf.mxu0
      %v2527 = vadd.f32 0.0, %v2526
      %v2528 = vpop.f32.mrf.mxu0
      %v2529 = vpop.f32.mrf.mxu0
      %v2530 = vadd.f32 0.0, %v2529
      %v2531 = vpop.f32.mrf.mxu0
      %2532 = vmatprep.mubr.bf16.mxu0 0
      %2533 = vmatmul.mubr.bf16.gmra.mxu0 %v680
      %v2534 = vpop.f32.mrf.mxu0
      %v2535 = vadd.f32 0.0, %v2534
      %v2536 = vpop.f32.mrf.mxu0
      %v2537 = vpop.f32.mrf.mxu0
      %v2538 = vadd.f32 0.0, %v2537
      %v2539 = vpop.f32.mrf.mxu0
      %2540 = vmatprep.mubr.bf16.mxu0 0
      %2541 = vmatmul.mubr.bf16.gmra.mxu0 %v683
      %v2542 = vpop.f32.mrf.mxu0
      %v2543 = vadd.f32 0.0, %v2542
      %v2544 = vpop.f32.mrf.mxu0
      %v2545 = vpop.f32.mrf.mxu0
      %v2546 = vadd.f32 0.0, %v2545
      %v2547 = vpop.f32.mrf.mxu0
      %2548 = vmatprep.mubr.bf16.mxu0 0
      %2549 = vmatmul.mubr.bf16.gmra.mxu0 %v686
      %v2550 = vpop.f32.mrf.mxu0
      %v2551 = vadd.f32 0.0, %v2550
      %v2552 = vpop.f32.mrf.mxu0
      %v2553 = vpop.f32.mrf.mxu0
      %v2554 = vadd.f32 0.0, %v2553
      %v2555 = vpop.f32.mrf.mxu0
      %2556 = vmatprep.mubr.bf16.mxu0 0
      %2557 = vmatmul.mubr.bf16.gmra.mxu0 %v689
      %v2558 = vpop.f32.mrf.mxu0
      %v2559 = vadd.f32 0.0, %v2558
      %v2560 = vpop.f32.mrf.mxu0
      %v2561 = vpop.f32.mrf.mxu0
      %v2562 = vadd.f32 0.0, %v2561
      %v2563 = vpop.f32.mrf.mxu0
      %2564 = vmatprep.mubr.bf16.mxu0 0
      %2565 = vmatmul.mubr.bf16.gmra.mxu0 %v692
      %v2566 = vpop.f32.mrf.mxu0
      %v2567 = vadd.f32 0.0, %v2566
      %v2568 = vpop.f32.mrf.mxu0
      %v2569 = vpop.f32.mrf.mxu0
      %v2570 = vadd.f32 0.0, %v2569
      %v2571 = vpop.f32.mrf.mxu0
      %2572 = vmatprep.mubr.bf16.mxu0 0
      %2573 = vmatmul.mubr.bf16.gmra.mxu0 %v695
      %v2574 = vpop.f32.mrf.mxu0
      %v2575 = vadd.f32 0.0, %v2574
      %v2576 = vpop.f32.mrf.mxu0
      %v2577 = vpop.f32.mrf.mxu0
      %v2578 = vadd.f32 0.0, %v2577
      %v2579 = vpop.f32.mrf.mxu0
      %2580 = vmatprep.mubr.bf16.mxu0 0
      %2581 = vmatmul.mubr.bf16.gmra.mxu0 %v698
      %v2582 = vpop.f32.mrf.mxu0
      %v2583 = vadd.f32 0.0, %v2582
      %v2584 = vpop.f32.mrf.mxu0
      %v2585 = vpop.f32.mrf.mxu0
      %v2586 = vadd.f32 0.0, %v2585
      %v2587 = vpop.f32.mrf.mxu0
      %2588 = vmatprep.mubr.bf16.mxu0 0
      %2589 = vmatmul.mubr.bf16.gmra.mxu0 %v701
      %v2590 = vpop.f32.mrf.mxu0
      %v2591 = vadd.f32 0.0, %v2590
      %v2592 = vpop.f32.mrf.mxu0
      %v2593 = vpop.f32.mrf.mxu0
      %v2594 = vadd.f32 0.0, %v2593
      %v2595 = vpop.f32.mrf.mxu0
      %2596 = vmatprep.mubr.bf16.mxu0 0
      %2597 = vmatmul.mubr.bf16.gmra.mxu0 %v704
      %v2598 = vpop.f32.mrf.mxu0
      %v2599 = vadd.f32 0.0, %v2598
      %v2600 = vpop.f32.mrf.mxu0
      %v2601 = vpop.f32.mrf.mxu0
      %v2602 = vadd.f32 0.0, %v2601
      %v2603 = vpop.f32.mrf.mxu0
      %2604 = vmatprep.mubr.bf16.mxu0 0
      %2605 = vmatmul.mubr.bf16.gmra.mxu0 %v707
      %v2606 = vpop.f32.mrf.mxu0
      %v2607 = vadd.f32 0.0, %v2606
      %v2608 = vpop.f32.mrf.mxu0
      %v2609 = vpop.f32.mrf.mxu0
      %v2610 = vadd.f32 0.0, %v2609
      %v2611 = vpop.f32.mrf.mxu0
      %2612 = vmatprep.mubr.bf16.mxu0 0
      %2613 = vmatmul.mubr.bf16.gmra.mxu0 %v710
      %v2614 = vpop.f32.mrf.mxu0
      %v2615 = vadd.f32 0.0, %v2614
      %v2616 = vpop.f32.mrf.mxu0
      %v2617 = vpop.f32.mrf.mxu0
      %v2618 = vadd.f32 0.0, %v2617
      %v2619 = vpop.f32.mrf.mxu0
      %2620 = vmatprep.mubr.bf16.mxu0 0
      %2621 = vmatmul.mubr.bf16.gmra.mxu0 %v713
      %v2622 = vpop.f32.mrf.mxu0
      %v2623 = vadd.f32 0.0, %v2622
      %v2624 = vpop.f32.mrf.mxu0
      %v2625 = vpop.f32.mrf.mxu0
      %v2626 = vadd.f32 0.0, %v2625
      %v2627 = vpop.f32.mrf.mxu0
      %2628 = vmatprep.mubr.bf16.mxu0 0
      %2629 = vmatmul.mubr.bf16.gmra.mxu0 %v1833
      %v2630 = vpop.f32.mrf.mxu0
      %v2631 = vadd.f32 0.0, %v2630
      %v2632 = vpop.f32.mrf.mxu0
      %v2633 = vpop.f32.mrf.mxu0
      %v2634 = vadd.f32 0.0, %v2633
      %v2635 = vpop.f32.mrf.mxu0
      %2636 = vmatprep.mubr.bf16.mxu0 0
      %2637 = vmatmul.mubr.bf16.gmra.mxu0 %v2479
      %v2638 = vpop.f32.mrf.mxu0
      %v2639 = vadd.f32 0.0, %v2638
      %v2640 = vpop.f32.mrf.mxu0
      %v2641 = vpop.f32.mrf.mxu0
      %v2642 = vadd.f32 0.0, %v2641
      %v2643 = vpop.f32.mrf.mxu0
      %2644 = vdwg.mxu0
      %v2645 = vadd.f32 %v2417, %v2519
      %v2646 = vadd.f32 %v2418, %v2522
      %v2647 = vadd.f32 %v2419, %v2527
      %v2648 = vadd.f32 %v2420, %v2530
      %v2649 = vadd.f32 %v2421, %v2535
      %v2650 = vadd.f32 %v2422, %v2538
      %v2651 = vadd.f32 %v2423, %v2543
      %v2652 = vadd.f32 %v2424, %v2546
      %v2653 = vadd.f32 %v2425, %v2551
      %v2654 = vadd.f32 %v2426, %v2554
      %v2655 = vadd.f32 %v2427, %v2559
      %v2656 = vadd.f32 %v2428, %v2562
      %v2657 = vadd.f32 %v2429, %v2567
      %v2658 = vadd.f32 %v2430, %v2570
      %v2659 = vadd.f32 %v2431, %v2575
      %v2660 = vadd.f32 %v2432, %v2578
      %v2661 = vadd.f32 %v2433, %v2583
      %v2662 = vadd.f32 %v2434, %v2586
      %v2663 = vadd.f32 %v2435, %v2591
      %v2664 = vadd.f32 %v2436, %v2594
      %v2665 = vadd.f32 %v2437, %v2599
      %v2666 = vadd.f32 %v2438, %v2602
      %v2667 = vadd.f32 %v2439, %v2607
      %v2668 = vadd.f32 %v2440, %v2610
      %v2669 = vadd.f32 %v2441, %v2615
      %v2670 = vadd.f32 %v2442, %v2618
      %v2671 = vadd.f32 %v2443, %v2623
      %v2672 = vadd.f32 %v2444, %v2626
      %v2673 = vadd.f32 %v2445, %v2631
      %v2674 = vadd.f32 %v2446, %v2634
      %v2675 = vadd.f32 %v2447, %v2639
      %v2676 = vadd.f32 %v2448, %v2642
      %v2678 = vrot.slane %v225, 5
      %v2679 = vrot.slane %v2678, 4
      %v2680 = vrot.slane %v226, 5
      %v2681 = vsel %vm1190, %v2679, %v2680
      %v2682 = vrot.slane %v2680, 4
      %v2683 = vrot.slane %v227, 5
      %v2684 = vsel %vm1190, %v2682, %v2683
      %s2685 = scalar_lea.vmem %s1, 32
      %v2686 = vld [vmem:[%s2685] sm:$0xf]
      %v2687 = vunpack.c.l.b16 %v2681
      %v2688 = vunpack.c.l.b16 %v2684
      %v2689 = vpack.c.b16 %v2688, %v2687
      %v2691 = vsel %vm666, %v2689, 0
      %v2694 = vsel %vm715, %v2686, 0
      %2696 = vmatprep.subr.bf16.mxu0 0
      %2697 = vmatpush1.bf16.msra.mxu0 0
      %2698 = vmatprep.subr.bf16.mxu0 0
      %2699 = vmatpush1.bf16.msra.mxu0 0
      %2700 = vmatprep.subr.bf16.mxu0 0
      %2701 = vmatpush1.bf16.msra.mxu0 0
      %2702 = vmatprep.subr.bf16.mxu0 0
      %2703 = vmatpush1.bf16.msra.mxu0 0
      %2704 = vmatprep.subr.bf16.mxu0 0
      %2705 = vmatpush1.bf16.msra.mxu0 0
      %2706 = vmatprep.subr.bf16.mxu0 0
      %2707 = vmatpush1.bf16.msra.mxu0 0
      %2708 = vmatprep.subr.bf16.mxu0 0
      %2709 = vmatpush1.bf16.msra.mxu0 0
      %2710 = vmatprep.subr.bf16.mxu0 0
      %2711 = vmatpush1.bf16.msra.mxu0 %v2694
      %2712 = vmatprep.subr.bf16.mxu0 0
      %2713 = vmatpush2.bf16.msra.mxu0 0
      %2714 = vmatprep.subr.bf16.mxu0 0
      %2715 = vmatpush2.bf16.msra.mxu0 0
      %2716 = vmatprep.subr.bf16.mxu0 0
      %2717 = vmatpush2.bf16.msra.mxu0 0
      %2718 = vmatprep.subr.bf16.mxu0 0
      %2719 = vmatpush2.bf16.msra.mxu0 0
      %2720 = vmatprep.subr.bf16.mxu0 0
      %2721 = vmatpush2.bf16.msra.mxu0 0
      %2722 = vmatprep.subr.bf16.mxu0 0
      %2723 = vmatpush2.bf16.msra.mxu0 0
      %2724 = vmatprep.subr.bf16.mxu0 0
      %2725 = vmatpush2.bf16.msra.mxu0 0
      %2726 = vmatprep.subr.bf16.mxu0 0
      %2727 = vmatpush2.bf16.msra.mxu0 0
      %2728 = vmatprep.mubr.bf16.mxu0 0
      %2729 = vmatmul.mubr.bf16.gmra.mxu0 %v1360
      %v2730 = vpop.f32.mrf.mxu0
      %v2731 = vadd.f32 0.0, %v2730
      %v2732 = vpop.f32.mrf.mxu0
      %v2733 = vpop.f32.mrf.mxu0
      %v2734 = vadd.f32 0.0, %v2733
      %v2735 = vpop.f32.mrf.mxu0
      %2736 = vmatprep.mubr.bf16.mxu0 0
      %2737 = vmatmul.mubr.bf16.gmra.mxu0 %v1363
      %v2738 = vpop.f32.mrf.mxu0
      %v2739 = vadd.f32 0.0, %v2738
      %v2740 = vpop.f32.mrf.mxu0
      %v2741 = vpop.f32.mrf.mxu0
      %v2742 = vadd.f32 0.0, %v2741
      %v2743 = vpop.f32.mrf.mxu0
      %2744 = vmatprep.mubr.bf16.mxu0 0
      %2745 = vmatmul.mubr.bf16.gmra.mxu0 %v1366
      %v2746 = vpop.f32.mrf.mxu0
      %v2747 = vadd.f32 0.0, %v2746
      %v2748 = vpop.f32.mrf.mxu0
      %v2749 = vpop.f32.mrf.mxu0
      %v2750 = vadd.f32 0.0, %v2749
      %v2751 = vpop.f32.mrf.mxu0
      %2752 = vmatprep.mubr.bf16.mxu0 0
      %2753 = vmatmul.mubr.bf16.gmra.mxu0 %v1369
      %v2754 = vpop.f32.mrf.mxu0
      %v2755 = vadd.f32 0.0, %v2754
      %v2756 = vpop.f32.mrf.mxu0
      %v2757 = vpop.f32.mrf.mxu0
      %v2758 = vadd.f32 0.0, %v2757
      %v2759 = vpop.f32.mrf.mxu0
      %2760 = vmatprep.mubr.bf16.mxu0 0
      %2761 = vmatmul.mubr.bf16.gmra.mxu0 %v1372
      %v2762 = vpop.f32.mrf.mxu0
      %v2763 = vadd.f32 0.0, %v2762
      %v2764 = vpop.f32.mrf.mxu0
      %v2765 = vpop.f32.mrf.mxu0
      %v2766 = vadd.f32 0.0, %v2765
      %v2767 = vpop.f32.mrf.mxu0
      %2768 = vmatprep.mubr.bf16.mxu0 0
      %2769 = vmatmul.mubr.bf16.gmra.mxu0 %v1375
      %v2770 = vpop.f32.mrf.mxu0
      %v2771 = vadd.f32 0.0, %v2770
      %v2772 = vpop.f32.mrf.mxu0
      %v2773 = vpop.f32.mrf.mxu0
      %v2774 = vadd.f32 0.0, %v2773
      %v2775 = vpop.f32.mrf.mxu0
      %2776 = vmatprep.mubr.bf16.mxu0 0
      %2777 = vmatmul.mubr.bf16.gmra.mxu0 %v1378
      %v2778 = vpop.f32.mrf.mxu0
      %v2779 = vadd.f32 0.0, %v2778
      %v2780 = vpop.f32.mrf.mxu0
      %v2781 = vpop.f32.mrf.mxu0
      %v2782 = vadd.f32 0.0, %v2781
      %v2783 = vpop.f32.mrf.mxu0
      %2784 = vmatprep.mubr.bf16.mxu0 0
      %2785 = vmatmul.mubr.bf16.gmra.mxu0 %v1381
      %v2786 = vpop.f32.mrf.mxu0
      %v2787 = vadd.f32 0.0, %v2786
      %v2788 = vpop.f32.mrf.mxu0
      %v2789 = vpop.f32.mrf.mxu0
      %v2790 = vadd.f32 0.0, %v2789
      %v2791 = vpop.f32.mrf.mxu0
      %2792 = vmatprep.mubr.bf16.mxu0 0
      %2793 = vmatmul.mubr.bf16.gmra.mxu0 %v1384
      %v2794 = vpop.f32.mrf.mxu0
      %v2795 = vadd.f32 0.0, %v2794
      %v2796 = vpop.f32.mrf.mxu0
      %v2797 = vpop.f32.mrf.mxu0
      %v2798 = vadd.f32 0.0, %v2797
      %v2799 = vpop.f32.mrf.mxu0
      %2800 = vmatprep.mubr.bf16.mxu0 0
      %2801 = vmatmul.mubr.bf16.gmra.mxu0 %v1387
      %v2802 = vpop.f32.mrf.mxu0
      %v2803 = vadd.f32 0.0, %v2802
      %v2804 = vpop.f32.mrf.mxu0
      %v2805 = vpop.f32.mrf.mxu0
      %v2806 = vadd.f32 0.0, %v2805
      %v2807 = vpop.f32.mrf.mxu0
      %2808 = vmatprep.mubr.bf16.mxu0 0
      %2809 = vmatmul.mubr.bf16.gmra.mxu0 %v1390
      %v2810 = vpop.f32.mrf.mxu0
      %v2811 = vadd.f32 0.0, %v2810
      %v2812 = vpop.f32.mrf.mxu0
      %v2813 = vpop.f32.mrf.mxu0
      %v2814 = vadd.f32 0.0, %v2813
      %v2815 = vpop.f32.mrf.mxu0
      %2816 = vmatprep.mubr.bf16.mxu0 0
      %2817 = vmatmul.mubr.bf16.gmra.mxu0 %v1393
      %v2818 = vpop.f32.mrf.mxu0
      %v2819 = vadd.f32 0.0, %v2818
      %v2820 = vpop.f32.mrf.mxu0
      %v2821 = vpop.f32.mrf.mxu0
      %v2822 = vadd.f32 0.0, %v2821
      %v2823 = vpop.f32.mrf.mxu0
      %2824 = vmatprep.mubr.bf16.mxu0 0
      %2825 = vmatmul.mubr.bf16.gmra.mxu0 %v1396
      %v2826 = vpop.f32.mrf.mxu0
      %v2827 = vadd.f32 0.0, %v2826
      %v2828 = vpop.f32.mrf.mxu0
      %v2829 = vpop.f32.mrf.mxu0
      %v2830 = vadd.f32 0.0, %v2829
      %v2831 = vpop.f32.mrf.mxu0
      %2832 = vmatprep.mubr.bf16.mxu0 0
      %2833 = vmatmul.mubr.bf16.gmra.mxu0 %v1399
      %v2834 = vpop.f32.mrf.mxu0
      %v2835 = vadd.f32 0.0, %v2834
      %v2836 = vpop.f32.mrf.mxu0
      %v2837 = vpop.f32.mrf.mxu0
      %v2838 = vadd.f32 0.0, %v2837
      %v2839 = vpop.f32.mrf.mxu0
      %2840 = vmatprep.mubr.bf16.mxu0 0
      %2841 = vmatmul.mubr.bf16.gmra.mxu0 %v2045
      %v2842 = vpop.f32.mrf.mxu0
      %v2843 = vadd.f32 0.0, %v2842
      %v2844 = vpop.f32.mrf.mxu0
      %v2845 = vpop.f32.mrf.mxu0
      %v2846 = vadd.f32 0.0, %v2845
      %v2847 = vpop.f32.mrf.mxu0
      %2848 = vmatprep.mubr.bf16.mxu0 0
      %2849 = vmatmul.mubr.bf16.gmra.mxu0 %v2691
      %v2850 = vpop.f32.mrf.mxu0
      %v2851 = vadd.f32 0.0, %v2850
      %v2852 = vpop.f32.mrf.mxu0
      %v2853 = vpop.f32.mrf.mxu0
      %v2854 = vadd.f32 0.0, %v2853
      %v2855 = vpop.f32.mrf.mxu0
      %2856 = vdwg.mxu0
      %v2857 = vadd.f32 %v2645, %v2731
      %v2858 = vadd.f32 %v2646, %v2734
      %v2859 = vadd.f32 %v2647, %v2739
      %v2860 = vadd.f32 %v2648, %v2742
      %v2861 = vadd.f32 %v2649, %v2747
      %v2862 = vadd.f32 %v2650, %v2750
      %v2863 = vadd.f32 %v2651, %v2755
      %v2864 = vadd.f32 %v2652, %v2758
      %v2865 = vadd.f32 %v2653, %v2763
      %v2866 = vadd.f32 %v2654, %v2766
      %v2867 = vadd.f32 %v2655, %v2771
      %v2868 = vadd.f32 %v2656, %v2774
      %v2869 = vadd.f32 %v2657, %v2779
      %v2870 = vadd.f32 %v2658, %v2782
      %v2871 = vadd.f32 %v2659, %v2787
      %v2872 = vadd.f32 %v2660, %v2790
      %v2873 = vadd.f32 %v2661, %v2795
      %v2874 = vadd.f32 %v2662, %v2798
      %v2875 = vadd.f32 %v2663, %v2803
      %v2876 = vadd.f32 %v2664, %v2806
      %v2877 = vadd.f32 %v2665, %v2811
      %v2878 = vadd.f32 %v2666, %v2814
      %v2879 = vadd.f32 %v2667, %v2819
      %v2880 = vadd.f32 %v2668, %v2822
      %v2881 = vadd.f32 %v2669, %v2827
      %v2882 = vadd.f32 %v2670, %v2830
      %v2883 = vadd.f32 %v2671, %v2835
      %v2884 = vadd.f32 %v2672, %v2838
      %v2885 = vadd.f32 %v2673, %v2843
      %v2886 = vadd.f32 %v2674, %v2846
      %v2887 = vadd.f32 %v2675, %v2851
      %v2888 = vadd.f32 %v2676, %v2854
      %v2889 = vpack.c.bf16 %v2858, %v2857
      %v2890 = vpack.c.bf16 %v2860, %v2859
      %v2891 = vpack.c.bf16 %v2862, %v2861
      %v2892 = vpack.c.bf16 %v2864, %v2863
      %v2893 = vpack.c.bf16 %v2866, %v2865
      %v2894 = vpack.c.bf16 %v2868, %v2867
      %v2895 = vpack.c.bf16 %v2870, %v2869
      %v2896 = vpack.c.bf16 %v2872, %v2871
      %v2897 = vpack.c.bf16 %v2874, %v2873
      %v2898 = vpack.c.bf16 %v2876, %v2875
      %v2899 = vpack.c.bf16 %v2878, %v2877
      %v2900 = vpack.c.bf16 %v2880, %v2879
      %v2901 = vpack.c.bf16 %v2882, %v2881
      %v2902 = vpack.c.bf16 %v2884, %v2883
      %v2903 = vpack.c.bf16 %v2886, %v2885
      %v2904 = vpack.c.bf16 %v2888, %v2887
      %v2921 = vunpack.c.l.b16 %v2889
      %v2922 = vunpack.c.h.b16 %v2889
      %v2923 = vunpack.c.l.b16 %v2890
      %v2924 = vunpack.c.h.b16 %v2890
      %v2925 = vunpack.c.l.b16 %v2891
      %v2926 = vunpack.c.h.b16 %v2891
      %v2927 = vunpack.c.l.b16 %v2892
      %v2928 = vunpack.c.h.b16 %v2892
      %v2929 = vunpack.c.l.b16 %v2893
      %v2930 = vunpack.c.h.b16 %v2893
      %v2931 = vunpack.c.l.b16 %v2894
      %v2932 = vunpack.c.h.b16 %v2894
      %v2933 = vunpack.c.l.b16 %v2895
      %v2934 = vunpack.c.h.b16 %v2895
      %v2935 = vunpack.c.l.b16 %v2896
      %v2936 = vunpack.c.h.b16 %v2896
      %v2937 = vunpack.c.l.b16 %v2897
      %v2938 = vunpack.c.h.b16 %v2897
      %v2939 = vunpack.c.l.b16 %v2898
      %v2940 = vunpack.c.h.b16 %v2898
      %v2941 = vunpack.c.l.b16 %v2899
      %v2942 = vunpack.c.h.b16 %v2899
      %v2943 = vunpack.c.l.b16 %v2900
      %v2944 = vunpack.c.h.b16 %v2900
      %v2945 = vunpack.c.l.b16 %v2901
      %v2946 = vunpack.c.h.b16 %v2901
      %v2947 = vunpack.c.l.b16 %v2902
      %v2948 = vunpack.c.h.b16 %v2902
      %v2949 = vunpack.c.l.b16 %v2903
      %v2950 = vunpack.c.h.b16 %v2903
      %v2951 = vunpack.c.l.b16 %v2904
      %v2952 = vunpack.c.h.b16 %v2904
      %v2953 = vpack.c.b16 %v2921, %v2921
      %v2954 = vpack.c.b16 %v2922, %v2922
      %v2955 = vpack.c.b16 %v2923, %v2923
      %v2956 = vpack.c.b16 %v2924, %v2924
      %v2957 = vpack.c.b16 %v2925, %v2925
      %v2958 = vpack.c.b16 %v2926, %v2926
      %v2959 = vpack.c.b16 %v2927, %v2927
      %v2960 = vpack.c.b16 %v2928, %v2928
      %v2961 = vpack.c.b16 %v2929, %v2929
      %v2962 = vpack.c.b16 %v2930, %v2930
      %v2963 = vpack.c.b16 %v2931, %v2931
      %v2964 = vpack.c.b16 %v2932, %v2932
      %v2965 = vpack.c.b16 %v2933, %v2933
      %v2966 = vpack.c.b16 %v2934, %v2934
      %v2967 = vpack.c.b16 %v2935, %v2935
      %v2968 = vpack.c.b16 %v2936, %v2936
      %v2969 = vpack.c.b16 %v2937, %v2937
      %v2970 = vpack.c.b16 %v2938, %v2938
      %v2971 = vpack.c.b16 %v2939, %v2939
      %v2972 = vpack.c.b16 %v2940, %v2940
      %v2973 = vpack.c.b16 %v2941, %v2941
      %v2974 = vpack.c.b16 %v2942, %v2942
      %v2975 = vpack.c.b16 %v2943, %v2943
      %v2976 = vpack.c.b16 %v2944, %v2944
      %v2977 = vpack.c.b16 %v2945, %v2945
      %v2978 = vpack.c.b16 %v2946, %v2946
      %v2979 = vpack.c.b16 %v2947, %v2947
      %v2980 = vpack.c.b16 %v2948, %v2948
      %v2981 = vpack.c.b16 %v2949, %v2949
      %v2982 = vpack.c.b16 %v2950, %v2950
      %v2983 = vpack.c.b16 %v2951, %v2951
      %v2984 = vpack.c.b16 %v2952, %v2952
      %vm3017 = vcmask 60416
      %3018 = vst.msk [vmem:[%s167] sm:$0xf] %vm3017, %v2953
      %3019 = vst.msk [vmem:[%s167 + $0x4] sm:$0xf] %vm3017, %v2954
      %3020 = vst.msk [vmem:[%s167 + $0x8] sm:$0xf] %vm3017, %v2955
      %3021 = vst.msk [vmem:[%s167 + $0xc] sm:$0xf] %vm3017, %v2956
      %3022 = vst.msk [vmem:[%s167 + $0x10] sm:$0xf] %vm3017, %v2957
      %3023 = vst.msk [vmem:[%s167 + $0x14] sm:$0xf] %vm3017, %v2958
      %3024 = vst.msk [vmem:[%s167 + $0x18] sm:$0xf] %vm3017, %v2959
      %3025 = vst.msk [vmem:[%s167 + $0x1c] sm:$0xf] %vm3017, %v2960
      %3026 = vst.msk [vmem:[%s167 + $0x20] sm:$0xf] %vm3017, %v2961
      %3027 = vst.msk [vmem:[%s167 + $0x24] sm:$0xf] %vm3017, %v2962
      %3028 = vst.msk [vmem:[%s167 + $0x28] sm:$0xf] %vm3017, %v2963
      %3029 = vst.msk [vmem:[%s167 + $0x2c] sm:$0xf] %vm3017, %v2964
      %3030 = vst.msk [vmem:[%s167 + $0x30] sm:$0xf] %vm3017, %v2965
      %3031 = vst.msk [vmem:[%s167 + $0x34] sm:$0xf] %vm3017, %v2966
      %3032 = vst.msk [vmem:[%s167 + $0x38] sm:$0xf] %vm3017, %v2967
      %3033 = vst.msk [vmem:[%s167 + $0x3c] sm:$0xf] %vm3017, %v2968
      %3034 = vst.msk [vmem:[%s167 + $0x40] sm:$0xf] %vm3017, %v2969
      %3035 = vst.msk [vmem:[%s167 + $0x44] sm:$0xf] %vm3017, %v2970
      %3036 = vst.msk [vmem:[%s167 + $0x48] sm:$0xf] %vm3017, %v2971
      %3037 = vst.msk [vmem:[%s167 + $0x4c] sm:$0xf] %vm3017, %v2972
      %3038 = vst.msk [vmem:[%s167 + $0x50] sm:$0xf] %vm3017, %v2973
      %3039 = vst.msk [vmem:[%s167 + $0x54] sm:$0xf] %vm3017, %v2974
      %3040 = vst.msk [vmem:[%s167 + $0x58] sm:$0xf] %vm3017, %v2975
      %3041 = vst.msk [vmem:[%s167 + $0x5c] sm:$0xf] %vm3017, %v2976
      %3042 = vst.msk [vmem:[%s167 + $0x60] sm:$0xf] %vm3017, %v2977
      %3043 = vst.msk [vmem:[%s167 + $0x64] sm:$0xf] %vm3017, %v2978
      %3044 = vst.msk [vmem:[%s167 + $0x68] sm:$0xf] %vm3017, %v2979
      %3045 = vst.msk [vmem:[%s167 + $0x6c] sm:$0xf] %vm3017, %v2980
      %3046 = vst.msk [vmem:[%s167 + $0x70] sm:$0xf] %vm3017, %v2981
      %3047 = vst.msk [vmem:[%s167 + $0x74] sm:$0xf] %vm3017, %v2982
      %3048 = vst.msk [vmem:[%s167 + $0x78] sm:$0xf] %vm3017, %v2983
      %3049 = vst.msk [vmem:[%s167 + $0x7c] sm:$0xf] %vm3017, %v2984
      %s3050 = smul.u32 16, %s18
      %p3051 = scmp.lt.s32.totalorder %s17, 1
      %s3052 = scalar_select %p3051, %s17, 1
      %p3053 = scmp.lt.s32.totalorder %s3050, 15
      %s3054 = scalar_select %p3053, %s3050, 15
      %s3055 = smul.addr %s3054, 2
      %s3056 = smul.addr %s3052, 32
      %s3057 = sadd.s32 %s3055, %s3056
      %s3058 = smul.addr %s3057, 4
      %s3059 = scalar_lea.vmem %s2, %s3058
      // Predicated region
      $region29: #{depthwise_separable_conv_forward.2} parent=27 // pred_check
        %p3060 = pneg %p92
      $region30: #{depthwise_separable_conv_forward.2} parent=27 // pred_check_branch
        %3062 = sbr.rel (%p3060) target = $region32
      $region31: #{depthwise_separable_conv_forward.2} parent=27 // pred_region
        %s3063 = smul.u32 16, %s18
      $region32: #{depthwise_separable_conv_forward.2} parent=27 // pred_fallthru
        _
    $region28: #{depthwise_separable_conv_forward.2} parent=5 // pred_fallthru
      _
    %p3064 = scmp.le.s32.totalorder 2, %s8
    // Predicated region
    $region33: #{depthwise_separable_conv_forward.2} parent=5 // pred_check
      %p3065 = pneg %p3064
    $region34: #{depthwise_separable_conv_forward.2} parent=5 // pred_check_branch
      %3067 = sbr.rel (%p3065) target = $region36
    $region35: #{depthwise_separable_conv_forward.2} parent=5 // pred_region
      %s3068 = ssub.s32 %s8, 2
      // Predicated region
      $region37: #{depthwise_separable_conv_forward.2} parent=35 // pred_check
        %p3069 = pneg %p98
      $region38: #{depthwise_separable_conv_forward.2} parent=35 // pred_check_branch
        %3071 = sbr.rel (%p3069) target = $region40
      $region39: #{depthwise_separable_conv_forward.2} parent=35 // pred_region
        %s3072 = smul.u32 16, %s20
        %p3073 = scmp.lt.s32.totalorder %s19, 1
        %s3074 = scalar_select %p3073, %s19, 1
        %p3075 = scmp.lt.s32.totalorder %s3072, 15
        %s3076 = scalar_select %p3075, %s3072, 15
        %s3077 = smul.addr %s3076, 2
        %s3078 = smul.addr %s3074, 32
        %s3079 = sadd.s32 %s3077, %s3078
        %s3080 = smul.addr %s3079, 4
        %s3081 = scalar_lea.vmem %s2, %s3080
      $region40: #{depthwise_separable_conv_forward.2} parent=35 // pred_fallthru
        _
    $region36: #{depthwise_separable_conv_forward.2} parent=5 // pred_fallthru
      _
  $region6: #{depthwise_separable_conv_forward.2} parent=0 // loop_footer
    %s12 = sadd.s32 1, %s8
  $region7: #{depthwise_separable_conv_forward.2} parent=0 // loop_footer_branch
    %7 = sbr.rel target = $region3
  $region8: #{depthwise_separable_conv_forward.2} parent=0 // loop_exit
    _

</llo_original>
